<compile_context>
chip_gen: v5e
topology: v5e:2x2
jax: 0.10.0
libtpu: 0.0.40
codegen_flags: <defaults>
</compile_context>

<pallas_src>
import functools

import jax
import jax.numpy as jnp
import numpy as np
from jax.experimental import pallas as pl
from jax.experimental.pallas import tpu as pltpu

NUM_GROUPS = 8      # GroupNorm(8, channels)
GN_EPS = 1e-5       # torch GroupNorm default eps

# cached probe: does this jax/libtpu accept pl.Buffered(1) pipeline_mode specs?
_SINGLE_BUFFER_OK = None


def _diffusion_kernel(num_layers, bb, seq_len, hidden, mm_dtype, unroll,
                      temb_ref, x_ref, in_w_ref, in_b_ref,
                      cw_ref, cb_ref, gma_ref, bta_ref,
                      out_w_ref, out_b_ref, pn_ref, o_ref):
    L, C = seq_len, hidden
    R = bb * L                                    # rows handled this grid step

    # ---- hoisted per-step constants ----
    # (R, 1) conv-boundary masks; lane broadcast inside where() is free on VPU.
    pos = jax.lax.broadcasted_iota(jnp.int32, (R, 1), 0) % L
    mprev = pos >= 1                              # row has a left neighbour in-sequence
    mnext = pos <= L - 2                          # row has a right neighbour in-sequence

    pn = pn_ref[...]                              # (C, C) group membership / (L*cs)
    t_emb = temb_ref[...]                         # (bb, C); broadcast per layer via reshape

    # ---- input Conv1d(5, C, 1): one lane-dense matmul (features padded to 128)
    h = jnp.dot(x_ref[...].astype(mm_dtype), in_w_ref[...],
                preferred_element_type=jnp.float32) + in_b_ref[...]          # (R, C) f32

    def group_norm(v, gamma, beta):
        # per-(batch, group) stats over (L, cs); sums are exact-f32 sublane
        # reductions, the group mix is a tiny (bb, C) @ (C, C) matmul.
        v3 = v.reshape(bb, L, C)                                             # free retile
        s1 = jnp.sum(v3, axis=1)                                             # (bb, C)
        s2 = jnp.sum(v3 * v3, axis=1)                                        # (bb, C)
        mean = jnp.dot(s1, pn, preferred_element_type=jnp.float32)           # (bb, C)
        ex2 = jnp.dot(s2, pn, preferred_element_type=jnp.float32)            # (bb, C)
        # single-pass variance; clamp tiny negative fp residue (stats stay f32)
        var = jnp.maximum(ex2 - mean * mean, 0.0)
        a_scale = jax.lax.rsqrt(var + GN_EPS) * gamma                        # (bb, C)
        a_shift = beta - mean * a_scale                                      # (bb, C)
        return (v3 * a_scale[:, None, :] + a_shift[:, None, :]).reshape(R, C)

    def conv3(v, w3, b):
        # Conv1d(C, C, 3, padding=1): three accumulating (R,C)@(C,C) matmuls.
        vp = jnp.where(mprev, pltpu.roll(v, shift=1, axis=0), 0.0)           # x[l-1]
        vn = jnp.where(mnext, pltpu.roll(v, shift=R - 1, axis=0), 0.0)       # x[l+1]
        acc = jnp.dot(vp.astype(mm_dtype), w3[0], preferred_element_type=jnp.float32)
        acc = acc + jnp.dot(v.astype(mm_dtype), w3[1], preferred_element_type=jnp.float32)
        acc = acc + jnp.dot(vn.astype(mm_dtype), w3[2], preferred_element_type=jnp.float32)
        return acc + b

    def layer(l, h):
        h_in = h
        a = group_norm(h_in, gma_ref[2 * l], bta_ref[2 * l])
        a = jnp.maximum(a, 0.0)                                              # ReLU
        a = conv3(a, cw_ref[2 * l], cb_ref[2 * l])
        a = (a.reshape(bb, L, C) + t_emb[:, None, :]).reshape(R, C)          # + t_emb
        c = group_norm(a, gma_ref[2 * l + 1], bta_ref[2 * l + 1])
        c = jnp.maximum(c, 0.0)
        c = conv3(c, cw_ref[2 * l + 1], cb_ref[2 * l + 1])
        return c + h_in                                                      # residual

    if unroll:
        for l in range(num_layers):
            h = layer(l, h)
    else:
        # Deep stacks: bound live ranges / compile time; per-layer weights are
        # dynamically indexed on the refs' leading axis.
        h = jax.lax.fori_loop(0, num_layers, layer, h)

    # ---- output Conv1d(C, 5, 1): lane-dense (padded) store ----
    o_ref[...] = (jnp.dot(h.astype(mm_dtype), out_w_ref[...],
                          preferred_element_type=jnp.float32)
                  + out_b_ref[...]).astype(o_ref.dtype)


def score_diffusion_forward(x, t, params, *, num_layers, hidden,
                            num_batch_blocks=1, use_bf16=True,
                            unroll_layers=None):
    """x: (B, L, 5) f32, t: (B,) int -> (B, L, 5) f32.

    num_batch_blocks=1 collapses the whole batch into one grid step (v5e/v6e);
    use >= 4 on v7x so each TensorCore pipelines >= 2 steps.
    """
    global _SINGLE_BUFFER_OK
    B, L, F = x.shape
    C = hidden
    if C % NUM_GROUPS:
        raise ValueError("hidden must be divisible by the 8 GroupNorm groups")
    if B % num_batch_blocks:
        raise ValueError("batch must be divisible by num_batch_blocks")
    BB = B // num_batch_blocks
    R = BB * L
    # (R,C) <-> (BB,L,C) retiles and the conv roll masking need tile-aligned,
    # whole sequences per block.
    if L % 8:
        raise ValueError("sequence_length must be a multiple of 8")
    if num_batch_blocks > 1 and BB % 8:
        raise ValueError("B / num_batch_blocks must be a multiple of 8 when > 1 block")
    assert R == BB * L  # conv3 masking relies on blocks holding whole sequences

    FP = 128                                   # lane-dense padded feature width
    mm_dtype = jnp.bfloat16 if use_bf16 else jnp.float32
    cs = C // NUM_GROUPS
    if unroll_layers is None:
        unroll_layers = num_layers <= 4

    # ---- time-embedding MLP for the whole batch (one small XLA matmul) ----
    t_f = t.astype(jnp.float32)[:, None]
    h1 = t_f * params['te_w1'] + params['te_b1']
    h1 = h1 * jax.nn.sigmoid(h1)                                     # SiLU
    t_emb = h1 @ params['te_w2'] + params['te_b2']                   # (B, C) f32

    # ---- lane-dense input / weights (padding rows/cols are zeros) ----
    x_flat = jnp.pad(x, ((0, 0), (0, 0), (0, FP - F))).reshape(B * L, FP)
    in_w = jnp.pad(params['in_w'], ((0, FP - F), (0, 0))).astype(mm_dtype)    # (FP, C)
    out_w = jnp.pad(params['out_w'], ((0, 0), (0, FP - F))).astype(mm_dtype)  # (C, FP)
    out_b = jnp.pad(params['out_b'], ((0, 0), (0, FP - F)))                   # (1, FP)
    # per conv: 3 taps, each (C_in, C_out)
    cw_taps = params['cw'].reshape(2 * num_layers, 3, C, C).astype(mm_dtype)

    # group-membership projection (C, C); includes the 1/(L*cs) normalization
    gidx = np.arange(C) // cs
    pn = jnp.asarray((gidx[:, None] == gidx[None, :]).astype(np.float32) / float(L * cs))

    ins = [t_emb, x_flat, in_w, params['in_b'], cw_taps, params['cb'],
           params['gamma'], params['beta'], out_w, out_b, pn]

    kern = functools.partial(_diffusion_kernel, num_layers, BB, L, C, mm_dtype,
                             unroll_layers)

    # ---- explicit VMEM budget (review: don't rely on the scoped default) ----
    mmb = 2 if use_bf16 else 4
    weight_bytes = (cw_taps.size + in_w.size + out_w.size) * mmb + 4 * (
        t_emb.size + params['in_b'].size + params['cb'].size +
        params['gamma'].size + params['beta'].size + out_b.size + pn.size)
    act_bytes = R * C * 4 * 8 + R * C * mmb * 4 + 2 * 2 * R * FP * 4
    vmem_limit = int(min(128 * 1024 * 1024,
                         max(32 * 1024 * 1024, 2 * (weight_bytes + act_bytes))))

    def _run(single_buffer_invariants):
        def const_spec(arr):
            nd = arr.ndim
            imap = lambda i, nd=nd: (0,) * nd
            if single_buffer_invariants:
                # grid-invariant operand: no double-buffering across grid steps
                return pl.BlockSpec(tuple(arr.shape), imap,
                                    pipeline_mode=pl.Buffered(1))
            return pl.BlockSpec(tuple(arr.shape), imap)

        in_specs = [pl.BlockSpec((BB, C), lambda i: (i, 0)),      # t_emb (per block)
                    pl.BlockSpec((R, FP), lambda i: (i, 0))]      # x (lane-dense)
        in_specs += [const_spec(a) for a in ins[2:]]

        return pl.pallas_call(
            kern,
            out_shape=jax.ShapeDtypeStruct((B * L, FP), jnp.float32),
            grid_spec=pltpu.PrefetchScalarGridSpec(
                num_scalar_prefetch=0,
                grid=(num_batch_blocks,),
                in_specs=in_specs,
                out_specs=pl.BlockSpec((R, FP), lambda i: (i, 0)),
            ),
            compiler_params=pltpu.CompilerParams(
                dimension_semantics=("parallel",),
                vmem_limit_bytes=vmem_limit),
        )(*ins)

    if _SINGLE_BUFFER_OK is not False:
        try:
            out = _run(True)
            _SINGLE_BUFFER_OK = True
        except Exception:                 # pipeline_mode not supported -> fall back
            _SINGLE_BUFFER_OK = False
            out = _run(False)
    else:
        out = _run(False)
    return out.reshape(B, L, FP)[:, :, :F]


def reference_forward_np(x, t, params, *, num_layers, hidden):
    """float64 NumPy reference (exact ground truth, independent of TPU matmul
    precision)."""
    p = {k: np.asarray(v, np.float64) for k, v in params.items()}
    xd = np.asarray(x, np.float64)
    td = np.asarray(t, np.float64)
    B, L, _ = xd.shape
    cs = hidden // NUM_GROUPS

    h1 = td[:, None] * p['te_w1'] + p['te_b1']
    h1 = h1 * (1.0 / (1.0 + np.exp(-h1)))                          # SiLU
    t_emb = h1 @ p['te_w2'] + p['te_b2']                           # (B, H)

    h = xd @ p['in_w'] + p['in_b']                                 # (B, L, H)

    def gnorm(v, gamma, beta):
        vr = v.reshape(B, L, NUM_GROUPS, cs)
        mean = vr.mean(axis=(1, 3), keepdims=True)
        var = ((vr - mean) ** 2).mean(axis=(1, 3), keepdims=True)
        vn = (vr - mean) / np.sqrt(var + GN_EPS)
        return vn.reshape(B, L, hidden) * gamma + beta

    def conv3(v, widx):
        vp = np.pad(v, ((0, 0), (1, 1), (0, 0)))
        return (vp[:, 0:L] @ p['cw'][3 * widx + 0]
                + vp[:, 1:L + 1] @ p['cw'][3 * widx + 1]
                + vp[:, 2:L + 2] @ p['cw'][3 * widx + 2]
                + p['cb'][widx])

    for l in range(num_layers):
        h_in = h
        a = np.maximum(gnorm(h_in, p['gamma'][2 * l], p['beta'][2 * l]), 0.0)
        a = conv3(a, 2 * l) + t_emb[:, None, :]
        c = np.maximum(gnorm(a, p['gamma'][2 * l + 1], p['beta'][2 * l + 1]), 0.0)
        c = conv3(c, 2 * l + 1)
        h = c + h_in
    return h @ p['out_w'] + p['out_b']


def init_params(key, hidden, num_layers, in_feat=5):
    ks = jax.random.split(key, 12)

    def rnd(k, shape, scale=0.1):
        return scale * jax.random.normal(k, shape, dtype=jnp.float32)

    # Weights stored channel-last / (in, out) so the kernel matmuls directly.
    return {
        # small time-embed scale keeps t_emb O(1) for integer t up to ~100
        'te_w1': rnd(ks[0], (1, hidden), 0.01),               # Linear(1,H).weight.T
        'te_b1': rnd(ks[1], (1, hidden), 0.01),
        'te_w2': rnd(ks[2], (hidden, hidden)),                 # Linear(H,H).weight.T
        'te_b2': rnd(ks[3], (1, hidden)),
        'in_w':  rnd(ks[4], (in_feat, hidden)),                # Conv1d(5,H,1) as (cin,cout)
        'in_b':  rnd(ks[5], (1, hidden)),
        # per block: conv1 (3 taps) then conv2 (3 taps); tap k maps cin->cout
        'cw':    rnd(ks[6], (num_layers * 6, hidden, hidden)),
        'cb':    rnd(ks[7], (num_layers * 2, 1, hidden)),
        'gamma': 1.0 + rnd(ks[8], (num_layers * 2, 1, hidden)),
        'beta':  rnd(ks[9], (num_layers * 2, 1, hidden)),
        'out_w': rnd(ks[10], (hidden, in_feat)),               # Conv1d(H,5,1) as (cin,cout)
        'out_b': rnd(ks[11], (1, in_feat)),
    }


# TODO(synk): q_sample / p_sample / sample / training_step are stochastic
# driver loops around forward(); only forward() is implemented as a kernel.

if __name__ == "__main__":
    B, L, F = 2, 16, 5            # batch, sequence_length, features (Conv1d(5,...))
    H, NL = 32, 2                 # hidden_size, num_layers (small, H % 8 == 0)

    key = jax.random.PRNGKey(0)
    kx, kt, kp = jax.random.split(key, 3)
    x = jax.random.normal(kx, (B, L, F), dtype=jnp.float32)
    t = jax.random.randint(kt, (B,), 0, 100)
    params = init_params(kp, H, NL, F)

    ref = reference_forward_np(x, t, params, num_layers=NL, hidden=H)

    # f32 MXU-operand path.  Tolerance allows for TPU default matmul precision
    # (bf16-rounded MXU passes); semantic errors would be O(0.3+).
    out_f32 = jax.block_until_ready(
        score_diffusion_forward(x, t, params, num_layers=NL, hidden=H,
                                use_bf16=False))
    np.testing.assert_allclose(np.asarray(out_f32, np.float64), ref,
                               rtol=2.5e-2, atol=2.5e-2)

    # bf16 MXU-operand path (default; native on v6e/v7x) with f32 accumulation
    # and f32 GroupNorm statistics.
    out_bf16 = jax.block_until_ready(
        score_diffusion_forward(x, t, params, num_layers=NL, hidden=H,
                                use_bf16=True))
    np.testing.assert_allclose(np.asarray(out_bf16, np.float64), ref,
                               rtol=8e-2, atol=8e-2)

    # fori_loop layer path (auto-selected for num_layers > 4): exercised here at
    # toy size to validate the dynamic per-layer weight indexing.
    out_fori = jax.block_until_ready(
        score_diffusion_forward(x, t, params, num_layers=NL, hidden=H,
                                use_bf16=False, unroll_layers=False))
    np.testing.assert_allclose(np.asarray(out_fori, np.float64), ref,
                               rtol=2.5e-2, atol=2.5e-2)

    print("KERNEL_OK")
</pallas_src>

<mosaic_0001>
module attributes {stable_mosaic.version = 11 : i64} {
  func.func @_diffusion_kernel(%arg0: i32, %arg1: memref<2x32xf32, #tpu.memory_space<vmem>>, %arg2: memref<32x128xf32, #tpu.memory_space<vmem>>, %arg3: memref<128x32xf32, #tpu.memory_space<vmem>>, %arg4: memref<1x32xf32, #tpu.memory_space<vmem>>, %arg5: memref<4x3x32x32xf32, #tpu.memory_space<vmem>>, %arg6: memref<4x1x32xf32, #tpu.memory_space<vmem>>, %arg7: memref<4x1x32xf32, #tpu.memory_space<vmem>>, %arg8: memref<4x1x32xf32, #tpu.memory_space<vmem>>, %arg9: memref<32x128xf32, #tpu.memory_space<vmem>>, %arg10: memref<1x128xf32, #tpu.memory_space<vmem>>, %arg11: memref<32x32xf32, #tpu.memory_space<vmem>>, %arg12: memref<32x128xf32, #tpu.memory_space<vmem>>) attributes {dimension_semantics = [#tpu.dimension_semantics<parallel>], iteration_bounds = array<i64: 1>, scalar_prefetch = 0 : i64, scratch_operands = 0 : i64, tpu.core_type = #tpu.core_type<tc>, window_params = [{transform_indices = @transform_0, window_bounds = array<i64: 2, 32>}, {transform_indices = @transform_1, window_bounds = array<i64: 32, 128>}, {pipeline_mode = #tpu.pipeline_mode<synchronous>, transform_indices = @transform_2, window_bounds = array<i64: 128, 32>}, {pipeline_mode = #tpu.pipeline_mode<synchronous>, transform_indices = @transform_3, window_bounds = array<i64: 1, 32>}, {pipeline_mode = #tpu.pipeline_mode<synchronous>, transform_indices = @transform_4, window_bounds = array<i64: 4, 3, 32, 32>}, {pipeline_mode = #tpu.pipeline_mode<synchronous>, transform_indices = @transform_5, window_bounds = array<i64: 4, 1, 32>}, {pipeline_mode = #tpu.pipeline_mode<synchronous>, transform_indices = @transform_6, window_bounds = array<i64: 4, 1, 32>}, {pipeline_mode = #tpu.pipeline_mode<synchronous>, transform_indices = @transform_7, window_bounds = array<i64: 4, 1, 32>}, {pipeline_mode = #tpu.pipeline_mode<synchronous>, transform_indices = @transform_8, window_bounds = array<i64: 32, 128>}, {pipeline_mode = #tpu.pipeline_mode<synchronous>, transform_indices = @transform_9, window_bounds = array<i64: 1, 128>}, {pipeline_mode = #tpu.pipeline_mode<synchronous>, transform_indices = @transform_10, window_bounds = array<i64: 32, 32>}, {transform_indices = @transform_11, window_bounds = array<i64: 32, 128>}]} {
    %0 = tpu.iota {dimensions = array<i32: 0>} : vector<32x1xi32>
    %c16_i32 = arith.constant 16 : i32
    %c0_i32 = arith.constant 0 : i32
    %1 = arith.cmpi eq, %c16_i32, %c0_i32 : i32
    %c1_i32 = arith.constant 1 : i32
    %2 = arith.select %1, %c1_i32, %c16_i32 : i32
    %3 = vector.broadcast %2 : i32 to vector<32x1xi32>
    %4 = arith.remsi %0, %3 : vector<32x1xi32>
    %c0_i32_0 = arith.constant 0 : i32
    %5 = vector.broadcast %c0_i32_0 : i32 to vector<32x1xi32>
    %6 = arith.cmpi ne, %4, %5 : vector<32x1xi32>
    %c0_i32_1 = arith.constant 0 : i32
    %7 = vector.broadcast %c0_i32_1 : i32 to vector<32x1xi32>
    %8 = arith.cmpi slt, %4, %7 : vector<32x1xi32>
    %c0_i32_2 = arith.constant 0 : i32
    %9 = arith.cmpi slt, %2, %c0_i32_2 : i32
    %10 = vector.broadcast %9 : i1 to vector<32x1xi1>
    %11 = vector.broadcast %10 : vector<32x1xi1> to vector<32x1xi1>
    %12 = arith.xori %8, %11 : vector<32x1xi1>
    %13 = arith.andi %12, %6 : vector<32x1xi1>
    %14 = vector.broadcast %2 : i32 to vector<32x1xi32>
    %15 = arith.addi %4, %14 : vector<32x1xi32>
    %16 = arith.select %13, %15, %4 : vector<32x1xi1>, vector<32x1xi32>
    %c1_i32_3 = arith.constant 1 : i32
    %17 = vector.broadcast %c1_i32_3 : i32 to vector<32x1xi32>
    %18 = arith.cmpi sge, %16, %17 : vector<32x1xi32>
    %c14_i32 = arith.constant 14 : i32
    %19 = vector.broadcast %c14_i32 : i32 to vector<32x1xi32>
    %20 = arith.cmpi sle, %16, %19 : vector<32x1xi32>
    %c0 = arith.constant 0 : index
    %c0_4 = arith.constant 0 : index
    %21 = vector.load %arg11[%c0, %c0_4] : memref<32x32xf32, #tpu.memory_space<vmem>>, vector<32x32xf32>
    %c0_5 = arith.constant 0 : index
    %c0_6 = arith.constant 0 : index
    %22 = vector.load %arg1[%c0_5, %c0_6] : memref<2x32xf32, #tpu.memory_space<vmem>>, vector<2x32xf32>
    %c0_7 = arith.constant 0 : index
    %c0_8 = arith.constant 0 : index
    %23 = vector.load %arg2[%c0_7, %c0_8] : memref<32x128xf32, #tpu.memory_space<vmem>>, vector<32x128xf32>
    %c0_9 = arith.constant 0 : index
    %c0_10 = arith.constant 0 : index
    %24 = vector.load %arg3[%c0_9, %c0_10] : memref<128x32xf32, #tpu.memory_space<vmem>>, vector<128x32xf32>
    %cst = arith.constant dense<0.000000e+00> : vector<32x32xf32>
    %25 = tpu.matmul %23, %24, %cst {dimension_numbers = #tpu.dot_dimension_numbers<[1], [0], [0], [1], [0, 0, 1, 1], [], []>} : vector<32x128xf32>, vector<128x32xf32>, vector<32x32xf32> -> vector<32x32xf32>
    %c0_11 = arith.constant 0 : index
    %c0_12 = arith.constant 0 : index
    %26 = vector.load %arg4[%c0_11, %c0_12] : memref<1x32xf32, #tpu.memory_space<vmem>>, vector<1x32xf32>
    %27 = vector.broadcast %26 : vector<1x32xf32> to vector<32x32xf32>
    %28 = arith.addf %25, %27 : vector<32x32xf32>
    %c0_13 = arith.constant 0 : index
    %c0_14 = arith.constant 0 : index
    %c0_15 = arith.constant 0 : index
    %29 = vector.load %arg7[%c0_13, %c0_14, %c0_15] : memref<4x1x32xf32, #tpu.memory_space<vmem>>, vector<1x1x32xf32>
    %30 = vector.shape_cast %29 : vector<1x1x32xf32> to vector<1x32xf32>
    %c0_16 = arith.constant 0 : index
    %c0_17 = arith.constant 0 : index
    %c0_18 = arith.constant 0 : index
    %31 = vector.load %arg8[%c0_16, %c0_17, %c0_18] : memref<4x1x32xf32, #tpu.memory_space<vmem>>, vector<1x1x32xf32>
    %32 = vector.shape_cast %31 : vector<1x1x32xf32> to vector<1x32xf32>
    %33 = vector.shape_cast %28 : vector<32x32xf32> to vector<2x16x32xf32>
    %cst_19 = arith.constant dense<0.000000e+00> : vector<2x32xf32>
    %34 = vector.multi_reduction <add>, %33, %cst_19 [1] : vector<2x16x32xf32> to vector<2x32xf32>
    %35 = arith.mulf %33, %33 : vector<2x16x32xf32>
    %cst_20 = arith.constant dense<0.000000e+00> : vector<2x32xf32>
    %36 = vector.multi_reduction <add>, %35, %cst_20 [1] : vector<2x16x32xf32> to vector<2x32xf32>
    %cst_21 = arith.constant dense<0.000000e+00> : vector<2x32xf32>
    %37 = tpu.matmul %34, %21, %cst_21 {dimension_numbers = #tpu.dot_dimension_numbers<[1], [0], [0], [1], [0, 0, 1, 1], [], []>} : vector<2x32xf32>, vector<32x32xf32>, vector<2x32xf32> -> vector<2x32xf32>
    %cst_22 = arith.constant dense<0.000000e+00> : vector<2x32xf32>
    %38 = tpu.matmul %36, %21, %cst_22 {dimension_numbers = #tpu.dot_dimension_numbers<[1], [0], [0], [1], [0, 0, 1, 1], [], []>} : vector<2x32xf32>, vector<32x32xf32>, vector<2x32xf32> -> vector<2x32xf32>
    %39 = arith.mulf %37, %37 : vector<2x32xf32>
    %40 = arith.subf %38, %39 : vector<2x32xf32>
    %cst_23 = arith.constant 0.000000e+00 : f32
    %41 = vector.broadcast %cst_23 : f32 to vector<2x32xf32>
    %42 = arith.maximumf %40, %41 : vector<2x32xf32>
    %cst_24 = arith.constant 9.99999974E-6 : f32
    %43 = vector.broadcast %cst_24 : f32 to vector<2x32xf32>
    %44 = arith.addf %42, %43 : vector<2x32xf32>
    %45 = math.rsqrt %44 : vector<2x32xf32>
    %46 = vector.broadcast %30 : vector<1x32xf32> to vector<2x32xf32>
    %47 = arith.mulf %45, %46 : vector<2x32xf32>
    %48 = arith.mulf %37, %47 : vector<2x32xf32>
    %49 = vector.broadcast %32 : vector<1x32xf32> to vector<2x32xf32>
    %50 = arith.subf %49, %48 : vector<2x32xf32>
    %51 = vector.shape_cast %47 : vector<2x32xf32> to vector<2x1x32xf32>
    %52 = vector.broadcast %51 : vector<2x1x32xf32> to vector<2x16x32xf32>
    %53 = arith.mulf %33, %52 : vector<2x16x32xf32>
    %54 = vector.shape_cast %50 : vector<2x32xf32> to vector<2x1x32xf32>
    %55 = vector.broadcast %54 : vector<2x1x32xf32> to vector<2x16x32xf32>
    %56 = arith.addf %53, %55 : vector<2x16x32xf32>
    %57 = vector.shape_cast %56 : vector<2x16x32xf32> to vector<32x32xf32>
    %cst_25 = arith.constant 0.000000e+00 : f32
    %58 = vector.broadcast %cst_25 : f32 to vector<32x32xf32>
    %59 = arith.maximumf %57, %58 : vector<32x32xf32>
    %c0_26 = arith.constant 0 : index
    %c0_27 = arith.constant 0 : index
    %c0_28 = arith.constant 0 : index
    %c0_29 = arith.constant 0 : index
    %60 = vector.load %arg5[%c0_26, %c0_27, %c0_28, %c0_29] : memref<4x3x32x32xf32, #tpu.memory_space<vmem>>, vector<1x3x32x32xf32>
    %61 = vector.shape_cast %60 : vector<1x3x32x32xf32> to vector<3x32x32xf32>
    %c0_30 = arith.constant 0 : index
    %c0_31 = arith.constant 0 : index
    %c0_32 = arith.constant 0 : index
    %62 = vector.load %arg6[%c0_30, %c0_31, %c0_32] : memref<4x1x32xf32, #tpu.memory_space<vmem>>, vector<1x1x32xf32>
    %63 = vector.shape_cast %62 : vector<1x1x32xf32> to vector<1x32xf32>
    %c1_i32_33 = arith.constant 1 : i32
    %64 = tpu.dynamic_rotate %59 by %c1_i32_33 dim 0 : vector<32x32xf32>, i32 -> vector<32x32xf32>
    %cst_34 = arith.constant 0.000000e+00 : f32
    %65 = vector.shape_cast %18 : vector<32x1xi1> to vector<32x1xi1>
    %66 = vector.broadcast %65 : vector<32x1xi1> to vector<32x32xi1>
    %67 = vector.broadcast %cst_34 : f32 to vector<32x32xf32>
    %68 = arith.select %66, %64, %67 : vector<32x32xi1>, vector<32x32xf32>
    %c31_i32 = arith.constant 31 : i32
    %69 = tpu.dynamic_rotate %59 by %c31_i32 dim 0 : vector<32x32xf32>, i32 -> vector<32x32xf32>
    %cst_35 = arith.constant 0.000000e+00 : f32
    %70 = vector.shape_cast %20 : vector<32x1xi1> to vector<32x1xi1>
    %71 = vector.broadcast %70 : vector<32x1xi1> to vector<32x32xi1>
    %72 = vector.broadcast %cst_35 : f32 to vector<32x32xf32>
    %73 = arith.select %71, %69, %72 : vector<32x32xi1>, vector<32x32xf32>
    %74 = vector.extract_strided_slice %61 {offsets = [0, 0, 0], sizes = [1, 32, 32], strides = [1, 1, 1]} : vector<3x32x32xf32> to vector<1x32x32xf32>
    %75 = vector.shape_cast %74 : vector<1x32x32xf32> to vector<32x32xf32>
    %cst_36 = arith.constant dense<0.000000e+00> : vector<32x32xf32>
    %76 = tpu.matmul %68, %75, %cst_36 {dimension_numbers = #tpu.dot_dimension_numbers<[1], [0], [0], [1], [0, 0, 1, 1], [], []>} : vector<32x32xf32>, vector<32x32xf32>, vector<32x32xf32> -> vector<32x32xf32>
    %77 = vector.extract_strided_slice %61 {offsets = [1, 0, 0], sizes = [1, 32, 32], strides = [1, 1, 1]} : vector<3x32x32xf32> to vector<1x32x32xf32>
    %78 = vector.shape_cast %77 : vector<1x32x32xf32> to vector<32x32xf32>
    %cst_37 = arith.constant dense<0.000000e+00> : vector<32x32xf32>
    %79 = tpu.matmul %59, %78, %cst_37 {dimension_numbers = #tpu.dot_dimension_numbers<[1], [0], [0], [1], [0, 0, 1, 1], [], []>} : vector<32x32xf32>, vector<32x32xf32>, vector<32x32xf32> -> vector<32x32xf32>
    %80 = arith.addf %76, %79 : vector<32x32xf32>
    %81 = vector.extract_strided_slice %61 {offsets = [2, 0, 0], sizes = [1, 32, 32], strides = [1, 1, 1]} : vector<3x32x32xf32> to vector<1x32x32xf32>
    %82 = vector.shape_cast %81 : vector<1x32x32xf32> to vector<32x32xf32>
    %cst_38 = arith.constant dense<0.000000e+00> : vector<32x32xf32>
    %83 = tpu.matmul %73, %82, %cst_38 {dimension_numbers = #tpu.dot_dimension_numbers<[1], [0], [0], [1], [0, 0, 1, 1], [], []>} : vector<32x32xf32>, vector<32x32xf32>, vector<32x32xf32> -> vector<32x32xf32>
    %84 = arith.addf %80, %83 : vector<32x32xf32>
    %85 = vector.broadcast %63 : vector<1x32xf32> to vector<32x32xf32>
    %86 = arith.addf %84, %85 : vector<32x32xf32>
    %87 = vector.shape_cast %86 : vector<32x32xf32> to vector<2x16x32xf32>
    %88 = vector.shape_cast %22 : vector<2x32xf32> to vector<2x1x32xf32>
    %89 = vector.broadcast %88 : vector<2x1x32xf32> to vector<2x16x32xf32>
    %90 = arith.addf %87, %89 : vector<2x16x32xf32>
    %91 = vector.shape_cast %90 : vector<2x16x32xf32> to vector<32x32xf32>
    %c1 = arith.constant 1 : index
    %c0_39 = arith.constant 0 : index
    %c0_40 = arith.constant 0 : index
    %92 = vector.load %arg7[%c1, %c0_39, %c0_40] : memref<4x1x32xf32, #tpu.memory_space<vmem>>, vector<1x1x32xf32>
    %93 = vector.shape_cast %92 : vector<1x1x32xf32> to vector<1x32xf32>
    %c1_41 = arith.constant 1 : index
    %c0_42 = arith.constant 0 : index
    %c0_43 = arith.constant 0 : index
    %94 = vector.load %arg8[%c1_41, %c0_42, %c0_43] : memref<4x1x32xf32, #tpu.memory_space<vmem>>, vector<1x1x32xf32>
    %95 = vector.shape_cast %94 : vector<1x1x32xf32> to vector<1x32xf32>
    %96 = vector.shape_cast %91 : vector<32x32xf32> to vector<2x16x32xf32>
    %cst_44 = arith.constant dense<0.000000e+00> : vector<2x32xf32>
    %97 = vector.multi_reduction <add>, %96, %cst_44 [1] : vector<2x16x32xf32> to vector<2x32xf32>
    %98 = arith.mulf %96, %96 : vector<2x16x32xf32>
    %cst_45 = arith.constant dense<0.000000e+00> : vector<2x32xf32>
    %99 = vector.multi_reduction <add>, %98, %cst_45 [1] : vector<2x16x32xf32> to vector<2x32xf32>
    %cst_46 = arith.constant dense<0.000000e+00> : vector<2x32xf32>
    %100 = tpu.matmul %97, %21, %cst_46 {dimension_numbers = #tpu.dot_dimension_numbers<[1], [0], [0], [1], [0, 0, 1, 1], [], []>} : vector<2x32xf32>, vector<32x32xf32>, vector<2x32xf32> -> vector<2x32xf32>
    %cst_47 = arith.constant dense<0.000000e+00> : vector<2x32xf32>
    %101 = tpu.matmul %99, %21, %cst_47 {dimension_numbers = #tpu.dot_dimension_numbers<[1], [0], [0], [1], [0, 0, 1, 1], [], []>} : vector<2x32xf32>, vector<32x32xf32>, vector<2x32xf32> -> vector<2x32xf32>
    %102 = arith.mulf %100, %100 : vector<2x32xf32>
    %103 = arith.subf %101, %102 : vector<2x32xf32>
    %cst_48 = arith.constant 0.000000e+00 : f32
    %104 = vector.broadcast %cst_48 : f32 to vector<2x32xf32>
    %105 = arith.maximumf %103, %104 : vector<2x32xf32>
    %cst_49 = arith.constant 9.99999974E-6 : f32
    %106 = vector.broadcast %cst_49 : f32 to vector<2x32xf32>
    %107 = arith.addf %105, %106 : vector<2x32xf32>
    %108 = math.rsqrt %107 : vector<2x32xf32>
    %109 = vector.broadcast %93 : vector<1x32xf32> to vector<2x32xf32>
    %110 = arith.mulf %108, %109 : vector<2x32xf32>
    %111 = arith.mulf %100, %110 : vector<2x32xf32>
    %112 = vector.broadcast %95 : vector<1x32xf32> to vector<2x32xf32>
    %113 = arith.subf %112, %111 : vector<2x32xf32>
    %114 = vector.shape_cast %110 : vector<2x32xf32> to vector<2x1x32xf32>
    %115 = vector.broadcast %114 : vector<2x1x32xf32> to vector<2x16x32xf32>
    %116 = arith.mulf %96, %115 : vector<2x16x32xf32>
    %117 = vector.shape_cast %113 : vector<2x32xf32> to vector<2x1x32xf32>
    %118 = vector.broadcast %117 : vector<2x1x32xf32> to vector<2x16x32xf32>
    %119 = arith.addf %116, %118 : vector<2x16x32xf32>
    %120 = vector.shape_cast %119 : vector<2x16x32xf32> to vector<32x32xf32>
    %cst_50 = arith.constant 0.000000e+00 : f32
    %121 = vector.broadcast %cst_50 : f32 to vector<32x32xf32>
    %122 = arith.maximumf %120, %121 : vector<32x32xf32>
    %c1_51 = arith.constant 1 : index
    %c0_52 = arith.constant 0 : index
    %c0_53 = arith.constant 0 : index
    %c0_54 = arith.constant 0 : index
    %123 = vector.load %arg5[%c1_51, %c0_52, %c0_53, %c0_54] : memref<4x3x32x32xf32, #tpu.memory_space<vmem>>, vector<1x3x32x32xf32>
    %124 = vector.shape_cast %123 : vector<1x3x32x32xf32> to vector<3x32x32xf32>
    %c1_55 = arith.constant 1 : index
    %c0_56 = arith.constant 0 : index
    %c0_57 = arith.constant 0 : index
    %125 = vector.load %arg6[%c1_55, %c0_56, %c0_57] : memref<4x1x32xf32, #tpu.memory_space<vmem>>, vector<1x1x32xf32>
    %126 = vector.shape_cast %125 : vector<1x1x32xf32> to vector<1x32xf32>
    %c1_i32_58 = arith.constant 1 : i32
    %127 = tpu.dynamic_rotate %122 by %c1_i32_58 dim 0 : vector<32x32xf32>, i32 -> vector<32x32xf32>
    %cst_59 = arith.constant 0.000000e+00 : f32
    %128 = vector.shape_cast %18 : vector<32x1xi1> to vector<32x1xi1>
    %129 = vector.broadcast %128 : vector<32x1xi1> to vector<32x32xi1>
    %130 = vector.broadcast %cst_59 : f32 to vector<32x32xf32>
    %131 = arith.select %129, %127, %130 : vector<32x32xi1>, vector<32x32xf32>
    %c31_i32_60 = arith.constant 31 : i32
    %132 = tpu.dynamic_rotate %122 by %c31_i32_60 dim 0 : vector<32x32xf32>, i32 -> vector<32x32xf32>
    %cst_61 = arith.constant 0.000000e+00 : f32
    %133 = vector.shape_cast %20 : vector<32x1xi1> to vector<32x1xi1>
    %134 = vector.broadcast %133 : vector<32x1xi1> to vector<32x32xi1>
    %135 = vector.broadcast %cst_61 : f32 to vector<32x32xf32>
    %136 = arith.select %134, %132, %135 : vector<32x32xi1>, vector<32x32xf32>
    %137 = vector.extract_strided_slice %124 {offsets = [0, 0, 0], sizes = [1, 32, 32], strides = [1, 1, 1]} : vector<3x32x32xf32> to vector<1x32x32xf32>
    %138 = vector.shape_cast %137 : vector<1x32x32xf32> to vector<32x32xf32>
    %cst_62 = arith.constant dense<0.000000e+00> : vector<32x32xf32>
    %139 = tpu.matmul %131, %138, %cst_62 {dimension_numbers = #tpu.dot_dimension_numbers<[1], [0], [0], [1], [0, 0, 1, 1], [], []>} : vector<32x32xf32>, vector<32x32xf32>, vector<32x32xf32> -> vector<32x32xf32>
    %140 = vector.extract_strided_slice %124 {offsets = [1, 0, 0], sizes = [1, 32, 32], strides = [1, 1, 1]} : vector<3x32x32xf32> to vector<1x32x32xf32>
    %141 = vector.shape_cast %140 : vector<1x32x32xf32> to vector<32x32xf32>
    %cst_63 = arith.constant dense<0.000000e+00> : vector<32x32xf32>
    %142 = tpu.matmul %122, %141, %cst_63 {dimension_numbers = #tpu.dot_dimension_numbers<[1], [0], [0], [1], [0, 0, 1, 1], [], []>} : vector<32x32xf32>, vector<32x32xf32>, vector<32x32xf32> -> vector<32x32xf32>
    %143 = arith.addf %139, %142 : vector<32x32xf32>
    %144 = vector.extract_strided_slice %124 {offsets = [2, 0, 0], sizes = [1, 32, 32], strides = [1, 1, 1]} : vector<3x32x32xf32> to vector<1x32x32xf32>
    %145 = vector.shape_cast %144 : vector<1x32x32xf32> to vector<32x32xf32>
    %cst_64 = arith.constant dense<0.000000e+00> : vector<32x32xf32>
    %146 = tpu.matmul %136, %145, %cst_64 {dimension_numbers = #tpu.dot_dimension_numbers<[1], [0], [0], [1], [0, 0, 1, 1], [], []>} : vector<32x32xf32>, vector<32x32xf32>, vector<32x32xf32> -> vector<32x32xf32>
    %147 = arith.addf %143, %146 : vector<32x32xf32>
    %148 = vector.broadcast %126 : vector<1x32xf32> to vector<32x32xf32>
    %149 = arith.addf %147, %148 : vector<32x32xf32>
    %150 = arith.addf %149, %28 : vector<32x32xf32>
    %c2 = arith.constant 2 : index
    %c0_65 = arith.constant 0 : index
    %c0_66 = arith.constant 0 : index
    %151 = vector.load %arg7[%c2, %c0_65, %c0_66] : memref<4x1x32xf32, #tpu.memory_space<vmem>>, vector<1x1x32xf32>
    %152 = vector.shape_cast %151 : vector<1x1x32xf32> to vector<1x32xf32>
    %c2_67 = arith.constant 2 : index
    %c0_68 = arith.constant 0 : index
    %c0_69 = arith.constant 0 : index
    %153 = vector.load %arg8[%c2_67, %c0_68, %c0_69] : memref<4x1x32xf32, #tpu.memory_space<vmem>>, vector<1x1x32xf32>
    %154 = vector.shape_cast %153 : vector<1x1x32xf32> to vector<1x32xf32>
    %155 = vector.shape_cast %150 : vector<32x32xf32> to vector<2x16x32xf32>
    %cst_70 = arith.constant dense<0.000000e+00> : vector<2x32xf32>
    %156 = vector.multi_reduction <add>, %155, %cst_70 [1] : vector<2x16x32xf32> to vector<2x32xf32>
    %157 = arith.mulf %155, %155 : vector<2x16x32xf32>
    %cst_71 = arith.constant dense<0.000000e+00> : vector<2x32xf32>
    %158 = vector.multi_reduction <add>, %157, %cst_71 [1] : vector<2x16x32xf32> to vector<2x32xf32>
    %cst_72 = arith.constant dense<0.000000e+00> : vector<2x32xf32>
    %159 = tpu.matmul %156, %21, %cst_72 {dimension_numbers = #tpu.dot_dimension_numbers<[1], [0], [0], [1], [0, 0, 1, 1], [], []>} : vector<2x32xf32>, vector<32x32xf32>, vector<2x32xf32> -> vector<2x32xf32>
    %cst_73 = arith.constant dense<0.000000e+00> : vector<2x32xf32>
    %160 = tpu.matmul %158, %21, %cst_73 {dimension_numbers = #tpu.dot_dimension_numbers<[1], [0], [0], [1], [0, 0, 1, 1], [], []>} : vector<2x32xf32>, vector<32x32xf32>, vector<2x32xf32> -> vector<2x32xf32>
    %161 = arith.mulf %159, %159 : vector<2x32xf32>
    %162 = arith.subf %160, %161 : vector<2x32xf32>
    %cst_74 = arith.constant 0.000000e+00 : f32
    %163 = vector.broadcast %cst_74 : f32 to vector<2x32xf32>
    %164 = arith.maximumf %162, %163 : vector<2x32xf32>
    %cst_75 = arith.constant 9.99999974E-6 : f32
    %165 = vector.broadcast %cst_75 : f32 to vector<2x32xf32>
    %166 = arith.addf %164, %165 : vector<2x32xf32>
    %167 = math.rsqrt %166 : vector<2x32xf32>
    %168 = vector.broadcast %152 : vector<1x32xf32> to vector<2x32xf32>
    %169 = arith.mulf %167, %168 : vector<2x32xf32>
    %170 = arith.mulf %159, %169 : vector<2x32xf32>
    %171 = vector.broadcast %154 : vector<1x32xf32> to vector<2x32xf32>
    %172 = arith.subf %171, %170 : vector<2x32xf32>
    %173 = vector.shape_cast %169 : vector<2x32xf32> to vector<2x1x32xf32>
    %174 = vector.broadcast %173 : vector<2x1x32xf32> to vector<2x16x32xf32>
    %175 = arith.mulf %155, %174 : vector<2x16x32xf32>
    %176 = vector.shape_cast %172 : vector<2x32xf32> to vector<2x1x32xf32>
    %177 = vector.broadcast %176 : vector<2x1x32xf32> to vector<2x16x32xf32>
    %178 = arith.addf %175, %177 : vector<2x16x32xf32>
    %179 = vector.shape_cast %178 : vector<2x16x32xf32> to vector<32x32xf32>
    %cst_76 = arith.constant 0.000000e+00 : f32
    %180 = vector.broadcast %cst_76 : f32 to vector<32x32xf32>
    %181 = arith.maximumf %179, %180 : vector<32x32xf32>
    %c2_77 = arith.constant 2 : index
    %c0_78 = arith.constant 0 : index
    %c0_79 = arith.constant 0 : index
    %c0_80 = arith.constant 0 : index
    %182 = vector.load %arg5[%c2_77, %c0_78, %c0_79, %c0_80] : memref<4x3x32x32xf32, #tpu.memory_space<vmem>>, vector<1x3x32x32xf32>
    %183 = vector.shape_cast %182 : vector<1x3x32x32xf32> to vector<3x32x32xf32>
    %c2_81 = arith.constant 2 : index
    %c0_82 = arith.constant 0 : index
    %c0_83 = arith.constant 0 : index
    %184 = vector.load %arg6[%c2_81, %c0_82, %c0_83] : memref<4x1x32xf32, #tpu.memory_space<vmem>>, vector<1x1x32xf32>
    %185 = vector.shape_cast %184 : vector<1x1x32xf32> to vector<1x32xf32>
    %c1_i32_84 = arith.constant 1 : i32
    %186 = tpu.dynamic_rotate %181 by %c1_i32_84 dim 0 : vector<32x32xf32>, i32 -> vector<32x32xf32>
    %cst_85 = arith.constant 0.000000e+00 : f32
    %187 = vector.shape_cast %18 : vector<32x1xi1> to vector<32x1xi1>
    %188 = vector.broadcast %187 : vector<32x1xi1> to vector<32x32xi1>
    %189 = vector.broadcast %cst_85 : f32 to vector<32x32xf32>
    %190 = arith.select %188, %186, %189 : vector<32x32xi1>, vector<32x32xf32>
    %c31_i32_86 = arith.constant 31 : i32
    %191 = tpu.dynamic_rotate %181 by %c31_i32_86 dim 0 : vector<32x32xf32>, i32 -> vector<32x32xf32>
    %cst_87 = arith.constant 0.000000e+00 : f32
    %192 = vector.shape_cast %20 : vector<32x1xi1> to vector<32x1xi1>
    %193 = vector.broadcast %192 : vector<32x1xi1> to vector<32x32xi1>
    %194 = vector.broadcast %cst_87 : f32 to vector<32x32xf32>
    %195 = arith.select %193, %191, %194 : vector<32x32xi1>, vector<32x32xf32>
    %196 = vector.extract_strided_slice %183 {offsets = [0, 0, 0], sizes = [1, 32, 32], strides = [1, 1, 1]} : vector<3x32x32xf32> to vector<1x32x32xf32>
    %197 = vector.shape_cast %196 : vector<1x32x32xf32> to vector<32x32xf32>
    %cst_88 = arith.constant dense<0.000000e+00> : vector<32x32xf32>
    %198 = tpu.matmul %190, %197, %cst_88 {dimension_numbers = #tpu.dot_dimension_numbers<[1], [0], [0], [1], [0, 0, 1, 1], [], []>} : vector<32x32xf32>, vector<32x32xf32>, vector<32x32xf32> -> vector<32x32xf32>
    %199 = vector.extract_strided_slice %183 {offsets = [1, 0, 0], sizes = [1, 32, 32], strides = [1, 1, 1]} : vector<3x32x32xf32> to vector<1x32x32xf32>
    %200 = vector.shape_cast %199 : vector<1x32x32xf32> to vector<32x32xf32>
    %cst_89 = arith.constant dense<0.000000e+00> : vector<32x32xf32>
    %201 = tpu.matmul %181, %200, %cst_89 {dimension_numbers = #tpu.dot_dimension_numbers<[1], [0], [0], [1], [0, 0, 1, 1], [], []>} : vector<32x32xf32>, vector<32x32xf32>, vector<32x32xf32> -> vector<32x32xf32>
    %202 = arith.addf %198, %201 : vector<32x32xf32>
    %203 = vector.extract_strided_slice %183 {offsets = [2, 0, 0], sizes = [1, 32, 32], strides = [1, 1, 1]} : vector<3x32x32xf32> to vector<1x32x32xf32>
    %204 = vector.shape_cast %203 : vector<1x32x32xf32> to vector<32x32xf32>
    %cst_90 = arith.constant dense<0.000000e+00> : vector<32x32xf32>
    %205 = tpu.matmul %195, %204, %cst_90 {dimension_numbers = #tpu.dot_dimension_numbers<[1], [0], [0], [1], [0, 0, 1, 1], [], []>} : vector<32x32xf32>, vector<32x32xf32>, vector<32x32xf32> -> vector<32x32xf32>
    %206 = arith.addf %202, %205 : vector<32x32xf32>
    %207 = vector.broadcast %185 : vector<1x32xf32> to vector<32x32xf32>
    %208 = arith.addf %206, %207 : vector<32x32xf32>
    %209 = vector.shape_cast %208 : vector<32x32xf32> to vector<2x16x32xf32>
    %210 = vector.shape_cast %22 : vector<2x32xf32> to vector<2x1x32xf32>
    %211 = vector.broadcast %210 : vector<2x1x32xf32> to vector<2x16x32xf32>
    %212 = arith.addf %209, %211 : vector<2x16x32xf32>
    %213 = vector.shape_cast %212 : vector<2x16x32xf32> to vector<32x32xf32>
    %c3 = arith.constant 3 : index
    %c0_91 = arith.constant 0 : index
    %c0_92 = arith.constant 0 : index
    %214 = vector.load %arg7[%c3, %c0_91, %c0_92] : memref<4x1x32xf32, #tpu.memory_space<vmem>>, vector<1x1x32xf32>
    %215 = vector.shape_cast %214 : vector<1x1x32xf32> to vector<1x32xf32>
    %c3_93 = arith.constant 3 : index
    %c0_94 = arith.constant 0 : index
    %c0_95 = arith.constant 0 : index
    %216 = vector.load %arg8[%c3_93, %c0_94, %c0_95] : memref<4x1x32xf32, #tpu.memory_space<vmem>>, vector<1x1x32xf32>
    %217 = vector.shape_cast %216 : vector<1x1x32xf32> to vector<1x32xf32>
    %218 = vector.shape_cast %213 : vector<32x32xf32> to vector<2x16x32xf32>
    %cst_96 = arith.constant dense<0.000000e+00> : vector<2x32xf32>
    %219 = vector.multi_reduction <add>, %218, %cst_96 [1] : vector<2x16x32xf32> to vector<2x32xf32>
    %220 = arith.mulf %218, %218 : vector<2x16x32xf32>
    %cst_97 = arith.constant dense<0.000000e+00> : vector<2x32xf32>
    %221 = vector.multi_reduction <add>, %220, %cst_97 [1] : vector<2x16x32xf32> to vector<2x32xf32>
    %cst_98 = arith.constant dense<0.000000e+00> : vector<2x32xf32>
    %222 = tpu.matmul %219, %21, %cst_98 {dimension_numbers = #tpu.dot_dimension_numbers<[1], [0], [0], [1], [0, 0, 1, 1], [], []>} : vector<2x32xf32>, vector<32x32xf32>, vector<2x32xf32> -> vector<2x32xf32>
    %cst_99 = arith.constant dense<0.000000e+00> : vector<2x32xf32>
    %223 = tpu.matmul %221, %21, %cst_99 {dimension_numbers = #tpu.dot_dimension_numbers<[1], [0], [0], [1], [0, 0, 1, 1], [], []>} : vector<2x32xf32>, vector<32x32xf32>, vector<2x32xf32> -> vector<2x32xf32>
    %224 = arith.mulf %222, %222 : vector<2x32xf32>
    %225 = arith.subf %223, %224 : vector<2x32xf32>
    %cst_100 = arith.constant 0.000000e+00 : f32
    %226 = vector.broadcast %cst_100 : f32 to vector<2x32xf32>
    %227 = arith.maximumf %225, %226 : vector<2x32xf32>
    %cst_101 = arith.constant 9.99999974E-6 : f32
    %228 = vector.broadcast %cst_101 : f32 to vector<2x32xf32>
    %229 = arith.addf %227, %228 : vector<2x32xf32>
    %230 = math.rsqrt %229 : vector<2x32xf32>
    %231 = vector.broadcast %215 : vector<1x32xf32> to vector<2x32xf32>
    %232 = arith.mulf %230, %231 : vector<2x32xf32>
    %233 = arith.mulf %222, %232 : vector<2x32xf32>
    %234 = vector.broadcast %217 : vector<1x32xf32> to vector<2x32xf32>
    %235 = arith.subf %234, %233 : vector<2x32xf32>
    %236 = vector.shape_cast %232 : vector<2x32xf32> to vector<2x1x32xf32>
    %237 = vector.broadcast %236 : vector<2x1x32xf32> to vector<2x16x32xf32>
    %238 = arith.mulf %218, %237 : vector<2x16x32xf32>
    %239 = vector.shape_cast %235 : vector<2x32xf32> to vector<2x1x32xf32>
    %240 = vector.broadcast %239 : vector<2x1x32xf32> to vector<2x16x32xf32>
    %241 = arith.addf %238, %240 : vector<2x16x32xf32>
    %242 = vector.shape_cast %241 : vector<2x16x32xf32> to vector<32x32xf32>
    %cst_102 = arith.constant 0.000000e+00 : f32
    %243 = vector.broadcast %cst_102 : f32 to vector<32x32xf32>
    %244 = arith.maximumf %242, %243 : vector<32x32xf32>
    %c3_103 = arith.constant 3 : index
    %c0_104 = arith.constant 0 : index
    %c0_105 = arith.constant 0 : index
    %c0_106 = arith.constant 0 : index
    %245 = vector.load %arg5[%c3_103, %c0_104, %c0_105, %c0_106] : memref<4x3x32x32xf32, #tpu.memory_space<vmem>>, vector<1x3x32x32xf32>
    %246 = vector.shape_cast %245 : vector<1x3x32x32xf32> to vector<3x32x32xf32>
    %c3_107 = arith.constant 3 : index
    %c0_108 = arith.constant 0 : index
    %c0_109 = arith.constant 0 : index
    %247 = vector.load %arg6[%c3_107, %c0_108, %c0_109] : memref<4x1x32xf32, #tpu.memory_space<vmem>>, vector<1x1x32xf32>
    %248 = vector.shape_cast %247 : vector<1x1x32xf32> to vector<1x32xf32>
    %c1_i32_110 = arith.constant 1 : i32
    %249 = tpu.dynamic_rotate %244 by %c1_i32_110 dim 0 : vector<32x32xf32>, i32 -> vector<32x32xf32>
    %cst_111 = arith.constant 0.000000e+00 : f32
    %250 = vector.shape_cast %18 : vector<32x1xi1> to vector<32x1xi1>
    %251 = vector.broadcast %250 : vector<32x1xi1> to vector<32x32xi1>
    %252 = vector.broadcast %cst_111 : f32 to vector<32x32xf32>
    %253 = arith.select %251, %249, %252 : vector<32x32xi1>, vector<32x32xf32>
    %c31_i32_112 = arith.constant 31 : i32
    %254 = tpu.dynamic_rotate %244 by %c31_i32_112 dim 0 : vector<32x32xf32>, i32 -> vector<32x32xf32>
    %cst_113 = arith.constant 0.000000e+00 : f32
    %255 = vector.shape_cast %20 : vector<32x1xi1> to vector<32x1xi1>
    %256 = vector.broadcast %255 : vector<32x1xi1> to vector<32x32xi1>
    %257 = vector.broadcast %cst_113 : f32 to vector<32x32xf32>
    %258 = arith.select %256, %254, %257 : vector<32x32xi1>, vector<32x32xf32>
    %259 = vector.extract_strided_slice %246 {offsets = [0, 0, 0], sizes = [1, 32, 32], strides = [1, 1, 1]} : vector<3x32x32xf32> to vector<1x32x32xf32>
    %260 = vector.shape_cast %259 : vector<1x32x32xf32> to vector<32x32xf32>
    %cst_114 = arith.constant dense<0.000000e+00> : vector<32x32xf32>
    %261 = tpu.matmul %253, %260, %cst_114 {dimension_numbers = #tpu.dot_dimension_numbers<[1], [0], [0], [1], [0, 0, 1, 1], [], []>} : vector<32x32xf32>, vector<32x32xf32>, vector<32x32xf32> -> vector<32x32xf32>
    %262 = vector.extract_strided_slice %246 {offsets = [1, 0, 0], sizes = [1, 32, 32], strides = [1, 1, 1]} : vector<3x32x32xf32> to vector<1x32x32xf32>
    %263 = vector.shape_cast %262 : vector<1x32x32xf32> to vector<32x32xf32>
    %cst_115 = arith.constant dense<0.000000e+00> : vector<32x32xf32>
    %264 = tpu.matmul %244, %263, %cst_115 {dimension_numbers = #tpu.dot_dimension_numbers<[1], [0], [0], [1], [0, 0, 1, 1], [], []>} : vector<32x32xf32>, vector<32x32xf32>, vector<32x32xf32> -> vector<32x32xf32>
    %265 = arith.addf %261, %264 : vector<32x32xf32>
    %266 = vector.extract_strided_slice %246 {offsets = [2, 0, 0], sizes = [1, 32, 32], strides = [1, 1, 1]} : vector<3x32x32xf32> to vector<1x32x32xf32>
    %267 = vector.shape_cast %266 : vector<1x32x32xf32> to vector<32x32xf32>
    %cst_116 = arith.constant dense<0.000000e+00> : vector<32x32xf32>
    %268 = tpu.matmul %258, %267, %cst_116 {dimension_numbers = #tpu.dot_dimension_numbers<[1], [0], [0], [1], [0, 0, 1, 1], [], []>} : vector<32x32xf32>, vector<32x32xf32>, vector<32x32xf32> -> vector<32x32xf32>
    %269 = arith.addf %265, %268 : vector<32x32xf32>
    %270 = vector.broadcast %248 : vector<1x32xf32> to vector<32x32xf32>
    %271 = arith.addf %269, %270 : vector<32x32xf32>
    %272 = arith.addf %271, %150 : vector<32x32xf32>
    %c0_117 = arith.constant 0 : index
    %c0_118 = arith.constant 0 : index
    %273 = vector.load %arg9[%c0_117, %c0_118] : memref<32x128xf32, #tpu.memory_space<vmem>>, vector<32x128xf32>
    %cst_119 = arith.constant dense<0.000000e+00> : vector<32x128xf32>
    %274 = tpu.matmul %272, %273, %cst_119 {dimension_numbers = #tpu.dot_dimension_numbers<[1], [0], [0], [1], [0, 0, 1, 1], [], []>} : vector<32x32xf32>, vector<32x128xf32>, vector<32x128xf32> -> vector<32x128xf32>
    %c0_120 = arith.constant 0 : index
    %c0_121 = arith.constant 0 : index
    %275 = vector.load %arg10[%c0_120, %c0_121] : memref<1x128xf32, #tpu.memory_space<vmem>>, vector<1x128xf32>
    %276 = vector.broadcast %275 : vector<1x128xf32> to vector<32x128xf32>
    %277 = arith.addf %274, %276 : vector<32x128xf32>
    %c0_122 = arith.constant 0 : index
    %c0_123 = arith.constant 0 : index
    %278 = vector.load %arg12[%c0_122, %c0_123] : memref<32x128xf32, #tpu.memory_space<vmem>>, vector<32x128xf32>
    tpu.vector_store %arg12[%c0_122, %c0_123], %277 {strides = array<i32>} : memref<32x128xf32, #tpu.memory_space<vmem>>, vector<32x128xf32>,
    return
  }
  func.func @transform_0(%arg0: i32) -> (i32, i32) {
    %c0_i32 = arith.constant 0 : i32
    %c0_i32_0 = arith.constant 0 : i32
    return %arg0, %c0_i32 : i32, i32
  }
  func.func @transform_1(%arg0: i32) -> (i32, i32) {
    %c0_i32 = arith.constant 0 : i32
    %c0_i32_0 = arith.constant 0 : i32
    return %arg0, %c0_i32 : i32, i32
  }
  func.func @transform_2(%arg0: i32) -> (i32, i32) {
    %c0_i32 = arith.constant 0 : i32
    %c0_i32_0 = arith.constant 0 : i32
    %c0_i32_1 = arith.constant 0 : i32
    return %c0_i32, %c0_i32_0 : i32, i32
  }
  func.func @transform_3(%arg0: i32) -> (i32, i32) {
    %c0_i32 = arith.constant 0 : i32
    %c0_i32_0 = arith.constant 0 : i32
    %c0_i32_1 = arith.constant 0 : i32
    return %c0_i32, %c0_i32_0 : i32, i32
  }
  func.func @transform_4(%arg0: i32) -> (i32, i32, i32, i32) {
    %c0_i32 = arith.constant 0 : i32
    %c0_i32_0 = arith.constant 0 : i32
    %c0_i32_1 = arith.constant 0 : i32
    %c0_i32_2 = arith.constant 0 : i32
    %c0_i32_3 = arith.constant 0 : i32
    return %c0_i32, %c0_i32_0, %c0_i32_1, %c0_i32_2 : i32, i32, i32, i32
  }
  func.func @transform_5(%arg0: i32) -> (i32, i32, i32) {
    %c0_i32 = arith.constant 0 : i32
    %c0_i32_0 = arith.constant 0 : i32
    %c0_i32_1 = arith.constant 0 : i32
    %c0_i32_2 = arith.constant 0 : i32
    return %c0_i32, %c0_i32_0, %c0_i32_1 : i32, i32, i32
  }
  func.func @transform_6(%arg0: i32) -> (i32, i32, i32) {
    %c0_i32 = arith.constant 0 : i32
    %c0_i32_0 = arith.constant 0 : i32
    %c0_i32_1 = arith.constant 0 : i32
    %c0_i32_2 = arith.constant 0 : i32
    return %c0_i32, %c0_i32_0, %c0_i32_1 : i32, i32, i32
  }
  func.func @transform_7(%arg0: i32) -> (i32, i32, i32) {
    %c0_i32 = arith.constant 0 : i32
    %c0_i32_0 = arith.constant 0 : i32
    %c0_i32_1 = arith.constant 0 : i32
    %c0_i32_2 = arith.constant 0 : i32
    return %c0_i32, %c0_i32_0, %c0_i32_1 : i32, i32, i32
  }
  func.func @transform_8(%arg0: i32) -> (i32, i32) {
    %c0_i32 = arith.constant 0 : i32
    %c0_i32_0 = arith.constant 0 : i32
    %c0_i32_1 = arith.constant 0 : i32
    return %c0_i32, %c0_i32_0 : i32, i32
  }
  func.func @transform_9(%arg0: i32) -> (i32, i32) {
    %c0_i32 = arith.constant 0 : i32
    %c0_i32_0 = arith.constant 0 : i32
    %c0_i32_1 = arith.constant 0 : i32
    return %c0_i32, %c0_i32_0 : i32, i32
  }
  func.func @transform_10(%arg0: i32) -> (i32, i32) {
    %c0_i32 = arith.constant 0 : i32
    %c0_i32_0 = arith.constant 0 : i32
    %c0_i32_1 = arith.constant 0 : i32
    return %c0_i32, %c0_i32_0 : i32, i32
  }
  func.func @transform_11(%arg0: i32) -> (i32, i32) {
    %c0_i32 = arith.constant 0 : i32
    %c0_i32_0 = arith.constant 0 : i32
    return %arg0, %c0_i32 : i32, i32
  }
}

module attributes {stable_mosaic.version = 11 : i64} {
  func.func @_diffusion_kernel(%arg0: i32, %arg1: memref<2x32xf32, #tpu.memory_space<vmem>>, %arg2: memref<32x128xf32, #tpu.memory_space<vmem>>, %arg3: memref<128x32xf32, #tpu.memory_space<vmem>>, %arg4: memref<1x32xf32, #tpu.memory_space<vmem>>, %arg5: memref<4x3x32x32xf32, #tpu.memory_space<vmem>>, %arg6: memref<4x1x32xf32, #tpu.memory_space<vmem>>, %arg7: memref<4x1x32xf32, #tpu.memory_space<vmem>>, %arg8: memref<4x1x32xf32, #tpu.memory_space<vmem>>, %arg9: memref<32x128xf32, #tpu.memory_space<vmem>>, %arg10: memref<1x128xf32, #tpu.memory_space<vmem>>, %arg11: memref<32x32xf32, #tpu.memory_space<vmem>>, %arg12: memref<32x128xf32, #tpu.memory_space<vmem>>) attributes {dimension_semantics = [#tpu.dimension_semantics<parallel>], iteration_bounds = array<i64: 1>, scalar_prefetch = 0 : i64, scratch_operands = 0 : i64, tpu.core_type = #tpu.core_type<tc>, window_params = [{transform_indices = @transform_0, window_bounds = array<i64: 2, 32>}, {transform_indices = @transform_1, window_bounds = array<i64: 32, 128>}, {pipeline_mode = #tpu.pipeline_mode<synchronous>, transform_indices = @transform_2, window_bounds = array<i64: 128, 32>}, {pipeline_mode = #tpu.pipeline_mode<synchronous>, transform_indices = @transform_3, window_bounds = array<i64: 1, 32>}, {pipeline_mode = #tpu.pipeline_mode<synchronous>, transform_indices = @transform_4, window_bounds = array<i64: 4, 3, 32, 32>}, {pipeline_mode = #tpu.pipeline_mode<synchronous>, transform_indices = @transform_5, window_bounds = array<i64: 4, 1, 32>}, {pipeline_mode = #tpu.pipeline_mode<synchronous>, transform_indices = @transform_6, window_bounds = array<i64: 4, 1, 32>}, {pipeline_mode = #tpu.pipeline_mode<synchronous>, transform_indices = @transform_7, window_bounds = array<i64: 4, 1, 32>}, {pipeline_mode = #tpu.pipeline_mode<synchronous>, transform_indices = @transform_8, window_bounds = array<i64: 32, 128>}, {pipeline_mode = #tpu.pipeline_mode<synchronous>, transform_indices = @transform_9, window_bounds = array<i64: 1, 128>}, {pipeline_mode = #tpu.pipeline_mode<synchronous>, transform_indices = @transform_10, window_bounds = array<i64: 32, 32>}, {transform_indices = @transform_11, window_bounds = array<i64: 32, 128>}]} {
    %0 = tpu.iota {dimensions = array<i32: 0>} : vector<32x1xi32>
    %c16_i32 = arith.constant 16 : i32
    %c0_i32 = arith.constant 0 : i32
    %1 = arith.cmpi eq, %c16_i32, %c0_i32 : i32
    %c1_i32 = arith.constant 1 : i32
    %2 = arith.select %1, %c1_i32, %c16_i32 : i32
    %3 = vector.broadcast %2 : i32 to vector<32x1xi32>
    %4 = arith.remsi %0, %3 : vector<32x1xi32>
    %c0_i32_0 = arith.constant 0 : i32
    %5 = vector.broadcast %c0_i32_0 : i32 to vector<32x1xi32>
    %6 = arith.cmpi ne, %4, %5 : vector<32x1xi32>
    %c0_i32_1 = arith.constant 0 : i32
    %7 = vector.broadcast %c0_i32_1 : i32 to vector<32x1xi32>
    %8 = arith.cmpi slt, %4, %7 : vector<32x1xi32>
    %c0_i32_2 = arith.constant 0 : i32
    %9 = arith.cmpi slt, %2, %c0_i32_2 : i32
    %10 = vector.broadcast %9 : i1 to vector<32x1xi1>
    %11 = vector.broadcast %10 : vector<32x1xi1> to vector<32x1xi1>
    %12 = arith.xori %8, %11 : vector<32x1xi1>
    %13 = arith.andi %12, %6 : vector<32x1xi1>
    %14 = vector.broadcast %2 : i32 to vector<32x1xi32>
    %15 = arith.addi %4, %14 : vector<32x1xi32>
    %16 = arith.select %13, %15, %4 : vector<32x1xi1>, vector<32x1xi32>
    %c1_i32_3 = arith.constant 1 : i32
    %17 = vector.broadcast %c1_i32_3 : i32 to vector<32x1xi32>
    %18 = arith.cmpi sge, %16, %17 : vector<32x1xi32>
    %c14_i32 = arith.constant 14 : i32
    %19 = vector.broadcast %c14_i32 : i32 to vector<32x1xi32>
    %20 = arith.cmpi sle, %16, %19 : vector<32x1xi32>
    %c0 = arith.constant 0 : index
    %c0_4 = arith.constant 0 : index
    %21 = vector.load %arg11[%c0, %c0_4] : memref<32x32xf32, #tpu.memory_space<vmem>>, vector<32x32xf32>
    %c0_5 = arith.constant 0 : index
    %c0_6 = arith.constant 0 : index
    %22 = vector.load %arg1[%c0_5, %c0_6] : memref<2x32xf32, #tpu.memory_space<vmem>>, vector<2x32xf32>
    %c0_7 = arith.constant 0 : index
    %c0_8 = arith.constant 0 : index
    %23 = vector.load %arg2[%c0_7, %c0_8] : memref<32x128xf32, #tpu.memory_space<vmem>>, vector<32x128xf32>
    %c0_9 = arith.constant 0 : index
    %c0_10 = arith.constant 0 : index
    %24 = vector.load %arg3[%c0_9, %c0_10] : memref<128x32xf32, #tpu.memory_space<vmem>>, vector<128x32xf32>
    %cst = arith.constant dense<0.000000e+00> : vector<32x32xf32>
    %25 = tpu.matmul %23, %24, %cst {dimension_numbers = #tpu.dot_dimension_numbers<[1], [0], [0], [1], [0, 0, 1, 1], [], []>} : vector<32x128xf32>, vector<128x32xf32>, vector<32x32xf32> -> vector<32x32xf32>
    %c0_11 = arith.constant 0 : index
    %c0_12 = arith.constant 0 : index
    %26 = vector.load %arg4[%c0_11, %c0_12] : memref<1x32xf32, #tpu.memory_space<vmem>>, vector<1x32xf32>
    %27 = vector.broadcast %26 : vector<1x32xf32> to vector<32x32xf32>
    %28 = arith.addf %25, %27 : vector<32x32xf32>
    %c0_13 = arith.constant 0 : index
    %c0_14 = arith.constant 0 : index
    %c0_15 = arith.constant 0 : index
    %29 = vector.load %arg7[%c0_13, %c0_14, %c0_15] : memref<4x1x32xf32, #tpu.memory_space<vmem>>, vector<1x1x32xf32>
    %30 = vector.shape_cast %29 : vector<1x1x32xf32> to vector<1x32xf32>
    %c0_16 = arith.constant 0 : index
    %c0_17 = arith.constant 0 : index
    %c0_18 = arith.constant 0 : index
    %31 = vector.load %arg8[%c0_16, %c0_17, %c0_18] : memref<4x1x32xf32, #tpu.memory_space<vmem>>, vector<1x1x32xf32>
    %32 = vector.shape_cast %31 : vector<1x1x32xf32> to vector<1x32xf32>
    %33 = vector.shape_cast %28 : vector<32x32xf32> to vector<2x16x32xf32>
    %cst_19 = arith.constant dense<0.000000e+00> : vector<2x32xf32>
    %34 = vector.multi_reduction <add>, %33, %cst_19 [1] : vector<2x16x32xf32> to vector<2x32xf32>
    %35 = arith.mulf %33, %33 : vector<2x16x32xf32>
    %cst_20 = arith.constant dense<0.000000e+00> : vector<2x32xf32>
    %36 = vector.multi_reduction <add>, %35, %cst_20 [1] : vector<2x16x32xf32> to vector<2x32xf32>
    %cst_21 = arith.constant dense<0.000000e+00> : vector<2x32xf32>
    %37 = tpu.matmul %34, %21, %cst_21 {dimension_numbers = #tpu.dot_dimension_numbers<[1], [0], [0], [1], [0, 0, 1, 1], [], []>} : vector<2x32xf32>, vector<32x32xf32>, vector<2x32xf32> -> vector<2x32xf32>
    %cst_22 = arith.constant dense<0.000000e+00> : vector<2x32xf32>
    %38 = tpu.matmul %36, %21, %cst_22 {dimension_numbers = #tpu.dot_dimension_numbers<[1], [0], [0], [1], [0, 0, 1, 1], [], []>} : vector<2x32xf32>, vector<32x32xf32>, vector<2x32xf32> -> vector<2x32xf32>
    %39 = arith.mulf %37, %37 : vector<2x32xf32>
    %40 = arith.subf %38, %39 : vector<2x32xf32>
    %cst_23 = arith.constant 0.000000e+00 : f32
    %41 = vector.broadcast %cst_23 : f32 to vector<2x32xf32>
    %42 = arith.maximumf %40, %41 : vector<2x32xf32>
    %cst_24 = arith.constant 9.99999974E-6 : f32
    %43 = vector.broadcast %cst_24 : f32 to vector<2x32xf32>
    %44 = arith.addf %42, %43 : vector<2x32xf32>
    %45 = math.rsqrt %44 : vector<2x32xf32>
    %46 = vector.broadcast %30 : vector<1x32xf32> to vector<2x32xf32>
    %47 = arith.mulf %45, %46 : vector<2x32xf32>
    %48 = arith.mulf %37, %47 : vector<2x32xf32>
    %49 = vector.broadcast %32 : vector<1x32xf32> to vector<2x32xf32>
    %50 = arith.subf %49, %48 : vector<2x32xf32>
    %51 = vector.shape_cast %47 : vector<2x32xf32> to vector<2x1x32xf32>
    %52 = vector.broadcast %51 : vector<2x1x32xf32> to vector<2x16x32xf32>
    %53 = arith.mulf %33, %52 : vector<2x16x32xf32>
    %54 = vector.shape_cast %50 : vector<2x32xf32> to vector<2x1x32xf32>
    %55 = vector.broadcast %54 : vector<2x1x32xf32> to vector<2x16x32xf32>
    %56 = arith.addf %53, %55 : vector<2x16x32xf32>
    %57 = vector.shape_cast %56 : vector<2x16x32xf32> to vector<32x32xf32>
    %cst_25 = arith.constant 0.000000e+00 : f32
    %58 = vector.broadcast %cst_25 : f32 to vector<32x32xf32>
    %59 = arith.maximumf %57, %58 : vector<32x32xf32>
    %c0_26 = arith.constant 0 : index
    %c0_27 = arith.constant 0 : index
    %c0_28 = arith.constant 0 : index
    %c0_29 = arith.constant 0 : index
    %60 = vector.load %arg5[%c0_26, %c0_27, %c0_28, %c0_29] : memref<4x3x32x32xf32, #tpu.memory_space<vmem>>, vector<1x3x32x32xf32>
    %61 = vector.shape_cast %60 : vector<1x3x32x32xf32> to vector<3x32x32xf32>
    %c0_30 = arith.constant 0 : index
    %c0_31 = arith.constant 0 : index
    %c0_32 = arith.constant 0 : index
    %62 = vector.load %arg6[%c0_30, %c0_31, %c0_32] : memref<4x1x32xf32, #tpu.memory_space<vmem>>, vector<1x1x32xf32>
    %63 = vector.shape_cast %62 : vector<1x1x32xf32> to vector<1x32xf32>
    %c1_i32_33 = arith.constant 1 : i32
    %64 = tpu.dynamic_rotate %59 by %c1_i32_33 dim 0 : vector<32x32xf32>, i32 -> vector<32x32xf32>
    %cst_34 = arith.constant 0.000000e+00 : f32
    %65 = vector.shape_cast %18 : vector<32x1xi1> to vector<32x1xi1>
    %66 = vector.broadcast %65 : vector<32x1xi1> to vector<32x32xi1>
    %67 = vector.broadcast %cst_34 : f32 to vector<32x32xf32>
    %68 = arith.select %66, %64, %67 : vector<32x32xi1>, vector<32x32xf32>
    %c31_i32 = arith.constant 31 : i32
    %69 = tpu.dynamic_rotate %59 by %c31_i32 dim 0 : vector<32x32xf32>, i32 -> vector<32x32xf32>
    %cst_35 = arith.constant 0.000000e+00 : f32
    %70 = vector.shape_cast %20 : vector<32x1xi1> to vector<32x1xi1>
    %71 = vector.broadcast %70 : vector<32x1xi1> to vector<32x32xi1>
    %72 = vector.broadcast %cst_35 : f32 to vector<32x32xf32>
    %73 = arith.select %71, %69, %72 : vector<32x32xi1>, vector<32x32xf32>
    %74 = vector.extract_strided_slice %61 {offsets = [0, 0, 0], sizes = [1, 32, 32], strides = [1, 1, 1]} : vector<3x32x32xf32> to vector<1x32x32xf32>
    %75 = vector.shape_cast %74 : vector<1x32x32xf32> to vector<32x32xf32>
    %cst_36 = arith.constant dense<0.000000e+00> : vector<32x32xf32>
    %76 = tpu.matmul %68, %75, %cst_36 {dimension_numbers = #tpu.dot_dimension_numbers<[1], [0], [0], [1], [0, 0, 1, 1], [], []>} : vector<32x32xf32>, vector<32x32xf32>, vector<32x32xf32> -> vector<32x32xf32>
    %77 = vector.extract_strided_slice %61 {offsets = [1, 0, 0], sizes = [1, 32, 32], strides = [1, 1, 1]} : vector<3x32x32xf32> to vector<1x32x32xf32>
    %78 = vector.shape_cast %77 : vector<1x32x32xf32> to vector<32x32xf32>
    %cst_37 = arith.constant dense<0.000000e+00> : vector<32x32xf32>
    %79 = tpu.matmul %59, %78, %cst_37 {dimension_numbers = #tpu.dot_dimension_numbers<[1], [0], [0], [1], [0, 0, 1, 1], [], []>} : vector<32x32xf32>, vector<32x32xf32>, vector<32x32xf32> -> vector<32x32xf32>
    %80 = arith.addf %76, %79 : vector<32x32xf32>
    %81 = vector.extract_strided_slice %61 {offsets = [2, 0, 0], sizes = [1, 32, 32], strides = [1, 1, 1]} : vector<3x32x32xf32> to vector<1x32x32xf32>
    %82 = vector.shape_cast %81 : vector<1x32x32xf32> to vector<32x32xf32>
    %cst_38 = arith.constant dense<0.000000e+00> : vector<32x32xf32>
    %83 = tpu.matmul %73, %82, %cst_38 {dimension_numbers = #tpu.dot_dimension_numbers<[1], [0], [0], [1], [0, 0, 1, 1], [], []>} : vector<32x32xf32>, vector<32x32xf32>, vector<32x32xf32> -> vector<32x32xf32>
    %84 = arith.addf %80, %83 : vector<32x32xf32>
    %85 = vector.broadcast %63 : vector<1x32xf32> to vector<32x32xf32>
    %86 = arith.addf %84, %85 : vector<32x32xf32>
    %87 = vector.shape_cast %86 : vector<32x32xf32> to vector<2x16x32xf32>
    %88 = vector.shape_cast %22 : vector<2x32xf32> to vector<2x1x32xf32>
    %89 = vector.broadcast %88 : vector<2x1x32xf32> to vector<2x16x32xf32>
    %90 = arith.addf %87, %89 : vector<2x16x32xf32>
    %91 = vector.shape_cast %90 : vector<2x16x32xf32> to vector<32x32xf32>
    %c1 = arith.constant 1 : index
    %c0_39 = arith.constant 0 : index
    %c0_40 = arith.constant 0 : index
    %92 = vector.load %arg7[%c1, %c0_39, %c0_40] : memref<4x1x32xf32, #tpu.memory_space<vmem>>, vector<1x1x32xf32>
    %93 = vector.shape_cast %92 : vector<1x1x32xf32> to vector<1x32xf32>
    %c1_41 = arith.constant 1 : index
    %c0_42 = arith.constant 0 : index
    %c0_43 = arith.constant 0 : index
    %94 = vector.load %arg8[%c1_41, %c0_42, %c0_43] : memref<4x1x32xf32, #tpu.memory_space<vmem>>, vector<1x1x32xf32>
    %95 = vector.shape_cast %94 : vector<1x1x32xf32> to vector<1x32xf32>
    %96 = vector.shape_cast %91 : vector<32x32xf32> to vector<2x16x32xf32>
    %cst_44 = arith.constant dense<0.000000e+00> : vector<2x32xf32>
    %97 = vector.multi_reduction <add>, %96, %cst_44 [1] : vector<2x16x32xf32> to vector<2x32xf32>
    %98 = arith.mulf %96, %96 : vector<2x16x32xf32>
    %cst_45 = arith.constant dense<0.000000e+00> : vector<2x32xf32>
    %99 = vector.multi_reduction <add>, %98, %cst_45 [1] : vector<2x16x32xf32> to vector<2x32xf32>
    %cst_46 = arith.constant dense<0.000000e+00> : vector<2x32xf32>
    %100 = tpu.matmul %97, %21, %cst_46 {dimension_numbers = #tpu.dot_dimension_numbers<[1], [0], [0], [1], [0, 0, 1, 1], [], []>} : vector<2x32xf32>, vector<32x32xf32>, vector<2x32xf32> -> vector<2x32xf32>
    %cst_47 = arith.constant dense<0.000000e+00> : vector<2x32xf32>
    %101 = tpu.matmul %99, %21, %cst_47 {dimension_numbers = #tpu.dot_dimension_numbers<[1], [0], [0], [1], [0, 0, 1, 1], [], []>} : vector<2x32xf32>, vector<32x32xf32>, vector<2x32xf32> -> vector<2x32xf32>
    %102 = arith.mulf %100, %100 : vector<2x32xf32>
    %103 = arith.subf %101, %102 : vector<2x32xf32>
    %cst_48 = arith.constant 0.000000e+00 : f32
    %104 = vector.broadcast %cst_48 : f32 to vector<2x32xf32>
    %105 = arith.maximumf %103, %104 : vector<2x32xf32>
    %cst_49 = arith.constant 9.99999974E-6 : f32
    %106 = vector.broadcast %cst_49 : f32 to vector<2x32xf32>
    %107 = arith.addf %105, %106 : vector<2x32xf32>
    %108 = math.rsqrt %107 : vector<2x32xf32>
    %109 = vector.broadcast %93 : vector<1x32xf32> to vector<2x32xf32>
    %110 = arith.mulf %108, %109 : vector<2x32xf32>
    %111 = arith.mulf %100, %110 : vector<2x32xf32>
    %112 = vector.broadcast %95 : vector<1x32xf32> to vector<2x32xf32>
    %113 = arith.subf %112, %111 : vector<2x32xf32>
    %114 = vector.shape_cast %110 : vector<2x32xf32> to vector<2x1x32xf32>
    %115 = vector.broadcast %114 : vector<2x1x32xf32> to vector<2x16x32xf32>
    %116 = arith.mulf %96, %115 : vector<2x16x32xf32>
    %117 = vector.shape_cast %113 : vector<2x32xf32> to vector<2x1x32xf32>
    %118 = vector.broadcast %117 : vector<2x1x32xf32> to vector<2x16x32xf32>
    %119 = arith.addf %116, %118 : vector<2x16x32xf32>
    %120 = vector.shape_cast %119 : vector<2x16x32xf32> to vector<32x32xf32>
    %cst_50 = arith.constant 0.000000e+00 : f32
    %121 = vector.broadcast %cst_50 : f32 to vector<32x32xf32>
    %122 = arith.maximumf %120, %121 : vector<32x32xf32>
    %c1_51 = arith.constant 1 : index
    %c0_52 = arith.constant 0 : index
    %c0_53 = arith.constant 0 : index
    %c0_54 = arith.constant 0 : index
    %123 = vector.load %arg5[%c1_51, %c0_52, %c0_53, %c0_54] : memref<4x3x32x32xf32, #tpu.memory_space<vmem>>, vector<1x3x32x32xf32>
    %124 = vector.shape_cast %123 : vector<1x3x32x32xf32> to vector<3x32x32xf32>
    %c1_55 = arith.constant 1 : index
    %c0_56 = arith.constant 0 : index
    %c0_57 = arith.constant 0 : index
    %125 = vector.load %arg6[%c1_55, %c0_56, %c0_57] : memref<4x1x32xf32, #tpu.memory_space<vmem>>, vector<1x1x32xf32>
    %126 = vector.shape_cast %125 : vector<1x1x32xf32> to vector<1x32xf32>
    %c1_i32_58 = arith.constant 1 : i32
    %127 = tpu.dynamic_rotate %122 by %c1_i32_58 dim 0 : vector<32x32xf32>, i32 -> vector<32x32xf32>
    %cst_59 = arith.constant 0.000000e+00 : f32
    %128 = vector.shape_cast %18 : vector<32x1xi1> to vector<32x1xi1>
    %129 = vector.broadcast %128 : vector<32x1xi1> to vector<32x32xi1>
    %130 = vector.broadcast %cst_59 : f32 to vector<32x32xf32>
    %131 = arith.select %129, %127, %130 : vector<32x32xi1>, vector<32x32xf32>
    %c31_i32_60 = arith.constant 31 : i32
    %132 = tpu.dynamic_rotate %122 by %c31_i32_60 dim 0 : vector<32x32xf32>, i32 -> vector<32x32xf32>
    %cst_61 = arith.constant 0.000000e+00 : f32
    %133 = vector.shape_cast %20 : vector<32x1xi1> to vector<32x1xi1>
    %134 = vector.broadcast %133 : vector<32x1xi1> to vector<32x32xi1>
    %135 = vector.broadcast %cst_61 : f32 to vector<32x32xf32>
    %136 = arith.select %134, %132, %135 : vector<32x32xi1>, vector<32x32xf32>
    %137 = vector.extract_strided_slice %124 {offsets = [0, 0, 0], sizes = [1, 32, 32], strides = [1, 1, 1]} : vector<3x32x32xf32> to vector<1x32x32xf32>
    %138 = vector.shape_cast %137 : vector<1x32x32xf32> to vector<32x32xf32>
    %cst_62 = arith.constant dense<0.000000e+00> : vector<32x32xf32>
    %139 = tpu.matmul %131, %138, %cst_62 {dimension_numbers = #tpu.dot_dimension_numbers<[1], [0], [0], [1], [0, 0, 1, 1], [], []>} : vector<32x32xf32>, vector<32x32xf32>, vector<32x32xf32> -> vector<32x32xf32>
    %140 = vector.extract_strided_slice %124 {offsets = [1, 0, 0], sizes = [1, 32, 32], strides = [1, 1, 1]} : vector<3x32x32xf32> to vector<1x32x32xf32>
    %141 = vector.shape_cast %140 : vector<1x32x32xf32> to vector<32x32xf32>
    %cst_63 = arith.constant dense<0.000000e+00> : vector<32x32xf32>
    %142 = tpu.matmul %122, %141, %cst_63 {dimension_numbers = #tpu.dot_dimension_numbers<[1], [0], [0], [1], [0, 0, 1, 1], [], []>} : vector<32x32xf32>, vector<32x32xf32>, vector<32x32xf32> -> vector<32x32xf32>
    %143 = arith.addf %139, %142 : vector<32x32xf32>
    %144 = vector.extract_strided_slice %124 {offsets = [2, 0, 0], sizes = [1, 32, 32], strides = [1, 1, 1]} : vector<3x32x32xf32> to vector<1x32x32xf32>
    %145 = vector.shape_cast %144 : vector<1x32x32xf32> to vector<32x32xf32>
    %cst_64 = arith.constant dense<0.000000e+00> : vector<32x32xf32>
    %146 = tpu.matmul %136, %145, %cst_64 {dimension_numbers = #tpu.dot_dimension_numbers<[1], [0], [0], [1], [0, 0, 1, 1], [], []>} : vector<32x32xf32>, vector<32x32xf32>, vector<32x32xf32> -> vector<32x32xf32>
    %147 = arith.addf %143, %146 : vector<32x32xf32>
    %148 = vector.broadcast %126 : vector<1x32xf32> to vector<32x32xf32>
    %149 = arith.addf %147, %148 : vector<32x32xf32>
    %150 = arith.addf %149, %28 : vector<32x32xf32>
    %c2 = arith.constant 2 : index
    %c0_65 = arith.constant 0 : index
    %c0_66 = arith.constant 0 : index
    %151 = vector.load %arg7[%c2, %c0_65, %c0_66] : memref<4x1x32xf32, #tpu.memory_space<vmem>>, vector<1x1x32xf32>
    %152 = vector.shape_cast %151 : vector<1x1x32xf32> to vector<1x32xf32>
    %c2_67 = arith.constant 2 : index
    %c0_68 = arith.constant 0 : index
    %c0_69 = arith.constant 0 : index
    %153 = vector.load %arg8[%c2_67, %c0_68, %c0_69] : memref<4x1x32xf32, #tpu.memory_space<vmem>>, vector<1x1x32xf32>
    %154 = vector.shape_cast %153 : vector<1x1x32xf32> to vector<1x32xf32>
    %155 = vector.shape_cast %150 : vector<32x32xf32> to vector<2x16x32xf32>
    %cst_70 = arith.constant dense<0.000000e+00> : vector<2x32xf32>
    %156 = vector.multi_reduction <add>, %155, %cst_70 [1] : vector<2x16x32xf32> to vector<2x32xf32>
    %157 = arith.mulf %155, %155 : vector<2x16x32xf32>
    %cst_71 = arith.constant dense<0.000000e+00> : vector<2x32xf32>
    %158 = vector.multi_reduction <add>, %157, %cst_71 [1] : vector<2x16x32xf32> to vector<2x32xf32>
    %cst_72 = arith.constant dense<0.000000e+00> : vector<2x32xf32>
    %159 = tpu.matmul %156, %21, %cst_72 {dimension_numbers = #tpu.dot_dimension_numbers<[1], [0], [0], [1], [0, 0, 1, 1], [], []>} : vector<2x32xf32>, vector<32x32xf32>, vector<2x32xf32> -> vector<2x32xf32>
    %cst_73 = arith.constant dense<0.000000e+00> : vector<2x32xf32>
    %160 = tpu.matmul %158, %21, %cst_73 {dimension_numbers = #tpu.dot_dimension_numbers<[1], [0], [0], [1], [0, 0, 1, 1], [], []>} : vector<2x32xf32>, vector<32x32xf32>, vector<2x32xf32> -> vector<2x32xf32>
    %161 = arith.mulf %159, %159 : vector<2x32xf32>
    %162 = arith.subf %160, %161 : vector<2x32xf32>
    %cst_74 = arith.constant 0.000000e+00 : f32
    %163 = vector.broadcast %cst_74 : f32 to vector<2x32xf32>
    %164 = arith.maximumf %162, %163 : vector<2x32xf32>
    %cst_75 = arith.constant 9.99999974E-6 : f32
    %165 = vector.broadcast %cst_75 : f32 to vector<2x32xf32>
    %166 = arith.addf %164, %165 : vector<2x32xf32>
    %167 = math.rsqrt %166 : vector<2x32xf32>
    %168 = vector.broadcast %152 : vector<1x32xf32> to vector<2x32xf32>
    %169 = arith.mulf %167, %168 : vector<2x32xf32>
    %170 = arith.mulf %159, %169 : vector<2x32xf32>
    %171 = vector.broadcast %154 : vector<1x32xf32> to vector<2x32xf32>
    %172 = arith.subf %171, %170 : vector<2x32xf32>
    %173 = vector.shape_cast %169 : vector<2x32xf32> to vector<2x1x32xf32>
    %174 = vector.broadcast %173 : vector<2x1x32xf32> to vector<2x16x32xf32>
    %175 = arith.mulf %155, %174 : vector<2x16x32xf32>
    %176 = vector.shape_cast %172 : vector<2x32xf32> to vector<2x1x32xf32>
    %177 = vector.broadcast %176 : vector<2x1x32xf32> to vector<2x16x32xf32>
    %178 = arith.addf %175, %177 : vector<2x16x32xf32>
    %179 = vector.shape_cast %178 : vector<2x16x32xf32> to vector<32x32xf32>
    %cst_76 = arith.constant 0.000000e+00 : f32
    %180 = vector.broadcast %cst_76 : f32 to vector<32x32xf32>
    %181 = arith.maximumf %179, %180 : vector<32x32xf32>
    %c2_77 = arith.constant 2 : index
    %c0_78 = arith.constant 0 : index
    %c0_79 = arith.constant 0 : index
    %c0_80 = arith.constant 0 : index
    %182 = vector.load %arg5[%c2_77, %c0_78, %c0_79, %c0_80] : memref<4x3x32x32xf32, #tpu.memory_space<vmem>>, vector<1x3x32x32xf32>
    %183 = vector.shape_cast %182 : vector<1x3x32x32xf32> to vector<3x32x32xf32>
    %c2_81 = arith.constant 2 : index
    %c0_82 = arith.constant 0 : index
    %c0_83 = arith.constant 0 : index
    %184 = vector.load %arg6[%c2_81, %c0_82, %c0_83] : memref<4x1x32xf32, #tpu.memory_space<vmem>>, vector<1x1x32xf32>
    %185 = vector.shape_cast %184 : vector<1x1x32xf32> to vector<1x32xf32>
    %c1_i32_84 = arith.constant 1 : i32
    %186 = tpu.dynamic_rotate %181 by %c1_i32_84 dim 0 : vector<32x32xf32>, i32 -> vector<32x32xf32>
    %cst_85 = arith.constant 0.000000e+00 : f32
    %187 = vector.shape_cast %18 : vector<32x1xi1> to vector<32x1xi1>
    %188 = vector.broadcast %187 : vector<32x1xi1> to vector<32x32xi1>
    %189 = vector.broadcast %cst_85 : f32 to vector<32x32xf32>
    %190 = arith.select %188, %186, %189 : vector<32x32xi1>, vector<32x32xf32>
    %c31_i32_86 = arith.constant 31 : i32
    %191 = tpu.dynamic_rotate %181 by %c31_i32_86 dim 0 : vector<32x32xf32>, i32 -> vector<32x32xf32>
    %cst_87 = arith.constant 0.000000e+00 : f32
    %192 = vector.shape_cast %20 : vector<32x1xi1> to vector<32x1xi1>
    %193 = vector.broadcast %192 : vector<32x1xi1> to vector<32x32xi1>
    %194 = vector.broadcast %cst_87 : f32 to vector<32x32xf32>
    %195 = arith.select %193, %191, %194 : vector<32x32xi1>, vector<32x32xf32>
    %196 = vector.extract_strided_slice %183 {offsets = [0, 0, 0], sizes = [1, 32, 32], strides = [1, 1, 1]} : vector<3x32x32xf32> to vector<1x32x32xf32>
    %197 = vector.shape_cast %196 : vector<1x32x32xf32> to vector<32x32xf32>
    %cst_88 = arith.constant dense<0.000000e+00> : vector<32x32xf32>
    %198 = tpu.matmul %190, %197, %cst_88 {dimension_numbers = #tpu.dot_dimension_numbers<[1], [0], [0], [1], [0, 0, 1, 1], [], []>} : vector<32x32xf32>, vector<32x32xf32>, vector<32x32xf32> -> vector<32x32xf32>
    %199 = vector.extract_strided_slice %183 {offsets = [1, 0, 0], sizes = [1, 32, 32], strides = [1, 1, 1]} : vector<3x32x32xf32> to vector<1x32x32xf32>
    %200 = vector.shape_cast %199 : vector<1x32x32xf32> to vector<32x32xf32>
    %cst_89 = arith.constant dense<0.000000e+00> : vector<32x32xf32>
    %201 = tpu.matmul %181, %200, %cst_89 {dimension_numbers = #tpu.dot_dimension_numbers<[1], [0], [0], [1], [0, 0, 1, 1], [], []>} : vector<32x32xf32>, vector<32x32xf32>, vector<32x32xf32> -> vector<32x32xf32>
    %202 = arith.addf %198, %201 : vector<32x32xf32>
    %203 = vector.extract_strided_slice %183 {offsets = [2, 0, 0], sizes = [1, 32, 32], strides = [1, 1, 1]} : vector<3x32x32xf32> to vector<1x32x32xf32>
    %204 = vector.shape_cast %203 : vector<1x32x32xf32> to vector<32x32xf32>
    %cst_90 = arith.constant dense<0.000000e+00> : vector<32x32xf32>
    %205 = tpu.matmul %195, %204, %cst_90 {dimension_numbers = #tpu.dot_dimension_numbers<[1], [0], [0], [1], [0, 0, 1, 1], [], []>} : vector<32x32xf32>, vector<32x32xf32>, vector<32x32xf32> -> vector<32x32xf32>
    %206 = arith.addf %202, %205 : vector<32x32xf32>
    %207 = vector.broadcast %185 : vector<1x32xf32> to vector<32x32xf32>
    %208 = arith.addf %206, %207 : vector<32x32xf32>
    %209 = vector.shape_cast %208 : vector<32x32xf32> to vector<2x16x32xf32>
    %210 = vector.shape_cast %22 : vector<2x32xf32> to vector<2x1x32xf32>
    %211 = vector.broadcast %210 : vector<2x1x32xf32> to vector<2x16x32xf32>
    %212 = arith.addf %209, %211 : vector<2x16x32xf32>
    %213 = vector.shape_cast %212 : vector<2x16x32xf32> to vector<32x32xf32>
    %c3 = arith.constant 3 : index
    %c0_91 = arith.constant 0 : index
    %c0_92 = arith.constant 0 : index
    %214 = vector.load %arg7[%c3, %c0_91, %c0_92] : memref<4x1x32xf32, #tpu.memory_space<vmem>>, vector<1x1x32xf32>
    %215 = vector.shape_cast %214 : vector<1x1x32xf32> to vector<1x32xf32>
    %c3_93 = arith.constant 3 : index
    %c0_94 = arith.constant 0 : index
    %c0_95 = arith.constant 0 : index
    %216 = vector.load %arg8[%c3_93, %c0_94, %c0_95] : memref<4x1x32xf32, #tpu.memory_space<vmem>>, vector<1x1x32xf32>
    %217 = vector.shape_cast %216 : vector<1x1x32xf32> to vector<1x32xf32>
    %218 = vector.shape_cast %213 : vector<32x32xf32> to vector<2x16x32xf32>
    %cst_96 = arith.constant dense<0.000000e+00> : vector<2x32xf32>
    %219 = vector.multi_reduction <add>, %218, %cst_96 [1] : vector<2x16x32xf32> to vector<2x32xf32>
    %220 = arith.mulf %218, %218 : vector<2x16x32xf32>
    %cst_97 = arith.constant dense<0.000000e+00> : vector<2x32xf32>
    %221 = vector.multi_reduction <add>, %220, %cst_97 [1] : vector<2x16x32xf32> to vector<2x32xf32>
    %cst_98 = arith.constant dense<0.000000e+00> : vector<2x32xf32>
    %222 = tpu.matmul %219, %21, %cst_98 {dimension_numbers = #tpu.dot_dimension_numbers<[1], [0], [0], [1], [0, 0, 1, 1], [], []>} : vector<2x32xf32>, vector<32x32xf32>, vector<2x32xf32> -> vector<2x32xf32>
    %cst_99 = arith.constant dense<0.000000e+00> : vector<2x32xf32>
    %223 = tpu.matmul %221, %21, %cst_99 {dimension_numbers = #tpu.dot_dimension_numbers<[1], [0], [0], [1], [0, 0, 1, 1], [], []>} : vector<2x32xf32>, vector<32x32xf32>, vector<2x32xf32> -> vector<2x32xf32>
    %224 = arith.mulf %222, %222 : vector<2x32xf32>
    %225 = arith.subf %223, %224 : vector<2x32xf32>
    %cst_100 = arith.constant 0.000000e+00 : f32
    %226 = vector.broadcast %cst_100 : f32 to vector<2x32xf32>
    %227 = arith.maximumf %225, %226 : vector<2x32xf32>
    %cst_101 = arith.constant 9.99999974E-6 : f32
    %228 = vector.broadcast %cst_101 : f32 to vector<2x32xf32>
    %229 = arith.addf %227, %228 : vector<2x32xf32>
    %230 = math.rsqrt %229 : vector<2x32xf32>
    %231 = vector.broadcast %215 : vector<1x32xf32> to vector<2x32xf32>
    %232 = arith.mulf %230, %231 : vector<2x32xf32>
    %233 = arith.mulf %222, %232 : vector<2x32xf32>
    %234 = vector.broadcast %217 : vector<1x32xf32> to vector<2x32xf32>
    %235 = arith.subf %234, %233 : vector<2x32xf32>
    %236 = vector.shape_cast %232 : vector<2x32xf32> to vector<2x1x32xf32>
    %237 = vector.broadcast %236 : vector<2x1x32xf32> to vector<2x16x32xf32>
    %238 = arith.mulf %218, %237 : vector<2x16x32xf32>
    %239 = vector.shape_cast %235 : vector<2x32xf32> to vector<2x1x32xf32>
    %240 = vector.broadcast %239 : vector<2x1x32xf32> to vector<2x16x32xf32>
    %241 = arith.addf %238, %240 : vector<2x16x32xf32>
    %242 = vector.shape_cast %241 : vector<2x16x32xf32> to vector<32x32xf32>
    %cst_102 = arith.constant 0.000000e+00 : f32
    %243 = vector.broadcast %cst_102 : f32 to vector<32x32xf32>
    %244 = arith.maximumf %242, %243 : vector<32x32xf32>
    %c3_103 = arith.constant 3 : index
    %c0_104 = arith.constant 0 : index
    %c0_105 = arith.constant 0 : index
    %c0_106 = arith.constant 0 : index
    %245 = vector.load %arg5[%c3_103, %c0_104, %c0_105, %c0_106] : memref<4x3x32x32xf32, #tpu.memory_space<vmem>>, vector<1x3x32x32xf32>
    %246 = vector.shape_cast %245 : vector<1x3x32x32xf32> to vector<3x32x32xf32>
    %c3_107 = arith.constant 3 : index
    %c0_108 = arith.constant 0 : index
    %c0_109 = arith.constant 0 : index
    %247 = vector.load %arg6[%c3_107, %c0_108, %c0_109] : memref<4x1x32xf32, #tpu.memory_space<vmem>>, vector<1x1x32xf32>
    %248 = vector.shape_cast %247 : vector<1x1x32xf32> to vector<1x32xf32>
    %c1_i32_110 = arith.constant 1 : i32
    %249 = tpu.dynamic_rotate %244 by %c1_i32_110 dim 0 : vector<32x32xf32>, i32 -> vector<32x32xf32>
    %cst_111 = arith.constant 0.000000e+00 : f32
    %250 = vector.shape_cast %18 : vector<32x1xi1> to vector<32x1xi1>
    %251 = vector.broadcast %250 : vector<32x1xi1> to vector<32x32xi1>
    %252 = vector.broadcast %cst_111 : f32 to vector<32x32xf32>
    %253 = arith.select %251, %249, %252 : vector<32x32xi1>, vector<32x32xf32>
    %c31_i32_112 = arith.constant 31 : i32
    %254 = tpu.dynamic_rotate %244 by %c31_i32_112 dim 0 : vector<32x32xf32>, i32 -> vector<32x32xf32>
    %cst_113 = arith.constant 0.000000e+00 : f32
    %255 = vector.shape_cast %20 : vector<32x1xi1> to vector<32x1xi1>
    %256 = vector.broadcast %255 : vector<32x1xi1> to vector<32x32xi1>
    %257 = vector.broadcast %cst_113 : f32 to vector<32x32xf32>
    %258 = arith.select %256, %254, %257 : vector<32x32xi1>, vector<32x32xf32>
    %259 = vector.extract_strided_slice %246 {offsets = [0, 0, 0], sizes = [1, 32, 32], strides = [1, 1, 1]} : vector<3x32x32xf32> to vector<1x32x32xf32>
    %260 = vector.shape_cast %259 : vector<1x32x32xf32> to vector<32x32xf32>
    %cst_114 = arith.constant dense<0.000000e+00> : vector<32x32xf32>
    %261 = tpu.matmul %253, %260, %cst_114 {dimension_numbers = #tpu.dot_dimension_numbers<[1], [0], [0], [1], [0, 0, 1, 1], [], []>} : vector<32x32xf32>, vector<32x32xf32>, vector<32x32xf32> -> vector<32x32xf32>
    %262 = vector.extract_strided_slice %246 {offsets = [1, 0, 0], sizes = [1, 32, 32], strides = [1, 1, 1]} : vector<3x32x32xf32> to vector<1x32x32xf32>
    %263 = vector.shape_cast %262 : vector<1x32x32xf32> to vector<32x32xf32>
    %cst_115 = arith.constant dense<0.000000e+00> : vector<32x32xf32>
    %264 = tpu.matmul %244, %263, %cst_115 {dimension_numbers = #tpu.dot_dimension_numbers<[1], [0], [0], [1], [0, 0, 1, 1], [], []>} : vector<32x32xf32>, vector<32x32xf32>, vector<32x32xf32> -> vector<32x32xf32>
    %265 = arith.addf %261, %264 : vector<32x32xf32>
    %266 = vector.extract_strided_slice %246 {offsets = [2, 0, 0], sizes = [1, 32, 32], strides = [1, 1, 1]} : vector<3x32x32xf32> to vector<1x32x32xf32>
    %267 = vector.shape_cast %266 : vector<1x32x32xf32> to vector<32x32xf32>
    %cst_116 = arith.constant dense<0.000000e+00> : vector<32x32xf32>
    %268 = tpu.matmul %258, %267, %cst_116 {dimension_numbers = #tpu.dot_dimension_numbers<[1], [0], [0], [1], [0, 0, 1, 1], [], []>} : vector<32x32xf32>, vector<32x32xf32>, vector<32x32xf32> -> vector<32x32xf32>
    %269 = arith.addf %265, %268 : vector<32x32xf32>
    %270 = vector.broadcast %248 : vector<1x32xf32> to vector<32x32xf32>
    %271 = arith.addf %269, %270 : vector<32x32xf32>
    %272 = arith.addf %271, %150 : vector<32x32xf32>
    %c0_117 = arith.constant 0 : index
    %c0_118 = arith.constant 0 : index
    %273 = vector.load %arg9[%c0_117, %c0_118] : memref<32x128xf32, #tpu.memory_space<vmem>>, vector<32x128xf32>
    %cst_119 = arith.constant dense<0.000000e+00> : vector<32x128xf32>
    %274 = tpu.matmul %272, %273, %cst_119 {dimension_numbers = #tpu.dot_dimension_numbers<[1], [0], [0], [1], [0, 0, 1, 1], [], []>} : vector<32x32xf32>, vector<32x128xf32>, vector<32x128xf32> -> vector<32x128xf32>
    %c0_120 = arith.constant 0 : index
    %c0_121 = arith.constant 0 : index
    %275 = vector.load %arg10[%c0_120, %c0_121] : memref<1x128xf32, #tpu.memory_space<vmem>>, vector<1x128xf32>
    %276 = vector.broadcast %275 : vector<1x128xf32> to vector<32x128xf32>
    %277 = arith.addf %274, %276 : vector<32x128xf32>
    %c0_122 = arith.constant 0 : index
    %c0_123 = arith.constant 0 : index
    %278 = vector.load %arg12[%c0_122, %c0_123] : memref<32x128xf32, #tpu.memory_space<vmem>>, vector<32x128xf32>
    tpu.vector_store %arg12[%c0_122, %c0_123], %277 {strides = array<i32>} : memref<32x128xf32, #tpu.memory_space<vmem>>, vector<32x128xf32>,
    return
  }
  func.func @transform_0(%arg0: i32) -> (i32, i32) {
    %c0_i32 = arith.constant 0 : i32
    %c0_i32_0 = arith.constant 0 : i32
    return %arg0, %c0_i32 : i32, i32
  }
  func.func @transform_1(%arg0: i32) -> (i32, i32) {
    %c0_i32 = arith.constant 0 : i32
    %c0_i32_0 = arith.constant 0 : i32
    return %arg0, %c0_i32 : i32, i32
  }
  func.func @transform_2(%arg0: i32) -> (i32, i32) {
    %c0_i32 = arith.constant 0 : i32
    %c0_i32_0 = arith.constant 0 : i32
    %c0_i32_1 = arith.constant 0 : i32
    return %c0_i32, %c0_i32_0 : i32, i32
  }
  func.func @transform_3(%arg0: i32) -> (i32, i32) {
    %c0_i32 = arith.constant 0 : i32
    %c0_i32_0 = arith.constant 0 : i32
    %c0_i32_1 = arith.constant 0 : i32
    return %c0_i32, %c0_i32_0 : i32, i32
  }
  func.func @transform_4(%arg0: i32) -> (i32, i32, i32, i32) {
    %c0_i32 = arith.constant 0 : i32
    %c0_i32_0 = arith.constant 0 : i32
    %c0_i32_1 = arith.constant 0 : i32
    %c0_i32_2 = arith.constant 0 : i32
    %c0_i32_3 = arith.constant 0 : i32
    return %c0_i32, %c0_i32_0, %c0_i32_1, %c0_i32_2 : i32, i32, i32, i32
  }
  func.func @transform_5(%arg0: i32) -> (i32, i32, i32) {
    %c0_i32 = arith.constant 0 : i32
    %c0_i32_0 = arith.constant 0 : i32
    %c0_i32_1 = arith.constant 0 : i32
    %c0_i32_2 = arith.constant 0 : i32
    return %c0_i32, %c0_i32_0, %c0_i32_1 : i32, i32, i32
  }
  func.func @transform_6(%arg0: i32) -> (i32, i32, i32) {
    %c0_i32 = arith.constant 0 : i32
    %c0_i32_0 = arith.constant 0 : i32
    %c0_i32_1 = arith.constant 0 : i32
    %c0_i32_2 = arith.constant 0 : i32
    return %c0_i32, %c0_i32_0, %c0_i32_1 : i32, i32, i32
  }
  func.func @transform_7(%arg0: i32) -> (i32, i32, i32) {
    %c0_i32 = arith.constant 0 : i32
    %c0_i32_0 = arith.constant 0 : i32
    %c0_i32_1 = arith.constant 0 : i32
    %c0_i32_2 = arith.constant 0 : i32
    return %c0_i32, %c0_i32_0, %c0_i32_1 : i32, i32, i32
  }
  func.func @transform_8(%arg0: i32) -> (i32, i32) {
    %c0_i32 = arith.constant 0 : i32
    %c0_i32_0 = arith.constant 0 : i32
    %c0_i32_1 = arith.constant 0 : i32
    return %c0_i32, %c0_i32_0 : i32, i32
  }
  func.func @transform_9(%arg0: i32) -> (i32, i32) {
    %c0_i32 = arith.constant 0 : i32
    %c0_i32_0 = arith.constant 0 : i32
    %c0_i32_1 = arith.constant 0 : i32
    return %c0_i32, %c0_i32_0 : i32, i32
  }
  func.func @transform_10(%arg0: i32) -> (i32, i32) {
    %c0_i32 = arith.constant 0 : i32
    %c0_i32_0 = arith.constant 0 : i32
    %c0_i32_1 = arith.constant 0 : i32
    return %c0_i32, %c0_i32_0 : i32, i32
  }
  func.func @transform_11(%arg0: i32) -> (i32, i32) {
    %c0_i32 = arith.constant 0 : i32
    %c0_i32_0 = arith.constant 0 : i32
    return %arg0, %c0_i32 : i32, i32
  }
}

</mosaic_0001>

<llo_original>
// kernel: tpu_custom_call.1
$region0: #{tpu_custom_call.1}
  #allocation0 [shape = 'u32[]', space=smem, size = 0x4, offset = 0x4, fixed_abs, tag = 'smem constant byte address 0x4 - core index']
  #allocation1 [shape = 'u32[72,128]{1,0:T(1,128)}', space=vmem, size = 0x9000, scoped, tag = 'internal scratch']
  %s0 = inlined_call_operand.vmem [shape: f32[2,32], index: 0, kind: input, shape index: {}]
  %s1 = inlined_call_operand.vmem [shape: f32[32,128], index: 1, kind: input, shape index: {}]
  %s2 = inlined_call_operand.vmem [shape: f32[128,32], index: 2, kind: input, shape index: {}]
  %s3 = inlined_call_operand.vmem [shape: f32[1,32], index: 3, kind: input, shape index: {}]
  %s4 = inlined_call_operand.hbm [shape: f32[4,3,32,32], index: 4, kind: input, shape index: {}]
  %s5 = inlined_call_operand.vmem [shape: f32[4,1,32], index: 5, kind: input, shape index: {}]
  %s6 = inlined_call_operand.vmem [shape: f32[4,1,32], index: 6, kind: input, shape index: {}]
  %s7 = inlined_call_operand.vmem [shape: f32[4,1,32], index: 7, kind: input, shape index: {}]
  %s8 = inlined_call_operand.vmem [shape: f32[32,128], index: 8, kind: input, shape index: {}]
  %s9 = inlined_call_operand.vmem [shape: f32[1,128], index: 9, kind: input, shape index: {}]
  %s10 = inlined_call_operand.vmem [shape: f32[32,32], index: 10, kind: input, shape index: {}]
  %s11 = inlined_call_operand.hbm [shape: f32[32,128], index: 11, kind: output, shape index: {}]
  %s12 = sld [smem:[#allocation0]]
  $region58: #{tpu_custom_call.1} parent=0
    _
  %s14 = ssub.s32 1, %s12
  %s15 = scalar_select 0, %s14, %s12
  $region1: #{tpu_custom_call.1} parent=0
    #allocation2 [shape = 'u8[196608]{0}', space=vmem, size = 0x30000, scoped, tag = 'input window, operand 4, single buffered']
    #allocation3 [shape = 's32[1]{0}', space=sflag, size = 0x4, scoped, tag = 'scoped memory for tpu_custom_call.1']
    #allocation4 [shape = 's32[1]{0}', space=sflag, size = 0x4, scoped, tag = 'scoped memory for tpu_custom_call.1']
    #allocation5 [shape = 'u8[16384]{0}', space=vmem, size = 0x4000, scoped, tag = 'output window, operand 0, single buffered']
    %16 = vsyncpa [#allocation3], 0
    %17 = vsyncpa [#allocation4], 0
    // Predicated region
    $region2: #{tpu_custom_call.1} parent=1 // pred_check
      _
    $region3: #{tpu_custom_call.1} parent=1 // pred_check_branch
      %19 = sbr.rel (0) target = $region5
    $region4: #{tpu_custom_call.1} parent=1 // pred_region
      _
    $region5: #{tpu_custom_call.1} parent=1 // pred_fallthru
      _
    // Predicated region
    $region6: #{tpu_custom_call.1} parent=1 // pred_check
      _
    $region7: #{tpu_custom_call.1} parent=1 // pred_check_branch
      %21 = sbr.rel (0) target = $region9
    $region8: #{tpu_custom_call.1} parent=1 // pred_region
      _
    $region9: #{tpu_custom_call.1} parent=1 // pred_fallthru
      _
    // Predicated region
    $region10: #{tpu_custom_call.1} parent=1 // pred_check
      _
    $region11: #{tpu_custom_call.1} parent=1 // pred_check_branch
      %23 = sbr.rel (0) target = $region13
    $region12: #{tpu_custom_call.1} parent=1 // pred_region
      _
    $region13: #{tpu_custom_call.1} parent=1 // pred_fallthru
      _
    // Predicated region
    $region14: #{tpu_custom_call.1} parent=1 // pred_check
      _
    $region15: #{tpu_custom_call.1} parent=1 // pred_check_branch
      %25 = sbr.rel (0) target = $region17
    $region16: #{tpu_custom_call.1} parent=1 // pred_region
      _
    $region17: #{tpu_custom_call.1} parent=1 // pred_fallthru
      _
    // Predicated region
    $region18: #{tpu_custom_call.1} parent=1 // pred_check
      _
    $region19: #{tpu_custom_call.1} parent=1 // pred_check_branch
      %27 = sbr.rel (0) target = $region21
    $region20: #{tpu_custom_call.1} parent=1 // pred_region
      %29 = vsyncadd [#allocation3], 0
      %s30 = sshll.u32 %s4, 4
      %s31 = int_to_ptr.hbm [resolvable:$true] %s30
      %s32 = sshll.u32 [#allocation2], 4
      %s33 = int_to_ptr.vmem [resolvable:$true] %s32
      %38 = dma.hbm_to_vmem [thread:$0]  %s31, 6144, %s33, [#allocation3], 128, 128, 8
    $region21: #{tpu_custom_call.1} parent=1 // pred_fallthru
      _
    // Predicated region
    $region22: #{tpu_custom_call.1} parent=1 // pred_check
      _
    $region23: #{tpu_custom_call.1} parent=1 // pred_check_branch
      %40 = sbr.rel (0) target = $region25
    $region24: #{tpu_custom_call.1} parent=1 // pred_region
      _
    $region25: #{tpu_custom_call.1} parent=1 // pred_fallthru
      _
    // Predicated region
    $region26: #{tpu_custom_call.1} parent=1 // pred_check
      _
    $region27: #{tpu_custom_call.1} parent=1 // pred_check_branch
      %42 = sbr.rel (0) target = $region29
    $region28: #{tpu_custom_call.1} parent=1 // pred_region
      _
    $region29: #{tpu_custom_call.1} parent=1 // pred_fallthru
      _
    // Predicated region
    $region30: #{tpu_custom_call.1} parent=1 // pred_check
      _
    $region31: #{tpu_custom_call.1} parent=1 // pred_check_branch
      %44 = sbr.rel (0) target = $region33
    $region32: #{tpu_custom_call.1} parent=1 // pred_region
      _
    $region33: #{tpu_custom_call.1} parent=1 // pred_fallthru
      _
    // Predicated region
    $region34: #{tpu_custom_call.1} parent=1 // pred_check
      _
    $region35: #{tpu_custom_call.1} parent=1 // pred_check_branch
      %46 = sbr.rel (0) target = $region37
    $region36: #{tpu_custom_call.1} parent=1 // pred_region
      _
    $region37: #{tpu_custom_call.1} parent=1 // pred_fallthru
      _
    // Predicated region
    $region38: #{tpu_custom_call.1} parent=1 // pred_check
      _
    $region39: #{tpu_custom_call.1} parent=1 // pred_check_branch
      %48 = sbr.rel (0) target = $region41
    $region40: #{tpu_custom_call.1} parent=1 // pred_region
      _
    $region41: #{tpu_custom_call.1} parent=1 // pred_fallthru
      _
    // Predicated region
    $region42: #{tpu_custom_call.1} parent=1 // pred_check
      _
    $region43: #{tpu_custom_call.1} parent=1 // pred_check_branch
      %50 = sbr.rel (0) target = $region45
    $region44: #{tpu_custom_call.1} parent=1 // pred_region
      _
    $region45: #{tpu_custom_call.1} parent=1 // pred_fallthru
      _
    // Predicated region
    $region46: #{tpu_custom_call.1} parent=1 // pred_check
      _
    $region47: #{tpu_custom_call.1} parent=1 // pred_check_branch
      %52 = sbr.rel (0) target = $region49
    $region48: #{tpu_custom_call.1} parent=1 // pred_region
      %54 = dma.done [#allocation3], 6144
    $region49: #{tpu_custom_call.1} parent=1 // pred_fallthru
      _
    %v55 = vlaneseq
    %v56 = vshrl.u32 %v55, 7
    %v57 = vadd.s32 %v56, 8
    %v58 = vadd.s32 %v56, 16
    %v59 = vadd.s32 %v56, 24
    %vm60 = vcmp.lt.s32.totalorder %v56, 0
    %v61 = vsub.s32 0, %v56
    %v62 = vsel %vm60, %v61, %v56
    %v63 = vshrl.u32 %v62, 4
    %v64 = vand.u32 %v62, 15
    %v65 = vsub.s32 0, %v64
    %v66 = vsel %vm60, %v65, %v64
    %vm67 = vcmp.lt.s32.totalorder %v57, 0
    %v68 = vsub.s32 0, %v57
    %v69 = vsel %vm67, %v68, %v57
    %v70 = vshrl.u32 %v69, 4
    %v71 = vand.u32 %v69, 15
    %v72 = vsub.s32 0, %v71
    %v73 = vsel %vm67, %v72, %v71
    %vm74 = vcmp.lt.s32.totalorder %v58, 0
    %v75 = vsub.s32 0, %v58
    %v76 = vsel %vm74, %v75, %v58
    %v77 = vshrl.u32 %v76, 4
    %v78 = vand.u32 %v76, 15
    %v79 = vsub.s32 0, %v78
    %v80 = vsel %vm74, %v79, %v78
    %vm81 = vcmp.lt.s32.totalorder %v59, 0
    %v82 = vsub.s32 0, %v59
    %v83 = vsel %vm81, %v82, %v59
    %v84 = vshrl.u32 %v83, 4
    %v85 = vand.u32 %v83, 15
    %v86 = vsub.s32 0, %v85
    %v87 = vsel %vm81, %v86, %v85
    %vm88 = vcmp.ne.s32.totalorder %v66, 0
    %vm89 = vcmp.ne.s32.totalorder %v73, 0
    %vm90 = vcmp.ne.s32.totalorder %v80, 0
    %vm91 = vcmp.ne.s32.totalorder %v87, 0
    %vm92 = vcmp.lt.s32.totalorder %v66, 0
    %vm93 = vcmp.lt.s32.totalorder %v73, 0
    %vm94 = vcmp.lt.s32.totalorder %v80, 0
    %vm95 = vcmp.lt.s32.totalorder %v87, 0
    %vm96 = vmand %vm92, %vm88
    %vm97 = vmand %vm93, %vm89
    %vm98 = vmand %vm94, %vm90
    %vm99 = vmand %vm95, %vm91
    %v100 = vadd.s32 %v66, 16
    %v101 = vadd.s32 %v73, 16
    %v102 = vadd.s32 %v80, 16
    %v103 = vadd.s32 %v87, 16
    %v104 = vsel %vm96, %v100, %v66
    %v105 = vsel %vm97, %v101, %v73
    %v106 = vsel %vm98, %v102, %v80
    %v107 = vsel %vm99, %v103, %v87
    %vm108 = vcmp.ge.s32.totalorder %v104, 1
    %vm109 = vcmp.ge.s32.totalorder %v105, 1
    %vm110 = vcmp.ge.s32.totalorder %v106, 1
    %vm111 = vcmp.ge.s32.totalorder %v107, 1
    %vm112 = vcmp.le.s32.totalorder %v104, 14
    %vm113 = vcmp.le.s32.totalorder %v105, 14
    %vm114 = vcmp.le.s32.totalorder %v106, 14
    %vm115 = vcmp.le.s32.totalorder %v107, 14
    %v116 = vld [vmem:[%s10] sm:$0xff]
    %v117 = vld [vmem:[%s10 + $0x8] sm:$0xff]
    %v118 = vld [vmem:[%s10 + $0x10] sm:$0xff]
    %v119 = vld [vmem:[%s10 + $0x18] sm:$0xff]
    %v120 = vld [vmem:[%s0] sm:$0x3]
    %v121 = vld [vmem:[%s1] sm:$0xff]
    %v122 = vld [vmem:[%s1 + $0x8] sm:$0xff]
    %v123 = vld [vmem:[%s1 + $0x10] sm:$0xff]
    %v124 = vld [vmem:[%s1 + $0x18] sm:$0xff]
    %v125 = vld [vmem:[%s2] sm:$0xff]
    %v126 = vld [vmem:[%s2 + $0x8] sm:$0xff]
    %v127 = vld [vmem:[%s2 + $0x10] sm:$0xff]
    %v128 = vld [vmem:[%s2 + $0x18] sm:$0xff]
    %v129 = vld [vmem:[%s2 + $0x20] sm:$0xff]
    %v130 = vld [vmem:[%s2 + $0x28] sm:$0xff]
    %v131 = vld [vmem:[%s2 + $0x30] sm:$0xff]
    %v132 = vld [vmem:[%s2 + $0x38] sm:$0xff]
    %v133 = vld [vmem:[%s2 + $0x40] sm:$0xff]
    %v134 = vld [vmem:[%s2 + $0x48] sm:$0xff]
    %v135 = vld [vmem:[%s2 + $0x50] sm:$0xff]
    %v136 = vld [vmem:[%s2 + $0x58] sm:$0xff]
    %v137 = vld [vmem:[%s2 + $0x60] sm:$0xff]
    %v138 = vld [vmem:[%s2 + $0x68] sm:$0xff]
    %v139 = vld [vmem:[%s2 + $0x70] sm:$0xff]
    %v140 = vld [vmem:[%s2 + $0x78] sm:$0xff]
    %v141 = vld [vmem:[%s3] sm:$0x1]
    %v143 = vperm.slane %v141, 0
    %145 = vmatpush.msra.mxu0 %v140
    %146 = vmatpush.msra.mxu0 %v139
    %147 = vmatpush.msra.mxu0 %v138
    %148 = vmatpush.msra.mxu0 %v137
    %149 = vmatpush.msra.mxu0 %v136
    %150 = vmatpush.msra.mxu0 %v135
    %151 = vmatpush.msra.mxu0 %v134
    %152 = vmatpush.msra.mxu0 %v133
    %153 = vmatpush.msra.mxu0 %v132
    %154 = vmatpush.msra.mxu0 %v131
    %155 = vmatpush.msra.mxu0 %v130
    %156 = vmatpush.msra.mxu0 %v129
    %157 = vmatpush.msra.mxu0 %v128
    %158 = vmatpush.msra.mxu0 %v127
    %159 = vmatpush.msra.mxu0 %v126
    %160 = vmatpush.msra.mxu0 %v125
    %161 = vmatmul.f32.gmra.mxu0 %v121
    %v162 = vpop.f32.mrf.mxu0
    %v163 = vadd.f32 %v143, %v162
    %164 = vmatmul.f32.gmra.mxu0 %v122
    %v165 = vpop.f32.mrf.mxu0
    %v166 = vadd.f32 %v143, %v165
    %167 = vmatmul.f32.gmra.mxu0 %v123
    %v168 = vpop.f32.mrf.mxu0
    %v169 = vadd.f32 %v143, %v168
    %170 = vmatmul.f32.gmra.mxu0 %v124
    %v171 = vpop.f32.mrf.mxu0
    %v172 = vadd.f32 %v143, %v171
    %173 = vdwg.mxu0
    %v174 = vld [vmem:[%s6] sm:$0x1]
    %v175 = vld [vmem:[%s7] sm:$0x1]
    %vm176 = vcmask 261120
    %v177 = vsel %vm176, %v163, 0.0
    %v178 = vsel %vm176, %v166, 0.0
    %v179 = vadd.f32 %v177, %v178
    %v180 = vrot.slane %v179, 4
    %v181 = vadd.f32 %v179, %v180
    %v182 = vrot.slane %v181, 2
    %v183 = vadd.f32 %v181, %v182
    %v184 = vrot.slane %v183, 1
    %v185 = vadd.f32 %v183, %v184
    %v186 = vsel %vm176, %v169, 0.0
    %v187 = vsel %vm176, %v172, 0.0
    %v188 = vadd.f32 %v186, %v187
    %v189 = vrot.slane %v188, 4
    %v190 = vadd.f32 %v188, %v189
    %v191 = vrot.slane %v190, 2
    %v192 = vadd.f32 %v190, %v191
    %v193 = vrot.slane %v192, 1
    %v194 = vadd.f32 %v192, %v193
    %v195 = vmul.f32 %v163, %v163
    %v196 = vmul.f32 %v166, %v166
    %v197 = vmul.f32 %v169, %v169
    %v198 = vmul.f32 %v172, %v172
    %v199 = vsel %vm176, %v195, 0.0
    %v200 = vsel %vm176, %v196, 0.0
    %v201 = vadd.f32 %v199, %v200
    %v202 = vrot.slane %v201, 4
    %v203 = vadd.f32 %v201, %v202
    %v204 = vrot.slane %v203, 2
    %v205 = vadd.f32 %v203, %v204
    %v206 = vrot.slane %v205, 1
    %v207 = vadd.f32 %v205, %v206
    %v208 = vsel %vm176, %v197, 0.0
    %v209 = vsel %vm176, %v198, 0.0
    %v210 = vadd.f32 %v208, %v209
    %v211 = vrot.slane %v210, 4
    %v212 = vadd.f32 %v210, %v211
    %v213 = vrot.slane %v212, 2
    %v214 = vadd.f32 %v212, %v213
    %v215 = vrot.slane %v214, 1
    %v216 = vadd.f32 %v214, %v215
    %vm219 = vcmask 1041409
    %v220 = vsel %vm219, %v194, %v185
    %v221 = vsel %vm176, %v220, 0
    %223 = vmatpush.msra.mxu0 0.0
    %224 = vmatpush.msra.mxu0 0.0
    %225 = vmatpush.msra.mxu0 0.0
    %226 = vmatpush.msra.mxu0 0.0
    %227 = vmatpush.msra.mxu0 0.0
    %228 = vmatpush.msra.mxu0 0.0
    %229 = vmatpush.msra.mxu0 0.0
    %230 = vmatpush.msra.mxu0 0.0
    %231 = vmatpush.msra.mxu0 0.0
    %232 = vmatpush.msra.mxu0 0.0
    %233 = vmatpush.msra.mxu0 0.0
    %234 = vmatpush.msra.mxu0 0.0
    %235 = vmatpush.msra.mxu0 %v119
    %236 = vmatpush.msra.mxu0 %v118
    %237 = vmatpush.msra.mxu0 %v117
    %238 = vmatpush.msra.mxu0 %v116
    %239 = vmatmul.f32.gmra.mxu0 %v221
    %v240 = vpop.f32.mrf.mxu0
    %v241 = vadd.f32 0.0, %v240
    %242 = vdwg.mxu0
    %v245 = vsel %vm219, %v216, %v207
    %v246 = vsel %vm176, %v245, 0
    %248 = vmatpush.msra.mxu0 0.0
    %249 = vmatpush.msra.mxu0 0.0
    %250 = vmatpush.msra.mxu0 0.0
    %251 = vmatpush.msra.mxu0 0.0
    %252 = vmatpush.msra.mxu0 0.0
    %253 = vmatpush.msra.mxu0 0.0
    %254 = vmatpush.msra.mxu0 0.0
    %255 = vmatpush.msra.mxu0 0.0
    %256 = vmatpush.msra.mxu0 0.0
    %257 = vmatpush.msra.mxu0 0.0
    %258 = vmatpush.msra.mxu0 0.0
    %259 = vmatpush.msra.mxu0 0.0
    %260 = vmatpush.msra.mxu0 %v119
    %261 = vmatpush.msra.mxu0 %v118
    %262 = vmatpush.msra.mxu0 %v117
    %263 = vmatpush.msra.mxu0 %v116
    %264 = vmatmul.f32.gmra.mxu0 %v246
    %v265 = vpop.f32.mrf.mxu0
    %v266 = vadd.f32 0.0, %v265
    %267 = vdwg.mxu0
    %v268 = vmul.f32 %v241, %v241
    %v269 = vsub.f32 %v266, %v268
    %v270 = vmax.f32 %v269, 0.0
    %v271 = vadd.f32 %v270, 1e-05
    %v272 = vrsqrt.pop %v271
    %v273 = vmul.f32 %v272, %v271
    %v274 = vmul.f32 %v273, %v272
    %v275 = vmul.f32 0.5, %v274
    %v276 = vsub.f32 1.5, %v275
    %v277 = vmul.f32 %v272, %v276
    %vm278 = vweird.f32 %v271
    %vm279 = vweird.f32 %v272
    %vm280 = vmor %vm278, %vm279
    %v281 = vsel %vm280, %v272, %v277
    %v283 = vperm.slane %v174, 0
    %v285 = vmul.f32 %v281, %v283
    %v286 = vmul.f32 %v241, %v285
    %v288 = vperm.slane %v175, 0
    %v290 = vsub.f32 %v288, %v286
    %v292 = vrot.slane %v285, 1
    %v293 = vperm.slane %v285, 0
    %v294 = vperm.slane %v292, 0
    %v297 = vmul.f32 %v163, %v293
    %v298 = vmul.f32 %v166, %v293
    %v299 = vmul.f32 %v169, %v294
    %v300 = vmul.f32 %v172, %v294
    %v302 = vrot.slane %v290, 1
    %v303 = vperm.slane %v290, 0
    %v304 = vperm.slane %v302, 0
    %v307 = vadd.f32 %v297, %v303
    %v308 = vadd.f32 %v298, %v303
    %v309 = vadd.f32 %v299, %v304
    %v310 = vadd.f32 %v300, %v304
    %v311 = vmax.f32 %v307, 0.0
    %v312 = vmax.f32 %v308, 0.0
    %v313 = vmax.f32 %v309, 0.0
    %v314 = vmax.f32 %v310, 0.0
    %v315 = vld [vmem:[#allocation2] sm:$0xff]
    %v316 = vld [vmem:[#allocation2 + $0x8] sm:$0xff]
    %v317 = vld [vmem:[#allocation2 + $0x10] sm:$0xff]
    %v318 = vld [vmem:[#allocation2 + $0x18] sm:$0xff]
    %v319 = vld [vmem:[#allocation2 + $0x20] sm:$0xff]
    %v320 = vld [vmem:[#allocation2 + $0x28] sm:$0xff]
    %v321 = vld [vmem:[#allocation2 + $0x30] sm:$0xff]
    %v322 = vld [vmem:[#allocation2 + $0x38] sm:$0xff]
    %v323 = vld [vmem:[#allocation2 + $0x40] sm:$0xff]
    %v324 = vld [vmem:[#allocation2 + $0x48] sm:$0xff]
    %v325 = vld [vmem:[#allocation2 + $0x50] sm:$0xff]
    %v326 = vld [vmem:[#allocation2 + $0x58] sm:$0xff]
    %v327 = vld [vmem:[%s5] sm:$0x1]
    %v328 = vrot.slane %v311, 7
    %v329 = vrot.slane %v312, 7
    %v330 = vrot.slane %v313, 7
    %v331 = vrot.slane %v314, 7
    %vm332 = vcmp.lt.s32.totalorder %v56, 1
    %v333 = vsel %vm332, %v330, %v331
    %v334 = vsel %vm332, %v329, %v330
    %v335 = vsel %vm332, %v328, %v329
    %v336 = vsel %vm332, %v331, %v328
    %v337 = vsel %vm108, 1, 0
    %v338 = vsel %vm109, 1, 0
    %v339 = vsel %vm110, 1, 0
    %v340 = vsel %vm111, 1, 0
    %vm341 = vcmp.eq.s32.totalorder %v337, 1
    %vm342 = vcmp.eq.s32.totalorder %v338, 1
    %vm343 = vcmp.eq.s32.totalorder %v339, 1
    %vm344 = vcmp.eq.s32.totalorder %v340, 1
    %v345 = vsel %vm341, %v336, 0.0
    %v346 = vsel %vm342, %v335, 0.0
    %v347 = vsel %vm343, %v334, 0.0
    %v348 = vsel %vm344, %v333, 0.0
    %v349 = vrot.slane %v311, 1
    %v350 = vrot.slane %v312, 1
    %v351 = vrot.slane %v313, 1
    %v352 = vrot.slane %v314, 1
    %vm353 = vcmp.lt.s32.totalorder %v56, 7
    %v354 = vsel %vm353, %v351, %v352
    %v355 = vsel %vm353, %v350, %v351
    %v356 = vsel %vm353, %v349, %v350
    %v357 = vsel %vm353, %v352, %v349
    %v358 = vsel %vm112, 1, 0
    %v359 = vsel %vm113, 1, 0
    %v360 = vsel %vm114, 1, 0
    %v361 = vsel %vm115, 1, 0
    %vm362 = vcmp.eq.s32.totalorder %v358, 1
    %vm363 = vcmp.eq.s32.totalorder %v359, 1
    %vm364 = vcmp.eq.s32.totalorder %v360, 1
    %vm365 = vcmp.eq.s32.totalorder %v361, 1
    %v366 = vsel %vm362, %v356, 0.0
    %v367 = vsel %vm363, %v355, 0.0
    %v368 = vsel %vm364, %v354, 0.0
    %v369 = vsel %vm365, %v357, 0.0
    %v371 = vsel %vm176, %v311, 0
    %v374 = vsel %vm176, %v312, 0
    %v377 = vsel %vm176, %v313, 0
    %v380 = vsel %vm176, %v314, 0
    %382 = vmatpush.msra.mxu0 0.0
    %383 = vmatpush.msra.mxu0 0.0
    %384 = vmatpush.msra.mxu0 0.0
    %385 = vmatpush.msra.mxu0 0.0
    %386 = vmatpush.msra.mxu0 0.0
    %387 = vmatpush.msra.mxu0 0.0
    %388 = vmatpush.msra.mxu0 0.0
    %389 = vmatpush.msra.mxu0 0.0
    %390 = vmatpush.msra.mxu0 0.0
    %391 = vmatpush.msra.mxu0 0.0
    %392 = vmatpush.msra.mxu0 0.0
    %393 = vmatpush.msra.mxu0 0.0
    %394 = vmatpush.msra.mxu0 %v322
    %395 = vmatpush.msra.mxu0 %v321
    %396 = vmatpush.msra.mxu0 %v320
    %397 = vmatpush.msra.mxu0 %v319
    %398 = vmatmul.f32.gmra.mxu0 %v371
    %v399 = vpop.f32.mrf.mxu0
    %v400 = vadd.f32 0.0, %v399
    %401 = vmatmul.f32.gmra.mxu0 %v374
    %v402 = vpop.f32.mrf.mxu0
    %v403 = vadd.f32 0.0, %v402
    %404 = vmatmul.f32.gmra.mxu0 %v377
    %v405 = vpop.f32.mrf.mxu0
    %v406 = vadd.f32 0.0, %v405
    %407 = vmatmul.f32.gmra.mxu0 %v380
    %v408 = vpop.f32.mrf.mxu0
    %v409 = vadd.f32 0.0, %v408
    %410 = vdwg.mxu0
    %v412 = vsel %vm176, %v345, 0
    %v415 = vsel %vm176, %v346, 0
    %v418 = vsel %vm176, %v347, 0
    %v421 = vsel %vm176, %v348, 0
    %423 = vmatpush.msra.mxu0 0.0
    %424 = vmatpush.msra.mxu0 0.0
    %425 = vmatpush.msra.mxu0 0.0
    %426 = vmatpush.msra.mxu0 0.0
    %427 = vmatpush.msra.mxu0 0.0
    %428 = vmatpush.msra.mxu0 0.0
    %429 = vmatpush.msra.mxu0 0.0
    %430 = vmatpush.msra.mxu0 0.0
    %431 = vmatpush.msra.mxu0 0.0
    %432 = vmatpush.msra.mxu0 0.0
    %433 = vmatpush.msra.mxu0 0.0
    %434 = vmatpush.msra.mxu0 0.0
    %435 = vmatpush.msra.mxu0 %v318
    %436 = vmatpush.msra.mxu0 %v317
    %437 = vmatpush.msra.mxu0 %v316
    %438 = vmatpush.msra.mxu0 %v315
    %439 = vmatmul.f32.gmra.mxu0 %v412
    %v440 = vpop.f32.mrf.mxu0
    %v441 = vadd.f32 %v400, %v440
    %442 = vmatmul.f32.gmra.mxu0 %v415
    %v443 = vpop.f32.mrf.mxu0
    %v444 = vadd.f32 %v403, %v443
    %445 = vmatmul.f32.gmra.mxu0 %v418
    %v446 = vpop.f32.mrf.mxu0
    %v447 = vadd.f32 %v406, %v446
    %448 = vmatmul.f32.gmra.mxu0 %v421
    %v449 = vpop.f32.mrf.mxu0
    %v450 = vadd.f32 %v409, %v449
    %451 = vdwg.mxu0
    %v453 = vsel %vm176, %v366, 0
    %v456 = vsel %vm176, %v367, 0
    %v459 = vsel %vm176, %v368, 0
    %v462 = vsel %vm176, %v369, 0
    %464 = vmatpush.msra.mxu0 0.0
    %465 = vmatpush.msra.mxu0 0.0
    %466 = vmatpush.msra.mxu0 0.0
    %467 = vmatpush.msra.mxu0 0.0
    %468 = vmatpush.msra.mxu0 0.0
    %469 = vmatpush.msra.mxu0 0.0
    %470 = vmatpush.msra.mxu0 0.0
    %471 = vmatpush.msra.mxu0 0.0
    %472 = vmatpush.msra.mxu0 0.0
    %473 = vmatpush.msra.mxu0 0.0
    %474 = vmatpush.msra.mxu0 0.0
    %475 = vmatpush.msra.mxu0 0.0
    %476 = vmatpush.msra.mxu0 %v326
    %477 = vmatpush.msra.mxu0 %v325
    %478 = vmatpush.msra.mxu0 %v324
    %479 = vmatpush.msra.mxu0 %v323
    %480 = vmatmul.f32.gmra.mxu0 %v453
    %v481 = vpop.f32.mrf.mxu0
    %v482 = vadd.f32 0.0, %v481
    %483 = vmatmul.f32.gmra.mxu0 %v456
    %v484 = vpop.f32.mrf.mxu0
    %v485 = vadd.f32 0.0, %v484
    %486 = vmatmul.f32.gmra.mxu0 %v459
    %v487 = vpop.f32.mrf.mxu0
    %v488 = vadd.f32 0.0, %v487
    %489 = vmatmul.f32.gmra.mxu0 %v462
    %v490 = vpop.f32.mrf.mxu0
    %v491 = vadd.f32 0.0, %v490
    %492 = vdwg.mxu0
    %v493 = vadd.f32 %v441, %v482
    %v494 = vadd.f32 %v444, %v485
    %v495 = vadd.f32 %v447, %v488
    %v496 = vadd.f32 %v450, %v491
    %v498 = vperm.slane %v327, 0
    %v500 = vadd.f32 %v493, %v498
    %v501 = vadd.f32 %v494, %v498
    %v502 = vadd.f32 %v495, %v498
    %v503 = vadd.f32 %v496, %v498
    %v505 = vrot.slane %v120, 1
    %v506 = vperm.slane %v120, 0
    %v507 = vperm.slane %v505, 0
    %v510 = vadd.f32 %v500, %v506
    %v511 = vadd.f32 %v501, %v506
    %v512 = vadd.f32 %v502, %v507
    %v513 = vadd.f32 %v503, %v507
    %s514 = scalar_lea.vmem %s6, 1
    %v515 = vld [vmem:[%s514] sm:$0x1]
    %s516 = scalar_lea.vmem %s7, 1
    %v517 = vld [vmem:[%s516] sm:$0x1]
    %v518 = vsel %vm176, %v510, 0.0
    %v519 = vsel %vm176, %v511, 0.0
    %v520 = vadd.f32 %v518, %v519
    %v521 = vrot.slane %v520, 4
    %v522 = vadd.f32 %v520, %v521
    %v523 = vrot.slane %v522, 2
    %v524 = vadd.f32 %v522, %v523
    %v525 = vrot.slane %v524, 1
    %v526 = vadd.f32 %v524, %v525
    %v527 = vsel %vm176, %v512, 0.0
    %v528 = vsel %vm176, %v513, 0.0
    %v529 = vadd.f32 %v527, %v528
    %v530 = vrot.slane %v529, 4
    %v531 = vadd.f32 %v529, %v530
    %v532 = vrot.slane %v531, 2
    %v533 = vadd.f32 %v531, %v532
    %v534 = vrot.slane %v533, 1
    %v535 = vadd.f32 %v533, %v534
    %v536 = vmul.f32 %v510, %v510
    %v537 = vmul.f32 %v511, %v511
    %v538 = vmul.f32 %v512, %v512
    %v539 = vmul.f32 %v513, %v513
    %v540 = vsel %vm176, %v536, 0.0
    %v541 = vsel %vm176, %v537, 0.0
    %v542 = vadd.f32 %v540, %v541
    %v543 = vrot.slane %v542, 4
    %v544 = vadd.f32 %v542, %v543
    %v545 = vrot.slane %v544, 2
    %v546 = vadd.f32 %v544, %v545
    %v547 = vrot.slane %v546, 1
    %v548 = vadd.f32 %v546, %v547
    %v549 = vsel %vm176, %v538, 0.0
    %v550 = vsel %vm176, %v539, 0.0
    %v551 = vadd.f32 %v549, %v550
    %v552 = vrot.slane %v551, 4
    %v553 = vadd.f32 %v551, %v552
    %v554 = vrot.slane %v553, 2
    %v555 = vadd.f32 %v553, %v554
    %v556 = vrot.slane %v555, 1
    %v557 = vadd.f32 %v555, %v556
    %v560 = vsel %vm219, %v535, %v526
    %v561 = vsel %vm176, %v560, 0
    %563 = vmatpush.msra.mxu0 0.0
    %564 = vmatpush.msra.mxu0 0.0
    %565 = vmatpush.msra.mxu0 0.0
    %566 = vmatpush.msra.mxu0 0.0
    %567 = vmatpush.msra.mxu0 0.0
    %568 = vmatpush.msra.mxu0 0.0
    %569 = vmatpush.msra.mxu0 0.0
    %570 = vmatpush.msra.mxu0 0.0
    %571 = vmatpush.msra.mxu0 0.0
    %572 = vmatpush.msra.mxu0 0.0
    %573 = vmatpush.msra.mxu0 0.0
    %574 = vmatpush.msra.mxu0 0.0
    %575 = vmatpush.msra.mxu0 %v119
    %576 = vmatpush.msra.mxu0 %v118
    %577 = vmatpush.msra.mxu0 %v117
    %578 = vmatpush.msra.mxu0 %v116
    %579 = vmatmul.f32.gmra.mxu0 %v561
    %v580 = vpop.f32.mrf.mxu0
    %v581 = vadd.f32 0.0, %v580
    %582 = vdwg.mxu0
    %v585 = vsel %vm219, %v557, %v548
    %v586 = vsel %vm176, %v585, 0
    %588 = vmatpush.msra.mxu0 0.0
    %589 = vmatpush.msra.mxu0 0.0
    %590 = vmatpush.msra.mxu0 0.0
    %591 = vmatpush.msra.mxu0 0.0
    %592 = vmatpush.msra.mxu0 0.0
    %593 = vmatpush.msra.mxu0 0.0
    %594 = vmatpush.msra.mxu0 0.0
    %595 = vmatpush.msra.mxu0 0.0
    %596 = vmatpush.msra.mxu0 0.0
    %597 = vmatpush.msra.mxu0 0.0
    %598 = vmatpush.msra.mxu0 0.0
    %599 = vmatpush.msra.mxu0 0.0
    %600 = vmatpush.msra.mxu0 %v119
    %601 = vmatpush.msra.mxu0 %v118
    %602 = vmatpush.msra.mxu0 %v117
    %603 = vmatpush.msra.mxu0 %v116
    %604 = vmatmul.f32.gmra.mxu0 %v586
    %v605 = vpop.f32.mrf.mxu0
    %v606 = vadd.f32 0.0, %v605
    %607 = vdwg.mxu0
    %v608 = vmul.f32 %v581, %v581
    %v609 = vsub.f32 %v606, %v608
    %v610 = vmax.f32 %v609, 0.0
    %v611 = vadd.f32 %v610, 1e-05
    %v612 = vrsqrt.pop %v611
    %v613 = vmul.f32 %v612, %v611
    %v614 = vmul.f32 %v613, %v612
    %v615 = vmul.f32 0.5, %v614
    %v616 = vsub.f32 1.5, %v615
    %v617 = vmul.f32 %v612, %v616
    %vm618 = vweird.f32 %v611
    %vm619 = vweird.f32 %v612
    %vm620 = vmor %vm618, %vm619
    %v621 = vsel %vm620, %v612, %v617
    %v623 = vperm.slane %v515, 0
    %v625 = vmul.f32 %v621, %v623
    %v626 = vmul.f32 %v581, %v625
    %v628 = vperm.slane %v517, 0
    %v630 = vsub.f32 %v628, %v626
    %v632 = vrot.slane %v625, 1
    %v633 = vperm.slane %v625, 0
    %v634 = vperm.slane %v632, 0
    %v637 = vmul.f32 %v510, %v633
    %v638 = vmul.f32 %v511, %v633
    %v639 = vmul.f32 %v512, %v634
    %v640 = vmul.f32 %v513, %v634
    %v642 = vrot.slane %v630, 1
    %v643 = vperm.slane %v630, 0
    %v644 = vperm.slane %v642, 0
    %v647 = vadd.f32 %v637, %v643
    %v648 = vadd.f32 %v638, %v643
    %v649 = vadd.f32 %v639, %v644
    %v650 = vadd.f32 %v640, %v644
    %v651 = vmax.f32 %v647, 0.0
    %v652 = vmax.f32 %v648, 0.0
    %v653 = vmax.f32 %v649, 0.0
    %v654 = vmax.f32 %v650, 0.0
    %s655 = scalar_lea.vmem [#allocation2], 96
    %v656 = vld [vmem:[%s655] sm:$0xff]
    %v657 = vld [vmem:[%s655 + $0x8] sm:$0xff]
    %v658 = vld [vmem:[%s655 + $0x10] sm:$0xff]
    %v659 = vld [vmem:[%s655 + $0x18] sm:$0xff]
    %v660 = vld [vmem:[%s655 + $0x20] sm:$0xff]
    %v661 = vld [vmem:[%s655 + $0x28] sm:$0xff]
    %v662 = vld [vmem:[%s655 + $0x30] sm:$0xff]
    %v663 = vld [vmem:[%s655 + $0x38] sm:$0xff]
    %v664 = vld [vmem:[%s655 + $0x40] sm:$0xff]
    %v665 = vld [vmem:[%s655 + $0x48] sm:$0xff]
    %v666 = vld [vmem:[%s655 + $0x50] sm:$0xff]
    %v667 = vld [vmem:[%s655 + $0x58] sm:$0xff]
    %s668 = scalar_lea.vmem %s5, 1
    %v669 = vld [vmem:[%s668] sm:$0x1]
    %v670 = vrot.slane %v651, 7
    %v671 = vrot.slane %v652, 7
    %v672 = vrot.slane %v653, 7
    %v673 = vrot.slane %v654, 7
    %v674 = vsel %vm332, %v672, %v673
    %v675 = vsel %vm332, %v671, %v672
    %v676 = vsel %vm332, %v670, %v671
    %v677 = vsel %vm332, %v673, %v670
    %v678 = vsel %vm341, %v677, 0.0
    %v679 = vsel %vm342, %v676, 0.0
    %v680 = vsel %vm343, %v675, 0.0
    %v681 = vsel %vm344, %v674, 0.0
    %v682 = vrot.slane %v651, 1
    %v683 = vrot.slane %v652, 1
    %v684 = vrot.slane %v653, 1
    %v685 = vrot.slane %v654, 1
    %v686 = vsel %vm353, %v684, %v685
    %v687 = vsel %vm353, %v683, %v684
    %v688 = vsel %vm353, %v682, %v683
    %v689 = vsel %vm353, %v685, %v682
    %v690 = vsel %vm362, %v688, 0.0
    %v691 = vsel %vm363, %v687, 0.0
    %v692 = vsel %vm364, %v686, 0.0
    %v693 = vsel %vm365, %v689, 0.0
    %v695 = vsel %vm176, %v651, 0
    %v698 = vsel %vm176, %v652, 0
    %v701 = vsel %vm176, %v653, 0
    %v704 = vsel %vm176, %v654, 0
    %706 = vmatpush.msra.mxu0 0.0
    %707 = vmatpush.msra.mxu0 0.0
    %708 = vmatpush.msra.mxu0 0.0
    %709 = vmatpush.msra.mxu0 0.0
    %710 = vmatpush.msra.mxu0 0.0
    %711 = vmatpush.msra.mxu0 0.0
    %712 = vmatpush.msra.mxu0 0.0
    %713 = vmatpush.msra.mxu0 0.0
    %714 = vmatpush.msra.mxu0 0.0
    %715 = vmatpush.msra.mxu0 0.0
    %716 = vmatpush.msra.mxu0 0.0
    %717 = vmatpush.msra.mxu0 0.0
    %718 = vmatpush.msra.mxu0 %v663
    %719 = vmatpush.msra.mxu0 %v662
    %720 = vmatpush.msra.mxu0 %v661
    %721 = vmatpush.msra.mxu0 %v660
    %722 = vmatmul.f32.gmra.mxu0 %v695
    %v723 = vpop.f32.mrf.mxu0
    %v724 = vadd.f32 0.0, %v723
    %725 = vmatmul.f32.gmra.mxu0 %v698
    %v726 = vpop.f32.mrf.mxu0
    %v727 = vadd.f32 0.0, %v726
    %728 = vmatmul.f32.gmra.mxu0 %v701
    %v729 = vpop.f32.mrf.mxu0
    %v730 = vadd.f32 0.0, %v729
    %731 = vmatmul.f32.gmra.mxu0 %v704
    %v732 = vpop.f32.mrf.mxu0
    %v733 = vadd.f32 0.0, %v732
    %734 = vdwg.mxu0
    %v736 = vsel %vm176, %v678, 0
    %v739 = vsel %vm176, %v679, 0
    %v742 = vsel %vm176, %v680, 0
    %v745 = vsel %vm176, %v681, 0
    %747 = vmatpush.msra.mxu0 0.0
    %748 = vmatpush.msra.mxu0 0.0
    %749 = vmatpush.msra.mxu0 0.0
    %750 = vmatpush.msra.mxu0 0.0
    %751 = vmatpush.msra.mxu0 0.0
    %752 = vmatpush.msra.mxu0 0.0
    %753 = vmatpush.msra.mxu0 0.0
    %754 = vmatpush.msra.mxu0 0.0
    %755 = vmatpush.msra.mxu0 0.0
    %756 = vmatpush.msra.mxu0 0.0
    %757 = vmatpush.msra.mxu0 0.0
    %758 = vmatpush.msra.mxu0 0.0
    %759 = vmatpush.msra.mxu0 %v659
    %760 = vmatpush.msra.mxu0 %v658
    %761 = vmatpush.msra.mxu0 %v657
    %762 = vmatpush.msra.mxu0 %v656
    %763 = vmatmul.f32.gmra.mxu0 %v736
    %v764 = vpop.f32.mrf.mxu0
    %v765 = vadd.f32 %v724, %v764
    %766 = vmatmul.f32.gmra.mxu0 %v739
    %v767 = vpop.f32.mrf.mxu0
    %v768 = vadd.f32 %v727, %v767
    %769 = vmatmul.f32.gmra.mxu0 %v742
    %v770 = vpop.f32.mrf.mxu0
    %v771 = vadd.f32 %v730, %v770
    %772 = vmatmul.f32.gmra.mxu0 %v745
    %v773 = vpop.f32.mrf.mxu0
    %v774 = vadd.f32 %v733, %v773
    %775 = vdwg.mxu0
    %v777 = vsel %vm176, %v690, 0
    %v780 = vsel %vm176, %v691, 0
    %v783 = vsel %vm176, %v692, 0
    %v786 = vsel %vm176, %v693, 0
    %788 = vmatpush.msra.mxu0 0.0
    %789 = vmatpush.msra.mxu0 0.0
    %790 = vmatpush.msra.mxu0 0.0
    %791 = vmatpush.msra.mxu0 0.0
    %792 = vmatpush.msra.mxu0 0.0
    %793 = vmatpush.msra.mxu0 0.0
    %794 = vmatpush.msra.mxu0 0.0
    %795 = vmatpush.msra.mxu0 0.0
    %796 = vmatpush.msra.mxu0 0.0
    %797 = vmatpush.msra.mxu0 0.0
    %798 = vmatpush.msra.mxu0 0.0
    %799 = vmatpush.msra.mxu0 0.0
    %800 = vmatpush.msra.mxu0 %v667
    %801 = vmatpush.msra.mxu0 %v666
    %802 = vmatpush.msra.mxu0 %v665
    %803 = vmatpush.msra.mxu0 %v664
    %804 = vmatmul.f32.gmra.mxu0 %v777
    %v805 = vpop.f32.mrf.mxu0
    %v806 = vadd.f32 0.0, %v805
    %807 = vmatmul.f32.gmra.mxu0 %v780
    %v808 = vpop.f32.mrf.mxu0
    %v809 = vadd.f32 0.0, %v808
    %810 = vmatmul.f32.gmra.mxu0 %v783
    %v811 = vpop.f32.mrf.mxu0
    %v812 = vadd.f32 0.0, %v811
    %813 = vmatmul.f32.gmra.mxu0 %v786
    %v814 = vpop.f32.mrf.mxu0
    %v815 = vadd.f32 0.0, %v814
    %816 = vdwg.mxu0
    %v817 = vadd.f32 %v765, %v806
    %v818 = vadd.f32 %v768, %v809
    %v819 = vadd.f32 %v771, %v812
    %v820 = vadd.f32 %v774, %v815
    %v822 = vperm.slane %v669, 0
    %v824 = vadd.f32 %v817, %v822
    %v825 = vadd.f32 %v818, %v822
    %v826 = vadd.f32 %v819, %v822
    %v827 = vadd.f32 %v820, %v822
    %v828 = vadd.f32 %v824, %v163
    %v829 = vadd.f32 %v825, %v166
    %v830 = vadd.f32 %v826, %v169
    %v831 = vadd.f32 %v827, %v172
    %s832 = scalar_lea.vmem %s6, 2
    %v833 = vld [vmem:[%s832] sm:$0x1]
    %s834 = scalar_lea.vmem %s7, 2
    %v835 = vld [vmem:[%s834] sm:$0x1]
    %v836 = vsel %vm176, %v828, 0.0
    %v837 = vsel %vm176, %v829, 0.0
    %v838 = vadd.f32 %v836, %v837
    %v839 = vrot.slane %v838, 4
    %v840 = vadd.f32 %v838, %v839
    %v841 = vrot.slane %v840, 2
    %v842 = vadd.f32 %v840, %v841
    %v843 = vrot.slane %v842, 1
    %v844 = vadd.f32 %v842, %v843
    %v845 = vsel %vm176, %v830, 0.0
    %v846 = vsel %vm176, %v831, 0.0
    %v847 = vadd.f32 %v845, %v846
    %v848 = vrot.slane %v847, 4
    %v849 = vadd.f32 %v847, %v848
    %v850 = vrot.slane %v849, 2
    %v851 = vadd.f32 %v849, %v850
    %v852 = vrot.slane %v851, 1
    %v853 = vadd.f32 %v851, %v852
    %v854 = vmul.f32 %v828, %v828
    %v855 = vmul.f32 %v829, %v829
    %v856 = vmul.f32 %v830, %v830
    %v857 = vmul.f32 %v831, %v831
    %v858 = vsel %vm176, %v854, 0.0
    %v859 = vsel %vm176, %v855, 0.0
    %v860 = vadd.f32 %v858, %v859
    %v861 = vrot.slane %v860, 4
    %v862 = vadd.f32 %v860, %v861
    %v863 = vrot.slane %v862, 2
    %v864 = vadd.f32 %v862, %v863
    %v865 = vrot.slane %v864, 1
    %v866 = vadd.f32 %v864, %v865
    %v867 = vsel %vm176, %v856, 0.0
    %v868 = vsel %vm176, %v857, 0.0
    %v869 = vadd.f32 %v867, %v868
    %v870 = vrot.slane %v869, 4
    %v871 = vadd.f32 %v869, %v870
    %v872 = vrot.slane %v871, 2
    %v873 = vadd.f32 %v871, %v872
    %v874 = vrot.slane %v873, 1
    %v875 = vadd.f32 %v873, %v874
    %v878 = vsel %vm219, %v853, %v844
    %v879 = vsel %vm176, %v878, 0
    %881 = vmatpush.msra.mxu0 0.0
    %882 = vmatpush.msra.mxu0 0.0
    %883 = vmatpush.msra.mxu0 0.0
    %884 = vmatpush.msra.mxu0 0.0
    %885 = vmatpush.msra.mxu0 0.0
    %886 = vmatpush.msra.mxu0 0.0
    %887 = vmatpush.msra.mxu0 0.0
    %888 = vmatpush.msra.mxu0 0.0
    %889 = vmatpush.msra.mxu0 0.0
    %890 = vmatpush.msra.mxu0 0.0
    %891 = vmatpush.msra.mxu0 0.0
    %892 = vmatpush.msra.mxu0 0.0
    %893 = vmatpush.msra.mxu0 %v119
    %894 = vmatpush.msra.mxu0 %v118
    %895 = vmatpush.msra.mxu0 %v117
    %896 = vmatpush.msra.mxu0 %v116
    %897 = vmatmul.f32.gmra.mxu0 %v879
    %v898 = vpop.f32.mrf.mxu0
    %v899 = vadd.f32 0.0, %v898
    %900 = vdwg.mxu0
    %v903 = vsel %vm219, %v875, %v866
    %v904 = vsel %vm176, %v903, 0
    %906 = vmatpush.msra.mxu0 0.0
    %907 = vmatpush.msra.mxu0 0.0
    %908 = vmatpush.msra.mxu0 0.0
    %909 = vmatpush.msra.mxu0 0.0
    %910 = vmatpush.msra.mxu0 0.0
    %911 = vmatpush.msra.mxu0 0.0
    %912 = vmatpush.msra.mxu0 0.0
    %913 = vmatpush.msra.mxu0 0.0
    %914 = vmatpush.msra.mxu0 0.0
    %915 = vmatpush.msra.mxu0 0.0
    %916 = vmatpush.msra.mxu0 0.0
    %917 = vmatpush.msra.mxu0 0.0
    %918 = vmatpush.msra.mxu0 %v119
    %919 = vmatpush.msra.mxu0 %v118
    %920 = vmatpush.msra.mxu0 %v117
    %921 = vmatpush.msra.mxu0 %v116
    %922 = vmatmul.f32.gmra.mxu0 %v904
    %v923 = vpop.f32.mrf.mxu0
    %v924 = vadd.f32 0.0, %v923
    %925 = vdwg.mxu0
    %v926 = vmul.f32 %v899, %v899
    %v927 = vsub.f32 %v924, %v926
    %v928 = vmax.f32 %v927, 0.0
    %v929 = vadd.f32 %v928, 1e-05
    %v930 = vrsqrt.pop %v929
    %v931 = vmul.f32 %v930, %v929
    %v932 = vmul.f32 %v931, %v930
    %v933 = vmul.f32 0.5, %v932
    %v934 = vsub.f32 1.5, %v933
    %v935 = vmul.f32 %v930, %v934
    %vm936 = vweird.f32 %v929
    %vm937 = vweird.f32 %v930
    %vm938 = vmor %vm936, %vm937
    %v939 = vsel %vm938, %v930, %v935
    %v941 = vperm.slane %v833, 0
    %v943 = vmul.f32 %v939, %v941
    %v944 = vmul.f32 %v899, %v943
    %v946 = vperm.slane %v835, 0
    %v948 = vsub.f32 %v946, %v944
    %v950 = vrot.slane %v943, 1
    %v951 = vperm.slane %v943, 0
    %v952 = vperm.slane %v950, 0
    %v955 = vmul.f32 %v828, %v951
    %v956 = vmul.f32 %v829, %v951
    %v957 = vmul.f32 %v830, %v952
    %v958 = vmul.f32 %v831, %v952
    %v960 = vrot.slane %v948, 1
    %v961 = vperm.slane %v948, 0
    %v962 = vperm.slane %v960, 0
    %v965 = vadd.f32 %v955, %v961
    %v966 = vadd.f32 %v956, %v961
    %v967 = vadd.f32 %v957, %v962
    %v968 = vadd.f32 %v958, %v962
    %v969 = vmax.f32 %v965, 0.0
    %v970 = vmax.f32 %v966, 0.0
    %v971 = vmax.f32 %v967, 0.0
    %v972 = vmax.f32 %v968, 0.0
    %s973 = scalar_lea.vmem [#allocation2], 192
    %v974 = vld [vmem:[%s973] sm:$0xff]
    %v975 = vld [vmem:[%s973 + $0x8] sm:$0xff]
    %v976 = vld [vmem:[%s973 + $0x10] sm:$0xff]
    %v977 = vld [vmem:[%s973 + $0x18] sm:$0xff]
    %v978 = vld [vmem:[%s973 + $0x20] sm:$0xff]
    %v979 = vld [vmem:[%s973 + $0x28] sm:$0xff]
    %v980 = vld [vmem:[%s973 + $0x30] sm:$0xff]
    %v981 = vld [vmem:[%s973 + $0x38] sm:$0xff]
    %v982 = vld [vmem:[%s973 + $0x40] sm:$0xff]
    %v983 = vld [vmem:[%s973 + $0x48] sm:$0xff]
    %v984 = vld [vmem:[%s973 + $0x50] sm:$0xff]
    %v985 = vld [vmem:[%s973 + $0x58] sm:$0xff]
    %s986 = scalar_lea.vmem %s5, 2
    %v987 = vld [vmem:[%s986] sm:$0x1]
    %v988 = vrot.slane %v969, 7
    %v989 = vrot.slane %v970, 7
    %v990 = vrot.slane %v971, 7
    %v991 = vrot.slane %v972, 7
    %v992 = vsel %vm332, %v990, %v991
    %v993 = vsel %vm332, %v989, %v990
    %v994 = vsel %vm332, %v988, %v989
    %v995 = vsel %vm332, %v991, %v988
    %v996 = vsel %vm341, %v995, 0.0
    %v997 = vsel %vm342, %v994, 0.0
    %v998 = vsel %vm343, %v993, 0.0
    %v999 = vsel %vm344, %v992, 0.0
    %v1000 = vrot.slane %v969, 1
    %v1001 = vrot.slane %v970, 1
    %v1002 = vrot.slane %v971, 1
    %v1003 = vrot.slane %v972, 1
    %v1004 = vsel %vm353, %v1002, %v1003
    %v1005 = vsel %vm353, %v1001, %v1002
    %v1006 = vsel %vm353, %v1000, %v1001
    %v1007 = vsel %vm353, %v1003, %v1000
    %v1008 = vsel %vm362, %v1006, 0.0
    %v1009 = vsel %vm363, %v1005, 0.0
    %v1010 = vsel %vm364, %v1004, 0.0
    %v1011 = vsel %vm365, %v1007, 0.0
    %v1013 = vsel %vm176, %v969, 0
    %v1016 = vsel %vm176, %v970, 0
    %v1019 = vsel %vm176, %v971, 0
    %v1022 = vsel %vm176, %v972, 0
    %1024 = vmatpush.msra.mxu0 0.0
    %1025 = vmatpush.msra.mxu0 0.0
    %1026 = vmatpush.msra.mxu0 0.0
    %1027 = vmatpush.msra.mxu0 0.0
    %1028 = vmatpush.msra.mxu0 0.0
    %1029 = vmatpush.msra.mxu0 0.0
    %1030 = vmatpush.msra.mxu0 0.0
    %1031 = vmatpush.msra.mxu0 0.0
    %1032 = vmatpush.msra.mxu0 0.0
    %1033 = vmatpush.msra.mxu0 0.0
    %1034 = vmatpush.msra.mxu0 0.0
    %1035 = vmatpush.msra.mxu0 0.0
    %1036 = vmatpush.msra.mxu0 %v981
    %1037 = vmatpush.msra.mxu0 %v980
    %1038 = vmatpush.msra.mxu0 %v979
    %1039 = vmatpush.msra.mxu0 %v978
    %1040 = vmatmul.f32.gmra.mxu0 %v1013
    %v1041 = vpop.f32.mrf.mxu0
    %v1042 = vadd.f32 0.0, %v1041
    %1043 = vmatmul.f32.gmra.mxu0 %v1016
    %v1044 = vpop.f32.mrf.mxu0
    %v1045 = vadd.f32 0.0, %v1044
    %1046 = vmatmul.f32.gmra.mxu0 %v1019
    %v1047 = vpop.f32.mrf.mxu0
    %v1048 = vadd.f32 0.0, %v1047
    %1049 = vmatmul.f32.gmra.mxu0 %v1022
    %v1050 = vpop.f32.mrf.mxu0
    %v1051 = vadd.f32 0.0, %v1050
    %1052 = vdwg.mxu0
    %v1054 = vsel %vm176, %v996, 0
    %v1057 = vsel %vm176, %v997, 0
    %v1060 = vsel %vm176, %v998, 0
    %v1063 = vsel %vm176, %v999, 0
    %1065 = vmatpush.msra.mxu0 0.0
    %1066 = vmatpush.msra.mxu0 0.0
    %1067 = vmatpush.msra.mxu0 0.0
    %1068 = vmatpush.msra.mxu0 0.0
    %1069 = vmatpush.msra.mxu0 0.0
    %1070 = vmatpush.msra.mxu0 0.0
    %1071 = vmatpush.msra.mxu0 0.0
    %1072 = vmatpush.msra.mxu0 0.0
    %1073 = vmatpush.msra.mxu0 0.0
    %1074 = vmatpush.msra.mxu0 0.0
    %1075 = vmatpush.msra.mxu0 0.0
    %1076 = vmatpush.msra.mxu0 0.0
    %1077 = vmatpush.msra.mxu0 %v977
    %1078 = vmatpush.msra.mxu0 %v976
    %1079 = vmatpush.msra.mxu0 %v975
    %1080 = vmatpush.msra.mxu0 %v974
    %1081 = vmatmul.f32.gmra.mxu0 %v1054
    %v1082 = vpop.f32.mrf.mxu0
    %v1083 = vadd.f32 %v1042, %v1082
    %1084 = vmatmul.f32.gmra.mxu0 %v1057
    %v1085 = vpop.f32.mrf.mxu0
    %v1086 = vadd.f32 %v1045, %v1085
    %1087 = vmatmul.f32.gmra.mxu0 %v1060
    %v1088 = vpop.f32.mrf.mxu0
    %v1089 = vadd.f32 %v1048, %v1088
    %1090 = vmatmul.f32.gmra.mxu0 %v1063
    %v1091 = vpop.f32.mrf.mxu0
    %v1092 = vadd.f32 %v1051, %v1091
    %1093 = vdwg.mxu0
    %v1095 = vsel %vm176, %v1008, 0
    %v1098 = vsel %vm176, %v1009, 0
    %v1101 = vsel %vm176, %v1010, 0
    %v1104 = vsel %vm176, %v1011, 0
    %1106 = vmatpush.msra.mxu0 0.0
    %1107 = vmatpush.msra.mxu0 0.0
    %1108 = vmatpush.msra.mxu0 0.0
    %1109 = vmatpush.msra.mxu0 0.0
    %1110 = vmatpush.msra.mxu0 0.0
    %1111 = vmatpush.msra.mxu0 0.0
    %1112 = vmatpush.msra.mxu0 0.0
    %1113 = vmatpush.msra.mxu0 0.0
    %1114 = vmatpush.msra.mxu0 0.0
    %1115 = vmatpush.msra.mxu0 0.0
    %1116 = vmatpush.msra.mxu0 0.0
    %1117 = vmatpush.msra.mxu0 0.0
    %1118 = vmatpush.msra.mxu0 %v985
    %1119 = vmatpush.msra.mxu0 %v984
    %1120 = vmatpush.msra.mxu0 %v983
    %1121 = vmatpush.msra.mxu0 %v982
    %1122 = vmatmul.f32.gmra.mxu0 %v1095
    %v1123 = vpop.f32.mrf.mxu0
    %v1124 = vadd.f32 0.0, %v1123
    %1125 = vmatmul.f32.gmra.mxu0 %v1098
    %v1126 = vpop.f32.mrf.mxu0
    %v1127 = vadd.f32 0.0, %v1126
    %1128 = vmatmul.f32.gmra.mxu0 %v1101
    %v1129 = vpop.f32.mrf.mxu0
    %v1130 = vadd.f32 0.0, %v1129
    %1131 = vmatmul.f32.gmra.mxu0 %v1104
    %v1132 = vpop.f32.mrf.mxu0
    %v1133 = vadd.f32 0.0, %v1132
    %1134 = vdwg.mxu0
    %v1135 = vadd.f32 %v1083, %v1124
    %v1136 = vadd.f32 %v1086, %v1127
    %v1137 = vadd.f32 %v1089, %v1130
    %v1138 = vadd.f32 %v1092, %v1133
    %v1140 = vperm.slane %v987, 0
    %v1142 = vadd.f32 %v1135, %v1140
    %v1143 = vadd.f32 %v1136, %v1140
    %v1144 = vadd.f32 %v1137, %v1140
    %v1145 = vadd.f32 %v1138, %v1140
    %v1146 = vadd.f32 %v1142, %v506
    %v1147 = vadd.f32 %v1143, %v506
    %v1148 = vadd.f32 %v1144, %v507
    %v1149 = vadd.f32 %v1145, %v507
    %s1150 = scalar_lea.vmem %s6, 3
    %v1151 = vld [vmem:[%s1150] sm:$0x1]
    %s1152 = scalar_lea.vmem %s7, 3
    %v1153 = vld [vmem:[%s1152] sm:$0x1]
    %v1154 = vsel %vm176, %v1146, 0.0
    %v1155 = vsel %vm176, %v1147, 0.0
    %v1156 = vadd.f32 %v1154, %v1155
    %v1157 = vrot.slane %v1156, 4
    %v1158 = vadd.f32 %v1156, %v1157
    %v1159 = vrot.slane %v1158, 2
    %v1160 = vadd.f32 %v1158, %v1159
    %v1161 = vrot.slane %v1160, 1
    %v1162 = vadd.f32 %v1160, %v1161
    %v1163 = vsel %vm176, %v1148, 0.0
    %v1164 = vsel %vm176, %v1149, 0.0
    %v1165 = vadd.f32 %v1163, %v1164
    %v1166 = vrot.slane %v1165, 4
    %v1167 = vadd.f32 %v1165, %v1166
    %v1168 = vrot.slane %v1167, 2
    %v1169 = vadd.f32 %v1167, %v1168
    %v1170 = vrot.slane %v1169, 1
    %v1171 = vadd.f32 %v1169, %v1170
    %v1172 = vmul.f32 %v1146, %v1146
    %v1173 = vmul.f32 %v1147, %v1147
    %v1174 = vmul.f32 %v1148, %v1148
    %v1175 = vmul.f32 %v1149, %v1149
    %v1176 = vsel %vm176, %v1172, 0.0
    %v1177 = vsel %vm176, %v1173, 0.0
    %v1178 = vadd.f32 %v1176, %v1177
    %v1179 = vrot.slane %v1178, 4
    %v1180 = vadd.f32 %v1178, %v1179
    %v1181 = vrot.slane %v1180, 2
    %v1182 = vadd.f32 %v1180, %v1181
    %v1183 = vrot.slane %v1182, 1
    %v1184 = vadd.f32 %v1182, %v1183
    %v1185 = vsel %vm176, %v1174, 0.0
    %v1186 = vsel %vm176, %v1175, 0.0
    %v1187 = vadd.f32 %v1185, %v1186
    %v1188 = vrot.slane %v1187, 4
    %v1189 = vadd.f32 %v1187, %v1188
    %v1190 = vrot.slane %v1189, 2
    %v1191 = vadd.f32 %v1189, %v1190
    %v1192 = vrot.slane %v1191, 1
    %v1193 = vadd.f32 %v1191, %v1192
    %v1196 = vsel %vm219, %v1171, %v1162
    %v1197 = vsel %vm176, %v1196, 0
    %1199 = vmatpush.msra.mxu0 0.0
    %1200 = vmatpush.msra.mxu0 0.0
    %1201 = vmatpush.msra.mxu0 0.0
    %1202 = vmatpush.msra.mxu0 0.0
    %1203 = vmatpush.msra.mxu0 0.0
    %1204 = vmatpush.msra.mxu0 0.0
    %1205 = vmatpush.msra.mxu0 0.0
    %1206 = vmatpush.msra.mxu0 0.0
    %1207 = vmatpush.msra.mxu0 0.0
    %1208 = vmatpush.msra.mxu0 0.0
    %1209 = vmatpush.msra.mxu0 0.0
    %1210 = vmatpush.msra.mxu0 0.0
    %1211 = vmatpush.msra.mxu0 %v119
    %1212 = vmatpush.msra.mxu0 %v118
    %1213 = vmatpush.msra.mxu0 %v117
    %1214 = vmatpush.msra.mxu0 %v116
    %1215 = vmatmul.f32.gmra.mxu0 %v1197
    %v1216 = vpop.f32.mrf.mxu0
    %v1217 = vadd.f32 0.0, %v1216
    %1218 = vdwg.mxu0
    %v1221 = vsel %vm219, %v1193, %v1184
    %v1222 = vsel %vm176, %v1221, 0
    %1224 = vmatpush.msra.mxu0 0.0
    %1225 = vmatpush.msra.mxu0 0.0
    %1226 = vmatpush.msra.mxu0 0.0
    %1227 = vmatpush.msra.mxu0 0.0
    %1228 = vmatpush.msra.mxu0 0.0
    %1229 = vmatpush.msra.mxu0 0.0
    %1230 = vmatpush.msra.mxu0 0.0
    %1231 = vmatpush.msra.mxu0 0.0
    %1232 = vmatpush.msra.mxu0 0.0
    %1233 = vmatpush.msra.mxu0 0.0
    %1234 = vmatpush.msra.mxu0 0.0
    %1235 = vmatpush.msra.mxu0 0.0
    %1236 = vmatpush.msra.mxu0 %v119
    %1237 = vmatpush.msra.mxu0 %v118
    %1238 = vmatpush.msra.mxu0 %v117
    %1239 = vmatpush.msra.mxu0 %v116
    %1240 = vmatmul.f32.gmra.mxu0 %v1222
    %v1241 = vpop.f32.mrf.mxu0
    %v1242 = vadd.f32 0.0, %v1241
    %1243 = vdwg.mxu0
    %v1244 = vmul.f32 %v1217, %v1217
    %v1245 = vsub.f32 %v1242, %v1244
    %v1246 = vmax.f32 %v1245, 0.0
    %v1247 = vadd.f32 %v1246, 1e-05
    %v1248 = vrsqrt.pop %v1247
    %v1249 = vmul.f32 %v1248, %v1247
    %v1250 = vmul.f32 %v1249, %v1248
    %v1251 = vmul.f32 0.5, %v1250
    %v1252 = vsub.f32 1.5, %v1251
    %v1253 = vmul.f32 %v1248, %v1252
    %vm1254 = vweird.f32 %v1247
    %vm1255 = vweird.f32 %v1248
    %vm1256 = vmor %vm1254, %vm1255
    %v1257 = vsel %vm1256, %v1248, %v1253
    %v1259 = vperm.slane %v1151, 0
    %v1261 = vmul.f32 %v1257, %v1259
    %v1262 = vmul.f32 %v1217, %v1261
    %v1264 = vperm.slane %v1153, 0
    %v1266 = vsub.f32 %v1264, %v1262
    %v1268 = vrot.slane %v1261, 1
    %v1269 = vperm.slane %v1261, 0
    %v1270 = vperm.slane %v1268, 0
    %v1273 = vmul.f32 %v1146, %v1269
    %v1274 = vmul.f32 %v1147, %v1269
    %v1275 = vmul.f32 %v1148, %v1270
    %v1276 = vmul.f32 %v1149, %v1270
    %v1278 = vrot.slane %v1266, 1
    %v1279 = vperm.slane %v1266, 0
    %v1280 = vperm.slane %v1278, 0
    %v1283 = vadd.f32 %v1273, %v1279
    %v1284 = vadd.f32 %v1274, %v1279
    %v1285 = vadd.f32 %v1275, %v1280
    %v1286 = vadd.f32 %v1276, %v1280
    %v1287 = vmax.f32 %v1283, 0.0
    %v1288 = vmax.f32 %v1284, 0.0
    %v1289 = vmax.f32 %v1285, 0.0
    %v1290 = vmax.f32 %v1286, 0.0
    %s1291 = scalar_lea.vmem [#allocation2], 288
    %v1292 = vld [vmem:[%s1291] sm:$0xff]
    %v1293 = vld [vmem:[%s1291 + $0x8] sm:$0xff]
    %v1294 = vld [vmem:[%s1291 + $0x10] sm:$0xff]
    %v1295 = vld [vmem:[%s1291 + $0x18] sm:$0xff]
    %v1296 = vld [vmem:[%s1291 + $0x20] sm:$0xff]
    %v1297 = vld [vmem:[%s1291 + $0x28] sm:$0xff]
    %v1298 = vld [vmem:[%s1291 + $0x30] sm:$0xff]
    %v1299 = vld [vmem:[%s1291 + $0x38] sm:$0xff]
    %v1300 = vld [vmem:[%s1291 + $0x40] sm:$0xff]
    %v1301 = vld [vmem:[%s1291 + $0x48] sm:$0xff]
    %v1302 = vld [vmem:[%s1291 + $0x50] sm:$0xff]
    %v1303 = vld [vmem:[%s1291 + $0x58] sm:$0xff]
    %s1304 = scalar_lea.vmem %s5, 3
    %v1305 = vld [vmem:[%s1304] sm:$0x1]
    %v1306 = vrot.slane %v1287, 7
    %v1307 = vrot.slane %v1288, 7
    %v1308 = vrot.slane %v1289, 7
    %v1309 = vrot.slane %v1290, 7
    %v1310 = vsel %vm332, %v1308, %v1309
    %v1311 = vsel %vm332, %v1307, %v1308
    %v1312 = vsel %vm332, %v1306, %v1307
    %v1313 = vsel %vm332, %v1309, %v1306
    %v1314 = vsel %vm341, %v1313, 0.0
    %v1315 = vsel %vm342, %v1312, 0.0
    %v1316 = vsel %vm343, %v1311, 0.0
    %v1317 = vsel %vm344, %v1310, 0.0
    %v1318 = vrot.slane %v1287, 1
    %v1319 = vrot.slane %v1288, 1
    %v1320 = vrot.slane %v1289, 1
    %v1321 = vrot.slane %v1290, 1
    %v1322 = vsel %vm353, %v1320, %v1321
    %v1323 = vsel %vm353, %v1319, %v1320
    %v1324 = vsel %vm353, %v1318, %v1319
    %v1325 = vsel %vm353, %v1321, %v1318
    %v1326 = vsel %vm362, %v1324, 0.0
    %v1327 = vsel %vm363, %v1323, 0.0
    %v1328 = vsel %vm364, %v1322, 0.0
    %v1329 = vsel %vm365, %v1325, 0.0
    %v1331 = vsel %vm176, %v1287, 0
    %v1334 = vsel %vm176, %v1288, 0
    %v1337 = vsel %vm176, %v1289, 0
    %v1340 = vsel %vm176, %v1290, 0
    %1342 = vmatpush.msra.mxu0 0.0
    %1343 = vmatpush.msra.mxu0 0.0
    %1344 = vmatpush.msra.mxu0 0.0
    %1345 = vmatpush.msra.mxu0 0.0
    %1346 = vmatpush.msra.mxu0 0.0
    %1347 = vmatpush.msra.mxu0 0.0
    %1348 = vmatpush.msra.mxu0 0.0
    %1349 = vmatpush.msra.mxu0 0.0
    %1350 = vmatpush.msra.mxu0 0.0
    %1351 = vmatpush.msra.mxu0 0.0
    %1352 = vmatpush.msra.mxu0 0.0
    %1353 = vmatpush.msra.mxu0 0.0
    %1354 = vmatpush.msra.mxu0 %v1299
    %1355 = vmatpush.msra.mxu0 %v1298
    %1356 = vmatpush.msra.mxu0 %v1297
    %1357 = vmatpush.msra.mxu0 %v1296
    %1358 = vmatmul.f32.gmra.mxu0 %v1331
    %v1359 = vpop.f32.mrf.mxu0
    %v1360 = vadd.f32 0.0, %v1359
    %1361 = vmatmul.f32.gmra.mxu0 %v1334
    %v1362 = vpop.f32.mrf.mxu0
    %v1363 = vadd.f32 0.0, %v1362
    %1364 = vmatmul.f32.gmra.mxu0 %v1337
    %v1365 = vpop.f32.mrf.mxu0
    %v1366 = vadd.f32 0.0, %v1365
    %1367 = vmatmul.f32.gmra.mxu0 %v1340
    %v1368 = vpop.f32.mrf.mxu0
    %v1369 = vadd.f32 0.0, %v1368
    %1370 = vdwg.mxu0
    %v1372 = vsel %vm176, %v1314, 0
    %v1375 = vsel %vm176, %v1315, 0
    %v1378 = vsel %vm176, %v1316, 0
    %v1381 = vsel %vm176, %v1317, 0
    %1383 = vmatpush.msra.mxu0 0.0
    %1384 = vmatpush.msra.mxu0 0.0
    %1385 = vmatpush.msra.mxu0 0.0
    %1386 = vmatpush.msra.mxu0 0.0
    %1387 = vmatpush.msra.mxu0 0.0
    %1388 = vmatpush.msra.mxu0 0.0
    %1389 = vmatpush.msra.mxu0 0.0
    %1390 = vmatpush.msra.mxu0 0.0
    %1391 = vmatpush.msra.mxu0 0.0
    %1392 = vmatpush.msra.mxu0 0.0
    %1393 = vmatpush.msra.mxu0 0.0
    %1394 = vmatpush.msra.mxu0 0.0
    %1395 = vmatpush.msra.mxu0 %v1295
    %1396 = vmatpush.msra.mxu0 %v1294
    %1397 = vmatpush.msra.mxu0 %v1293
    %1398 = vmatpush.msra.mxu0 %v1292
    %1399 = vmatmul.f32.gmra.mxu0 %v1372
    %v1400 = vpop.f32.mrf.mxu0
    %v1401 = vadd.f32 %v1360, %v1400
    %1402 = vmatmul.f32.gmra.mxu0 %v1375
    %v1403 = vpop.f32.mrf.mxu0
    %v1404 = vadd.f32 %v1363, %v1403
    %1405 = vmatmul.f32.gmra.mxu0 %v1378
    %v1406 = vpop.f32.mrf.mxu0
    %v1407 = vadd.f32 %v1366, %v1406
    %1408 = vmatmul.f32.gmra.mxu0 %v1381
    %v1409 = vpop.f32.mrf.mxu0
    %v1410 = vadd.f32 %v1369, %v1409
    %1411 = vdwg.mxu0
    %v1413 = vsel %vm176, %v1326, 0
    %v1416 = vsel %vm176, %v1327, 0
    %v1419 = vsel %vm176, %v1328, 0
    %v1422 = vsel %vm176, %v1329, 0
    %1424 = vmatpush.msra.mxu0 0.0
    %1425 = vmatpush.msra.mxu0 0.0
    %1426 = vmatpush.msra.mxu0 0.0
    %1427 = vmatpush.msra.mxu0 0.0
    %1428 = vmatpush.msra.mxu0 0.0
    %1429 = vmatpush.msra.mxu0 0.0
    %1430 = vmatpush.msra.mxu0 0.0
    %1431 = vmatpush.msra.mxu0 0.0
    %1432 = vmatpush.msra.mxu0 0.0
    %1433 = vmatpush.msra.mxu0 0.0
    %1434 = vmatpush.msra.mxu0 0.0
    %1435 = vmatpush.msra.mxu0 0.0
    %1436 = vmatpush.msra.mxu0 %v1303
    %1437 = vmatpush.msra.mxu0 %v1302
    %1438 = vmatpush.msra.mxu0 %v1301
    %1439 = vmatpush.msra.mxu0 %v1300
    %1440 = vmatmul.f32.gmra.mxu0 %v1413
    %v1441 = vpop.f32.mrf.mxu0
    %v1442 = vadd.f32 0.0, %v1441
    %1443 = vmatmul.f32.gmra.mxu0 %v1416
    %v1444 = vpop.f32.mrf.mxu0
    %v1445 = vadd.f32 0.0, %v1444
    %1446 = vmatmul.f32.gmra.mxu0 %v1419
    %v1447 = vpop.f32.mrf.mxu0
    %v1448 = vadd.f32 0.0, %v1447
    %1449 = vmatmul.f32.gmra.mxu0 %v1422
    %v1450 = vpop.f32.mrf.mxu0
    %v1451 = vadd.f32 0.0, %v1450
    %1452 = vdwg.mxu0
    %v1453 = vadd.f32 %v1401, %v1442
    %v1454 = vadd.f32 %v1404, %v1445
    %v1455 = vadd.f32 %v1407, %v1448
    %v1456 = vadd.f32 %v1410, %v1451
    %v1458 = vperm.slane %v1305, 0
    %v1460 = vadd.f32 %v1453, %v1458
    %v1461 = vadd.f32 %v1454, %v1458
    %v1462 = vadd.f32 %v1455, %v1458
    %v1463 = vadd.f32 %v1456, %v1458
    %v1464 = vadd.f32 %v1460, %v828
    %v1465 = vadd.f32 %v1461, %v829
    %v1466 = vadd.f32 %v1462, %v830
    %v1467 = vadd.f32 %v1463, %v831
    %v1468 = vld [vmem:[%s8] sm:$0xff]
    %v1469 = vld [vmem:[%s8 + $0x8] sm:$0xff]
    %v1470 = vld [vmem:[%s8 + $0x10] sm:$0xff]
    %v1471 = vld [vmem:[%s8 + $0x18] sm:$0xff]
    %v1472 = vld [vmem:[%s9] sm:$0x1]
    %v1474 = vperm.slane %v1472, 0
    %v1477 = vsel %vm176, %v1464, 0
    %v1480 = vsel %vm176, %v1465, 0
    %v1483 = vsel %vm176, %v1466, 0
    %v1486 = vsel %vm176, %v1467, 0
    %1488 = vmatpush.msra.mxu0 0.0
    %1489 = vmatpush.msra.mxu0 0.0
    %1490 = vmatpush.msra.mxu0 0.0
    %1491 = vmatpush.msra.mxu0 0.0
    %1492 = vmatpush.msra.mxu0 0.0
    %1493 = vmatpush.msra.mxu0 0.0
    %1494 = vmatpush.msra.mxu0 0.0
    %1495 = vmatpush.msra.mxu0 0.0
    %1496 = vmatpush.msra.mxu0 0.0
    %1497 = vmatpush.msra.mxu0 0.0
    %1498 = vmatpush.msra.mxu0 0.0
    %1499 = vmatpush.msra.mxu0 0.0
    %1500 = vmatpush.msra.mxu0 %v1471
    %1501 = vmatpush.msra.mxu0 %v1470
    %1502 = vmatpush.msra.mxu0 %v1469
    %1503 = vmatpush.msra.mxu0 %v1468
    %1504 = vmatmul.f32.gmra.mxu0 %v1477
    %v1505 = vpop.f32.mrf.mxu0
    %v1506 = vadd.f32 %v1474, %v1505
    %1507 = vmatmul.f32.gmra.mxu0 %v1480
    %v1508 = vpop.f32.mrf.mxu0
    %v1509 = vadd.f32 %v1474, %v1508
    %1510 = vmatmul.f32.gmra.mxu0 %v1483
    %v1511 = vpop.f32.mrf.mxu0
    %v1512 = vadd.f32 %v1474, %v1511
    %1513 = vmatmul.f32.gmra.mxu0 %v1486
    %v1514 = vpop.f32.mrf.mxu0
    %v1515 = vadd.f32 %v1474, %v1514
    %1516 = vdwg.mxu0
    %1517 = vst [vmem:[#allocation5] sm:$0xff] %v1506
    %1518 = vst [vmem:[#allocation5 + $0x8] sm:$0xff] %v1509
    %1519 = vst [vmem:[#allocation5 + $0x10] sm:$0xff] %v1512
    %1520 = vst [vmem:[#allocation5 + $0x18] sm:$0xff] %v1515
    // Predicated region
    $region50: #{tpu_custom_call.1} parent=1 // pred_check
      _
    $region51: #{tpu_custom_call.1} parent=1 // pred_check_branch
      %1522 = sbr.rel (0) target = $region53
    $region52: #{tpu_custom_call.1} parent=1 // pred_region
      %1524 = vsyncadd [#allocation4], 0
      %s1525 = sshll.u32 [#allocation5], 4
      %s1526 = int_to_ptr.vmem [resolvable:$true] %s1525
      %s1527 = sshll.u32 %s11, 4
      %s1528 = int_to_ptr.hbm [resolvable:$true] %s1527
      %1533 = dma.vmem_to_hbm [thread:$0]  %s1526, 512, %s1528, [#allocation4], 128, 128, 8
    $region53: #{tpu_custom_call.1} parent=1 // pred_fallthru
      _
    // Predicated region
    $region54: #{tpu_custom_call.1} parent=1 // pred_check
      _
    $region55: #{tpu_custom_call.1} parent=1 // pred_check_branch
      %1535 = sbr.rel (0) target = $region57
    $region56: #{tpu_custom_call.1} parent=1 // pred_region
      %1537 = dma.done [#allocation4], 512
    $region57: #{tpu_custom_call.1} parent=1 // pred_fallthru
      _
    %1538 = vsyncpa [#allocation3], 1
    %1539 = vsyncpa [#allocation4], 1

// kernel: tpu_custom_call.1
$region0: #{tpu_custom_call.1}
  #allocation0 [shape = 'u32[]', space=smem, size = 0x4, offset = 0x4, fixed_abs, tag = 'smem constant byte address 0x4 - core index']
  #allocation1 [shape = 'u32[72,128]{1,0:T(1,128)}', space=vmem, size = 0x9000, scoped, tag = 'internal scratch']
  %s0 = inlined_call_operand.vmem [shape: f32[2,32], index: 0, kind: input, shape index: {}]
  %s1 = inlined_call_operand.vmem [shape: f32[32,128], index: 1, kind: input, shape index: {}]
  %s2 = inlined_call_operand.vmem [shape: f32[128,32], index: 2, kind: input, shape index: {}]
  %s3 = inlined_call_operand.vmem [shape: f32[1,32], index: 3, kind: input, shape index: {}]
  %s4 = inlined_call_operand.hbm [shape: f32[4,3,32,32], index: 4, kind: input, shape index: {}]
  %s5 = inlined_call_operand.vmem [shape: f32[4,1,32], index: 5, kind: input, shape index: {}]
  %s6 = inlined_call_operand.vmem [shape: f32[4,1,32], index: 6, kind: input, shape index: {}]
  %s7 = inlined_call_operand.vmem [shape: f32[4,1,32], index: 7, kind: input, shape index: {}]
  %s8 = inlined_call_operand.vmem [shape: f32[32,128], index: 8, kind: input, shape index: {}]
  %s9 = inlined_call_operand.vmem [shape: f32[1,128], index: 9, kind: input, shape index: {}]
  %s10 = inlined_call_operand.vmem [shape: f32[32,32], index: 10, kind: input, shape index: {}]
  %s11 = inlined_call_operand.hbm [shape: f32[32,128], index: 11, kind: output, shape index: {}]
  %s12 = sld [smem:[#allocation0]]
  $region58: #{tpu_custom_call.1} parent=0
    _
  %s14 = ssub.s32 1, %s12
  %s15 = scalar_select 0, %s14, %s12
  $region1: #{tpu_custom_call.1} parent=0
    #allocation2 [shape = 'u8[196608]{0}', space=vmem, size = 0x30000, scoped, tag = 'input window, operand 4, single buffered']
    #allocation3 [shape = 's32[1]{0}', space=sflag, size = 0x4, scoped, tag = 'scoped memory for tpu_custom_call.1']
    #allocation4 [shape = 's32[1]{0}', space=sflag, size = 0x4, scoped, tag = 'scoped memory for tpu_custom_call.1']
    #allocation5 [shape = 'u8[16384]{0}', space=vmem, size = 0x4000, scoped, tag = 'output window, operand 0, single buffered']
    %16 = vsyncpa [#allocation3], 0
    %17 = vsyncpa [#allocation4], 0
    // Predicated region
    $region2: #{tpu_custom_call.1} parent=1 // pred_check
      _
    $region3: #{tpu_custom_call.1} parent=1 // pred_check_branch
      %19 = sbr.rel (0) target = $region5
    $region4: #{tpu_custom_call.1} parent=1 // pred_region
      _
    $region5: #{tpu_custom_call.1} parent=1 // pred_fallthru
      _
    // Predicated region
    $region6: #{tpu_custom_call.1} parent=1 // pred_check
      _
    $region7: #{tpu_custom_call.1} parent=1 // pred_check_branch
      %21 = sbr.rel (0) target = $region9
    $region8: #{tpu_custom_call.1} parent=1 // pred_region
      _
    $region9: #{tpu_custom_call.1} parent=1 // pred_fallthru
      _
    // Predicated region
    $region10: #{tpu_custom_call.1} parent=1 // pred_check
      _
    $region11: #{tpu_custom_call.1} parent=1 // pred_check_branch
      %23 = sbr.rel (0) target = $region13
    $region12: #{tpu_custom_call.1} parent=1 // pred_region
      _
    $region13: #{tpu_custom_call.1} parent=1 // pred_fallthru
      _
    // Predicated region
    $region14: #{tpu_custom_call.1} parent=1 // pred_check
      _
    $region15: #{tpu_custom_call.1} parent=1 // pred_check_branch
      %25 = sbr.rel (0) target = $region17
    $region16: #{tpu_custom_call.1} parent=1 // pred_region
      _
    $region17: #{tpu_custom_call.1} parent=1 // pred_fallthru
      _
    // Predicated region
    $region18: #{tpu_custom_call.1} parent=1 // pred_check
      _
    $region19: #{tpu_custom_call.1} parent=1 // pred_check_branch
      %27 = sbr.rel (0) target = $region21
    $region20: #{tpu_custom_call.1} parent=1 // pred_region
      %29 = vsyncadd [#allocation3], 0
      %s30 = sshll.u32 %s4, 4
      %s31 = int_to_ptr.hbm [resolvable:$true] %s30
      %s32 = sshll.u32 [#allocation2], 4
      %s33 = int_to_ptr.vmem [resolvable:$true] %s32
      %38 = dma.hbm_to_vmem [thread:$0]  %s31, 6144, %s33, [#allocation3], 128, 128, 8
    $region21: #{tpu_custom_call.1} parent=1 // pred_fallthru
      _
    // Predicated region
    $region22: #{tpu_custom_call.1} parent=1 // pred_check
      _
    $region23: #{tpu_custom_call.1} parent=1 // pred_check_branch
      %40 = sbr.rel (0) target = $region25
    $region24: #{tpu_custom_call.1} parent=1 // pred_region
      _
    $region25: #{tpu_custom_call.1} parent=1 // pred_fallthru
      _
    // Predicated region
    $region26: #{tpu_custom_call.1} parent=1 // pred_check
      _
    $region27: #{tpu_custom_call.1} parent=1 // pred_check_branch
      %42 = sbr.rel (0) target = $region29
    $region28: #{tpu_custom_call.1} parent=1 // pred_region
      _
    $region29: #{tpu_custom_call.1} parent=1 // pred_fallthru
      _
    // Predicated region
    $region30: #{tpu_custom_call.1} parent=1 // pred_check
      _
    $region31: #{tpu_custom_call.1} parent=1 // pred_check_branch
      %44 = sbr.rel (0) target = $region33
    $region32: #{tpu_custom_call.1} parent=1 // pred_region
      _
    $region33: #{tpu_custom_call.1} parent=1 // pred_fallthru
      _
    // Predicated region
    $region34: #{tpu_custom_call.1} parent=1 // pred_check
      _
    $region35: #{tpu_custom_call.1} parent=1 // pred_check_branch
      %46 = sbr.rel (0) target = $region37
    $region36: #{tpu_custom_call.1} parent=1 // pred_region
      _
    $region37: #{tpu_custom_call.1} parent=1 // pred_fallthru
      _
    // Predicated region
    $region38: #{tpu_custom_call.1} parent=1 // pred_check
      _
    $region39: #{tpu_custom_call.1} parent=1 // pred_check_branch
      %48 = sbr.rel (0) target = $region41
    $region40: #{tpu_custom_call.1} parent=1 // pred_region
      _
    $region41: #{tpu_custom_call.1} parent=1 // pred_fallthru
      _
    // Predicated region
    $region42: #{tpu_custom_call.1} parent=1 // pred_check
      _
    $region43: #{tpu_custom_call.1} parent=1 // pred_check_branch
      %50 = sbr.rel (0) target = $region45
    $region44: #{tpu_custom_call.1} parent=1 // pred_region
      _
    $region45: #{tpu_custom_call.1} parent=1 // pred_fallthru
      _
    // Predicated region
    $region46: #{tpu_custom_call.1} parent=1 // pred_check
      _
    $region47: #{tpu_custom_call.1} parent=1 // pred_check_branch
      %52 = sbr.rel (0) target = $region49
    $region48: #{tpu_custom_call.1} parent=1 // pred_region
      %54 = dma.done [#allocation3], 6144
    $region49: #{tpu_custom_call.1} parent=1 // pred_fallthru
      _
    %v55 = vlaneseq
    %v56 = vshrl.u32 %v55, 7
    %v57 = vadd.s32 %v56, 8
    %v58 = vadd.s32 %v56, 16
    %v59 = vadd.s32 %v56, 24
    %vm60 = vcmp.lt.s32.totalorder %v56, 0
    %v61 = vsub.s32 0, %v56
    %v62 = vsel %vm60, %v61, %v56
    %v63 = vshrl.u32 %v62, 4
    %v64 = vand.u32 %v62, 15
    %v65 = vsub.s32 0, %v64
    %v66 = vsel %vm60, %v65, %v64
    %vm67 = vcmp.lt.s32.totalorder %v57, 0
    %v68 = vsub.s32 0, %v57
    %v69 = vsel %vm67, %v68, %v57
    %v70 = vshrl.u32 %v69, 4
    %v71 = vand.u32 %v69, 15
    %v72 = vsub.s32 0, %v71
    %v73 = vsel %vm67, %v72, %v71
    %vm74 = vcmp.lt.s32.totalorder %v58, 0
    %v75 = vsub.s32 0, %v58
    %v76 = vsel %vm74, %v75, %v58
    %v77 = vshrl.u32 %v76, 4
    %v78 = vand.u32 %v76, 15
    %v79 = vsub.s32 0, %v78
    %v80 = vsel %vm74, %v79, %v78
    %vm81 = vcmp.lt.s32.totalorder %v59, 0
    %v82 = vsub.s32 0, %v59
    %v83 = vsel %vm81, %v82, %v59
    %v84 = vshrl.u32 %v83, 4
    %v85 = vand.u32 %v83, 15
    %v86 = vsub.s32 0, %v85
    %v87 = vsel %vm81, %v86, %v85
    %vm88 = vcmp.ne.s32.totalorder %v66, 0
    %vm89 = vcmp.ne.s32.totalorder %v73, 0
    %vm90 = vcmp.ne.s32.totalorder %v80, 0
    %vm91 = vcmp.ne.s32.totalorder %v87, 0
    %vm92 = vcmp.lt.s32.totalorder %v66, 0
    %vm93 = vcmp.lt.s32.totalorder %v73, 0
    %vm94 = vcmp.lt.s32.totalorder %v80, 0
    %vm95 = vcmp.lt.s32.totalorder %v87, 0
    %vm96 = vmand %vm92, %vm88
    %vm97 = vmand %vm93, %vm89
    %vm98 = vmand %vm94, %vm90
    %vm99 = vmand %vm95, %vm91
    %v100 = vadd.s32 %v66, 16
    %v101 = vadd.s32 %v73, 16
    %v102 = vadd.s32 %v80, 16
    %v103 = vadd.s32 %v87, 16
    %v104 = vsel %vm96, %v100, %v66
    %v105 = vsel %vm97, %v101, %v73
    %v106 = vsel %vm98, %v102, %v80
    %v107 = vsel %vm99, %v103, %v87
    %vm108 = vcmp.ge.s32.totalorder %v104, 1
    %vm109 = vcmp.ge.s32.totalorder %v105, 1
    %vm110 = vcmp.ge.s32.totalorder %v106, 1
    %vm111 = vcmp.ge.s32.totalorder %v107, 1
    %vm112 = vcmp.le.s32.totalorder %v104, 14
    %vm113 = vcmp.le.s32.totalorder %v105, 14
    %vm114 = vcmp.le.s32.totalorder %v106, 14
    %vm115 = vcmp.le.s32.totalorder %v107, 14
    %v116 = vld [vmem:[%s10] sm:$0xff]
    %v117 = vld [vmem:[%s10 + $0x8] sm:$0xff]
    %v118 = vld [vmem:[%s10 + $0x10] sm:$0xff]
    %v119 = vld [vmem:[%s10 + $0x18] sm:$0xff]
    %v120 = vld [vmem:[%s0] sm:$0x3]
    %v121 = vld [vmem:[%s1] sm:$0xff]
    %v122 = vld [vmem:[%s1 + $0x8] sm:$0xff]
    %v123 = vld [vmem:[%s1 + $0x10] sm:$0xff]
    %v124 = vld [vmem:[%s1 + $0x18] sm:$0xff]
    %v125 = vld [vmem:[%s2] sm:$0xff]
    %v126 = vld [vmem:[%s2 + $0x8] sm:$0xff]
    %v127 = vld [vmem:[%s2 + $0x10] sm:$0xff]
    %v128 = vld [vmem:[%s2 + $0x18] sm:$0xff]
    %v129 = vld [vmem:[%s2 + $0x20] sm:$0xff]
    %v130 = vld [vmem:[%s2 + $0x28] sm:$0xff]
    %v131 = vld [vmem:[%s2 + $0x30] sm:$0xff]
    %v132 = vld [vmem:[%s2 + $0x38] sm:$0xff]
    %v133 = vld [vmem:[%s2 + $0x40] sm:$0xff]
    %v134 = vld [vmem:[%s2 + $0x48] sm:$0xff]
    %v135 = vld [vmem:[%s2 + $0x50] sm:$0xff]
    %v136 = vld [vmem:[%s2 + $0x58] sm:$0xff]
    %v137 = vld [vmem:[%s2 + $0x60] sm:$0xff]
    %v138 = vld [vmem:[%s2 + $0x68] sm:$0xff]
    %v139 = vld [vmem:[%s2 + $0x70] sm:$0xff]
    %v140 = vld [vmem:[%s2 + $0x78] sm:$0xff]
    %v141 = vld [vmem:[%s3] sm:$0x1]
    %v143 = vperm.slane %v141, 0
    %145 = vmatpush.msra.mxu0 %v140
    %146 = vmatpush.msra.mxu0 %v139
    %147 = vmatpush.msra.mxu0 %v138
    %148 = vmatpush.msra.mxu0 %v137
    %149 = vmatpush.msra.mxu0 %v136
    %150 = vmatpush.msra.mxu0 %v135
    %151 = vmatpush.msra.mxu0 %v134
    %152 = vmatpush.msra.mxu0 %v133
    %153 = vmatpush.msra.mxu0 %v132
    %154 = vmatpush.msra.mxu0 %v131
    %155 = vmatpush.msra.mxu0 %v130
    %156 = vmatpush.msra.mxu0 %v129
    %157 = vmatpush.msra.mxu0 %v128
    %158 = vmatpush.msra.mxu0 %v127
    %159 = vmatpush.msra.mxu0 %v126
    %160 = vmatpush.msra.mxu0 %v125
    %161 = vmatmul.f32.gmra.mxu0 %v121
    %v162 = vpop.f32.mrf.mxu0
    %v163 = vadd.f32 %v143, %v162
    %164 = vmatmul.f32.gmra.mxu0 %v122
    %v165 = vpop.f32.mrf.mxu0
    %v166 = vadd.f32 %v143, %v165
    %167 = vmatmul.f32.gmra.mxu0 %v123
    %v168 = vpop.f32.mrf.mxu0
    %v169 = vadd.f32 %v143, %v168
    %170 = vmatmul.f32.gmra.mxu0 %v124
    %v171 = vpop.f32.mrf.mxu0
    %v172 = vadd.f32 %v143, %v171
    %173 = vdwg.mxu0
    %v174 = vld [vmem:[%s6] sm:$0x1]
    %v175 = vld [vmem:[%s7] sm:$0x1]
    %vm176 = vcmask 261120
    %v177 = vsel %vm176, %v163, 0.0
    %v178 = vsel %vm176, %v166, 0.0
    %v179 = vadd.f32 %v177, %v178
    %v180 = vrot.slane %v179, 4
    %v181 = vadd.f32 %v179, %v180
    %v182 = vrot.slane %v181, 2
    %v183 = vadd.f32 %v181, %v182
    %v184 = vrot.slane %v183, 1
    %v185 = vadd.f32 %v183, %v184
    %v186 = vsel %vm176, %v169, 0.0
    %v187 = vsel %vm176, %v172, 0.0
    %v188 = vadd.f32 %v186, %v187
    %v189 = vrot.slane %v188, 4
    %v190 = vadd.f32 %v188, %v189
    %v191 = vrot.slane %v190, 2
    %v192 = vadd.f32 %v190, %v191
    %v193 = vrot.slane %v192, 1
    %v194 = vadd.f32 %v192, %v193
    %v195 = vmul.f32 %v163, %v163
    %v196 = vmul.f32 %v166, %v166
    %v197 = vmul.f32 %v169, %v169
    %v198 = vmul.f32 %v172, %v172
    %v199 = vsel %vm176, %v195, 0.0
    %v200 = vsel %vm176, %v196, 0.0
    %v201 = vadd.f32 %v199, %v200
    %v202 = vrot.slane %v201, 4
    %v203 = vadd.f32 %v201, %v202
    %v204 = vrot.slane %v203, 2
    %v205 = vadd.f32 %v203, %v204
    %v206 = vrot.slane %v205, 1
    %v207 = vadd.f32 %v205, %v206
    %v208 = vsel %vm176, %v197, 0.0
    %v209 = vsel %vm176, %v198, 0.0
    %v210 = vadd.f32 %v208, %v209
    %v211 = vrot.slane %v210, 4
    %v212 = vadd.f32 %v210, %v211
    %v213 = vrot.slane %v212, 2
    %v214 = vadd.f32 %v212, %v213
    %v215 = vrot.slane %v214, 1
    %v216 = vadd.f32 %v214, %v215
    %vm219 = vcmask 1041409
    %v220 = vsel %vm219, %v194, %v185
    %v221 = vsel %vm176, %v220, 0
    %223 = vmatpush.msra.mxu0 0.0
    %224 = vmatpush.msra.mxu0 0.0
    %225 = vmatpush.msra.mxu0 0.0
    %226 = vmatpush.msra.mxu0 0.0
    %227 = vmatpush.msra.mxu0 0.0
    %228 = vmatpush.msra.mxu0 0.0
    %229 = vmatpush.msra.mxu0 0.0
    %230 = vmatpush.msra.mxu0 0.0
    %231 = vmatpush.msra.mxu0 0.0
    %232 = vmatpush.msra.mxu0 0.0
    %233 = vmatpush.msra.mxu0 0.0
    %234 = vmatpush.msra.mxu0 0.0
    %235 = vmatpush.msra.mxu0 %v119
    %236 = vmatpush.msra.mxu0 %v118
    %237 = vmatpush.msra.mxu0 %v117
    %238 = vmatpush.msra.mxu0 %v116
    %239 = vmatmul.f32.gmra.mxu0 %v221
    %v240 = vpop.f32.mrf.mxu0
    %v241 = vadd.f32 0.0, %v240
    %242 = vdwg.mxu0
    %v245 = vsel %vm219, %v216, %v207
    %v246 = vsel %vm176, %v245, 0
    %248 = vmatpush.msra.mxu0 0.0
    %249 = vmatpush.msra.mxu0 0.0
    %250 = vmatpush.msra.mxu0 0.0
    %251 = vmatpush.msra.mxu0 0.0
    %252 = vmatpush.msra.mxu0 0.0
    %253 = vmatpush.msra.mxu0 0.0
    %254 = vmatpush.msra.mxu0 0.0
    %255 = vmatpush.msra.mxu0 0.0
    %256 = vmatpush.msra.mxu0 0.0
    %257 = vmatpush.msra.mxu0 0.0
    %258 = vmatpush.msra.mxu0 0.0
    %259 = vmatpush.msra.mxu0 0.0
    %260 = vmatpush.msra.mxu0 %v119
    %261 = vmatpush.msra.mxu0 %v118
    %262 = vmatpush.msra.mxu0 %v117
    %263 = vmatpush.msra.mxu0 %v116
    %264 = vmatmul.f32.gmra.mxu0 %v246
    %v265 = vpop.f32.mrf.mxu0
    %v266 = vadd.f32 0.0, %v265
    %267 = vdwg.mxu0
    %v268 = vmul.f32 %v241, %v241
    %v269 = vsub.f32 %v266, %v268
    %v270 = vmax.f32 %v269, 0.0
    %v271 = vadd.f32 %v270, 1e-05
    %v272 = vrsqrt.pop %v271
    %v273 = vmul.f32 %v272, %v271
    %v274 = vmul.f32 %v273, %v272
    %v275 = vmul.f32 0.5, %v274
    %v276 = vsub.f32 1.5, %v275
    %v277 = vmul.f32 %v272, %v276
    %vm278 = vweird.f32 %v271
    %vm279 = vweird.f32 %v272
    %vm280 = vmor %vm278, %vm279
    %v281 = vsel %vm280, %v272, %v277
    %v283 = vperm.slane %v174, 0
    %v285 = vmul.f32 %v281, %v283
    %v286 = vmul.f32 %v241, %v285
    %v288 = vperm.slane %v175, 0
    %v290 = vsub.f32 %v288, %v286
    %v292 = vrot.slane %v285, 1
    %v293 = vperm.slane %v285, 0
    %v294 = vperm.slane %v292, 0
    %v297 = vmul.f32 %v163, %v293
    %v298 = vmul.f32 %v166, %v293
    %v299 = vmul.f32 %v169, %v294
    %v300 = vmul.f32 %v172, %v294
    %v302 = vrot.slane %v290, 1
    %v303 = vperm.slane %v290, 0
    %v304 = vperm.slane %v302, 0
    %v307 = vadd.f32 %v297, %v303
    %v308 = vadd.f32 %v298, %v303
    %v309 = vadd.f32 %v299, %v304
    %v310 = vadd.f32 %v300, %v304
    %v311 = vmax.f32 %v307, 0.0
    %v312 = vmax.f32 %v308, 0.0
    %v313 = vmax.f32 %v309, 0.0
    %v314 = vmax.f32 %v310, 0.0
    %v315 = vld [vmem:[#allocation2] sm:$0xff]
    %v316 = vld [vmem:[#allocation2 + $0x8] sm:$0xff]
    %v317 = vld [vmem:[#allocation2 + $0x10] sm:$0xff]
    %v318 = vld [vmem:[#allocation2 + $0x18] sm:$0xff]
    %v319 = vld [vmem:[#allocation2 + $0x20] sm:$0xff]
    %v320 = vld [vmem:[#allocation2 + $0x28] sm:$0xff]
    %v321 = vld [vmem:[#allocation2 + $0x30] sm:$0xff]
    %v322 = vld [vmem:[#allocation2 + $0x38] sm:$0xff]
    %v323 = vld [vmem:[#allocation2 + $0x40] sm:$0xff]
    %v324 = vld [vmem:[#allocation2 + $0x48] sm:$0xff]
    %v325 = vld [vmem:[#allocation2 + $0x50] sm:$0xff]
    %v326 = vld [vmem:[#allocation2 + $0x58] sm:$0xff]
    %v327 = vld [vmem:[%s5] sm:$0x1]
    %v328 = vrot.slane %v311, 7
    %v329 = vrot.slane %v312, 7
    %v330 = vrot.slane %v313, 7
    %v331 = vrot.slane %v314, 7
    %vm332 = vcmp.lt.s32.totalorder %v56, 1
    %v333 = vsel %vm332, %v330, %v331
    %v334 = vsel %vm332, %v329, %v330
    %v335 = vsel %vm332, %v328, %v329
    %v336 = vsel %vm332, %v331, %v328
    %v337 = vsel %vm108, 1, 0
    %v338 = vsel %vm109, 1, 0
    %v339 = vsel %vm110, 1, 0
    %v340 = vsel %vm111, 1, 0
    %vm341 = vcmp.eq.s32.totalorder %v337, 1
    %vm342 = vcmp.eq.s32.totalorder %v338, 1
    %vm343 = vcmp.eq.s32.totalorder %v339, 1
    %vm344 = vcmp.eq.s32.totalorder %v340, 1
    %v345 = vsel %vm341, %v336, 0.0
    %v346 = vsel %vm342, %v335, 0.0
    %v347 = vsel %vm343, %v334, 0.0
    %v348 = vsel %vm344, %v333, 0.0
    %v349 = vrot.slane %v311, 1
    %v350 = vrot.slane %v312, 1
    %v351 = vrot.slane %v313, 1
    %v352 = vrot.slane %v314, 1
    %vm353 = vcmp.lt.s32.totalorder %v56, 7
    %v354 = vsel %vm353, %v351, %v352
    %v355 = vsel %vm353, %v350, %v351
    %v356 = vsel %vm353, %v349, %v350
    %v357 = vsel %vm353, %v352, %v349
    %v358 = vsel %vm112, 1, 0
    %v359 = vsel %vm113, 1, 0
    %v360 = vsel %vm114, 1, 0
    %v361 = vsel %vm115, 1, 0
    %vm362 = vcmp.eq.s32.totalorder %v358, 1
    %vm363 = vcmp.eq.s32.totalorder %v359, 1
    %vm364 = vcmp.eq.s32.totalorder %v360, 1
    %vm365 = vcmp.eq.s32.totalorder %v361, 1
    %v366 = vsel %vm362, %v356, 0.0
    %v367 = vsel %vm363, %v355, 0.0
    %v368 = vsel %vm364, %v354, 0.0
    %v369 = vsel %vm365, %v357, 0.0
    %v371 = vsel %vm176, %v311, 0
    %v374 = vsel %vm176, %v312, 0
    %v377 = vsel %vm176, %v313, 0
    %v380 = vsel %vm176, %v314, 0
    %382 = vmatpush.msra.mxu0 0.0
    %383 = vmatpush.msra.mxu0 0.0
    %384 = vmatpush.msra.mxu0 0.0
    %385 = vmatpush.msra.mxu0 0.0
    %386 = vmatpush.msra.mxu0 0.0
    %387 = vmatpush.msra.mxu0 0.0
    %388 = vmatpush.msra.mxu0 0.0
    %389 = vmatpush.msra.mxu0 0.0
    %390 = vmatpush.msra.mxu0 0.0
    %391 = vmatpush.msra.mxu0 0.0
    %392 = vmatpush.msra.mxu0 0.0
    %393 = vmatpush.msra.mxu0 0.0
    %394 = vmatpush.msra.mxu0 %v322
    %395 = vmatpush.msra.mxu0 %v321
    %396 = vmatpush.msra.mxu0 %v320
    %397 = vmatpush.msra.mxu0 %v319
    %398 = vmatmul.f32.gmra.mxu0 %v371
    %v399 = vpop.f32.mrf.mxu0
    %v400 = vadd.f32 0.0, %v399
    %401 = vmatmul.f32.gmra.mxu0 %v374
    %v402 = vpop.f32.mrf.mxu0
    %v403 = vadd.f32 0.0, %v402
    %404 = vmatmul.f32.gmra.mxu0 %v377
    %v405 = vpop.f32.mrf.mxu0
    %v406 = vadd.f32 0.0, %v405
    %407 = vmatmul.f32.gmra.mxu0 %v380
    %v408 = vpop.f32.mrf.mxu0
    %v409 = vadd.f32 0.0, %v408
    %410 = vdwg.mxu0
    %v412 = vsel %vm176, %v345, 0
    %v415 = vsel %vm176, %v346, 0
    %v418 = vsel %vm176, %v347, 0
    %v421 = vsel %vm176, %v348, 0
    %423 = vmatpush.msra.mxu0 0.0
    %424 = vmatpush.msra.mxu0 0.0
    %425 = vmatpush.msra.mxu0 0.0
    %426 = vmatpush.msra.mxu0 0.0
    %427 = vmatpush.msra.mxu0 0.0
    %428 = vmatpush.msra.mxu0 0.0
    %429 = vmatpush.msra.mxu0 0.0
    %430 = vmatpush.msra.mxu0 0.0
    %431 = vmatpush.msra.mxu0 0.0
    %432 = vmatpush.msra.mxu0 0.0
    %433 = vmatpush.msra.mxu0 0.0
    %434 = vmatpush.msra.mxu0 0.0
    %435 = vmatpush.msra.mxu0 %v318
    %436 = vmatpush.msra.mxu0 %v317
    %437 = vmatpush.msra.mxu0 %v316
    %438 = vmatpush.msra.mxu0 %v315
    %439 = vmatmul.f32.gmra.mxu0 %v412
    %v440 = vpop.f32.mrf.mxu0
    %v441 = vadd.f32 %v400, %v440
    %442 = vmatmul.f32.gmra.mxu0 %v415
    %v443 = vpop.f32.mrf.mxu0
    %v444 = vadd.f32 %v403, %v443
    %445 = vmatmul.f32.gmra.mxu0 %v418
    %v446 = vpop.f32.mrf.mxu0
    %v447 = vadd.f32 %v406, %v446
    %448 = vmatmul.f32.gmra.mxu0 %v421
    %v449 = vpop.f32.mrf.mxu0
    %v450 = vadd.f32 %v409, %v449
    %451 = vdwg.mxu0
    %v453 = vsel %vm176, %v366, 0
    %v456 = vsel %vm176, %v367, 0
    %v459 = vsel %vm176, %v368, 0
    %v462 = vsel %vm176, %v369, 0
    %464 = vmatpush.msra.mxu0 0.0
    %465 = vmatpush.msra.mxu0 0.0
    %466 = vmatpush.msra.mxu0 0.0
    %467 = vmatpush.msra.mxu0 0.0
    %468 = vmatpush.msra.mxu0 0.0
    %469 = vmatpush.msra.mxu0 0.0
    %470 = vmatpush.msra.mxu0 0.0
    %471 = vmatpush.msra.mxu0 0.0
    %472 = vmatpush.msra.mxu0 0.0
    %473 = vmatpush.msra.mxu0 0.0
    %474 = vmatpush.msra.mxu0 0.0
    %475 = vmatpush.msra.mxu0 0.0
    %476 = vmatpush.msra.mxu0 %v326
    %477 = vmatpush.msra.mxu0 %v325
    %478 = vmatpush.msra.mxu0 %v324
    %479 = vmatpush.msra.mxu0 %v323
    %480 = vmatmul.f32.gmra.mxu0 %v453
    %v481 = vpop.f32.mrf.mxu0
    %v482 = vadd.f32 0.0, %v481
    %483 = vmatmul.f32.gmra.mxu0 %v456
    %v484 = vpop.f32.mrf.mxu0
    %v485 = vadd.f32 0.0, %v484
    %486 = vmatmul.f32.gmra.mxu0 %v459
    %v487 = vpop.f32.mrf.mxu0
    %v488 = vadd.f32 0.0, %v487
    %489 = vmatmul.f32.gmra.mxu0 %v462
    %v490 = vpop.f32.mrf.mxu0
    %v491 = vadd.f32 0.0, %v490
    %492 = vdwg.mxu0
    %v493 = vadd.f32 %v441, %v482
    %v494 = vadd.f32 %v444, %v485
    %v495 = vadd.f32 %v447, %v488
    %v496 = vadd.f32 %v450, %v491
    %v498 = vperm.slane %v327, 0
    %v500 = vadd.f32 %v493, %v498
    %v501 = vadd.f32 %v494, %v498
    %v502 = vadd.f32 %v495, %v498
    %v503 = vadd.f32 %v496, %v498
    %v505 = vrot.slane %v120, 1
    %v506 = vperm.slane %v120, 0
    %v507 = vperm.slane %v505, 0
    %v510 = vadd.f32 %v500, %v506
    %v511 = vadd.f32 %v501, %v506
    %v512 = vadd.f32 %v502, %v507
    %v513 = vadd.f32 %v503, %v507
    %s514 = scalar_lea.vmem %s6, 1
    %v515 = vld [vmem:[%s514] sm:$0x1]
    %s516 = scalar_lea.vmem %s7, 1
    %v517 = vld [vmem:[%s516] sm:$0x1]
    %v518 = vsel %vm176, %v510, 0.0
    %v519 = vsel %vm176, %v511, 0.0
    %v520 = vadd.f32 %v518, %v519
    %v521 = vrot.slane %v520, 4
    %v522 = vadd.f32 %v520, %v521
    %v523 = vrot.slane %v522, 2
    %v524 = vadd.f32 %v522, %v523
    %v525 = vrot.slane %v524, 1
    %v526 = vadd.f32 %v524, %v525
    %v527 = vsel %vm176, %v512, 0.0
    %v528 = vsel %vm176, %v513, 0.0
    %v529 = vadd.f32 %v527, %v528
    %v530 = vrot.slane %v529, 4
    %v531 = vadd.f32 %v529, %v530
    %v532 = vrot.slane %v531, 2
    %v533 = vadd.f32 %v531, %v532
    %v534 = vrot.slane %v533, 1
    %v535 = vadd.f32 %v533, %v534
    %v536 = vmul.f32 %v510, %v510
    %v537 = vmul.f32 %v511, %v511
    %v538 = vmul.f32 %v512, %v512
    %v539 = vmul.f32 %v513, %v513
    %v540 = vsel %vm176, %v536, 0.0
    %v541 = vsel %vm176, %v537, 0.0
    %v542 = vadd.f32 %v540, %v541
    %v543 = vrot.slane %v542, 4
    %v544 = vadd.f32 %v542, %v543
    %v545 = vrot.slane %v544, 2
    %v546 = vadd.f32 %v544, %v545
    %v547 = vrot.slane %v546, 1
    %v548 = vadd.f32 %v546, %v547
    %v549 = vsel %vm176, %v538, 0.0
    %v550 = vsel %vm176, %v539, 0.0
    %v551 = vadd.f32 %v549, %v550
    %v552 = vrot.slane %v551, 4
    %v553 = vadd.f32 %v551, %v552
    %v554 = vrot.slane %v553, 2
    %v555 = vadd.f32 %v553, %v554
    %v556 = vrot.slane %v555, 1
    %v557 = vadd.f32 %v555, %v556
    %v560 = vsel %vm219, %v535, %v526
    %v561 = vsel %vm176, %v560, 0
    %563 = vmatpush.msra.mxu0 0.0
    %564 = vmatpush.msra.mxu0 0.0
    %565 = vmatpush.msra.mxu0 0.0
    %566 = vmatpush.msra.mxu0 0.0
    %567 = vmatpush.msra.mxu0 0.0
    %568 = vmatpush.msra.mxu0 0.0
    %569 = vmatpush.msra.mxu0 0.0
    %570 = vmatpush.msra.mxu0 0.0
    %571 = vmatpush.msra.mxu0 0.0
    %572 = vmatpush.msra.mxu0 0.0
    %573 = vmatpush.msra.mxu0 0.0
    %574 = vmatpush.msra.mxu0 0.0
    %575 = vmatpush.msra.mxu0 %v119
    %576 = vmatpush.msra.mxu0 %v118
    %577 = vmatpush.msra.mxu0 %v117
    %578 = vmatpush.msra.mxu0 %v116
    %579 = vmatmul.f32.gmra.mxu0 %v561
    %v580 = vpop.f32.mrf.mxu0
    %v581 = vadd.f32 0.0, %v580
    %582 = vdwg.mxu0
    %v585 = vsel %vm219, %v557, %v548
    %v586 = vsel %vm176, %v585, 0
    %588 = vmatpush.msra.mxu0 0.0
    %589 = vmatpush.msra.mxu0 0.0
    %590 = vmatpush.msra.mxu0 0.0
    %591 = vmatpush.msra.mxu0 0.0
    %592 = vmatpush.msra.mxu0 0.0
    %593 = vmatpush.msra.mxu0 0.0
    %594 = vmatpush.msra.mxu0 0.0
    %595 = vmatpush.msra.mxu0 0.0
    %596 = vmatpush.msra.mxu0 0.0
    %597 = vmatpush.msra.mxu0 0.0
    %598 = vmatpush.msra.mxu0 0.0
    %599 = vmatpush.msra.mxu0 0.0
    %600 = vmatpush.msra.mxu0 %v119
    %601 = vmatpush.msra.mxu0 %v118
    %602 = vmatpush.msra.mxu0 %v117
    %603 = vmatpush.msra.mxu0 %v116
    %604 = vmatmul.f32.gmra.mxu0 %v586
    %v605 = vpop.f32.mrf.mxu0
    %v606 = vadd.f32 0.0, %v605
    %607 = vdwg.mxu0
    %v608 = vmul.f32 %v581, %v581
    %v609 = vsub.f32 %v606, %v608
    %v610 = vmax.f32 %v609, 0.0
    %v611 = vadd.f32 %v610, 1e-05
    %v612 = vrsqrt.pop %v611
    %v613 = vmul.f32 %v612, %v611
    %v614 = vmul.f32 %v613, %v612
    %v615 = vmul.f32 0.5, %v614
    %v616 = vsub.f32 1.5, %v615
    %v617 = vmul.f32 %v612, %v616
    %vm618 = vweird.f32 %v611
    %vm619 = vweird.f32 %v612
    %vm620 = vmor %vm618, %vm619
    %v621 = vsel %vm620, %v612, %v617
    %v623 = vperm.slane %v515, 0
    %v625 = vmul.f32 %v621, %v623
    %v626 = vmul.f32 %v581, %v625
    %v628 = vperm.slane %v517, 0
    %v630 = vsub.f32 %v628, %v626
    %v632 = vrot.slane %v625, 1
    %v633 = vperm.slane %v625, 0
    %v634 = vperm.slane %v632, 0
    %v637 = vmul.f32 %v510, %v633
    %v638 = vmul.f32 %v511, %v633
    %v639 = vmul.f32 %v512, %v634
    %v640 = vmul.f32 %v513, %v634
    %v642 = vrot.slane %v630, 1
    %v643 = vperm.slane %v630, 0
    %v644 = vperm.slane %v642, 0
    %v647 = vadd.f32 %v637, %v643
    %v648 = vadd.f32 %v638, %v643
    %v649 = vadd.f32 %v639, %v644
    %v650 = vadd.f32 %v640, %v644
    %v651 = vmax.f32 %v647, 0.0
    %v652 = vmax.f32 %v648, 0.0
    %v653 = vmax.f32 %v649, 0.0
    %v654 = vmax.f32 %v650, 0.0
    %s655 = scalar_lea.vmem [#allocation2], 96
    %v656 = vld [vmem:[%s655] sm:$0xff]
    %v657 = vld [vmem:[%s655 + $0x8] sm:$0xff]
    %v658 = vld [vmem:[%s655 + $0x10] sm:$0xff]
    %v659 = vld [vmem:[%s655 + $0x18] sm:$0xff]
    %v660 = vld [vmem:[%s655 + $0x20] sm:$0xff]
    %v661 = vld [vmem:[%s655 + $0x28] sm:$0xff]
    %v662 = vld [vmem:[%s655 + $0x30] sm:$0xff]
    %v663 = vld [vmem:[%s655 + $0x38] sm:$0xff]
    %v664 = vld [vmem:[%s655 + $0x40] sm:$0xff]
    %v665 = vld [vmem:[%s655 + $0x48] sm:$0xff]
    %v666 = vld [vmem:[%s655 + $0x50] sm:$0xff]
    %v667 = vld [vmem:[%s655 + $0x58] sm:$0xff]
    %s668 = scalar_lea.vmem %s5, 1
    %v669 = vld [vmem:[%s668] sm:$0x1]
    %v670 = vrot.slane %v651, 7
    %v671 = vrot.slane %v652, 7
    %v672 = vrot.slane %v653, 7
    %v673 = vrot.slane %v654, 7
    %v674 = vsel %vm332, %v672, %v673
    %v675 = vsel %vm332, %v671, %v672
    %v676 = vsel %vm332, %v670, %v671
    %v677 = vsel %vm332, %v673, %v670
    %v678 = vsel %vm341, %v677, 0.0
    %v679 = vsel %vm342, %v676, 0.0
    %v680 = vsel %vm343, %v675, 0.0
    %v681 = vsel %vm344, %v674, 0.0
    %v682 = vrot.slane %v651, 1
    %v683 = vrot.slane %v652, 1
    %v684 = vrot.slane %v653, 1
    %v685 = vrot.slane %v654, 1
    %v686 = vsel %vm353, %v684, %v685
    %v687 = vsel %vm353, %v683, %v684
    %v688 = vsel %vm353, %v682, %v683
    %v689 = vsel %vm353, %v685, %v682
    %v690 = vsel %vm362, %v688, 0.0
    %v691 = vsel %vm363, %v687, 0.0
    %v692 = vsel %vm364, %v686, 0.0
    %v693 = vsel %vm365, %v689, 0.0
    %v695 = vsel %vm176, %v651, 0
    %v698 = vsel %vm176, %v652, 0
    %v701 = vsel %vm176, %v653, 0
    %v704 = vsel %vm176, %v654, 0
    %706 = vmatpush.msra.mxu0 0.0
    %707 = vmatpush.msra.mxu0 0.0
    %708 = vmatpush.msra.mxu0 0.0
    %709 = vmatpush.msra.mxu0 0.0
    %710 = vmatpush.msra.mxu0 0.0
    %711 = vmatpush.msra.mxu0 0.0
    %712 = vmatpush.msra.mxu0 0.0
    %713 = vmatpush.msra.mxu0 0.0
    %714 = vmatpush.msra.mxu0 0.0
    %715 = vmatpush.msra.mxu0 0.0
    %716 = vmatpush.msra.mxu0 0.0
    %717 = vmatpush.msra.mxu0 0.0
    %718 = vmatpush.msra.mxu0 %v663
    %719 = vmatpush.msra.mxu0 %v662
    %720 = vmatpush.msra.mxu0 %v661
    %721 = vmatpush.msra.mxu0 %v660
    %722 = vmatmul.f32.gmra.mxu0 %v695
    %v723 = vpop.f32.mrf.mxu0
    %v724 = vadd.f32 0.0, %v723
    %725 = vmatmul.f32.gmra.mxu0 %v698
    %v726 = vpop.f32.mrf.mxu0
    %v727 = vadd.f32 0.0, %v726
    %728 = vmatmul.f32.gmra.mxu0 %v701
    %v729 = vpop.f32.mrf.mxu0
    %v730 = vadd.f32 0.0, %v729
    %731 = vmatmul.f32.gmra.mxu0 %v704
    %v732 = vpop.f32.mrf.mxu0
    %v733 = vadd.f32 0.0, %v732
    %734 = vdwg.mxu0
    %v736 = vsel %vm176, %v678, 0
    %v739 = vsel %vm176, %v679, 0
    %v742 = vsel %vm176, %v680, 0
    %v745 = vsel %vm176, %v681, 0
    %747 = vmatpush.msra.mxu0 0.0
    %748 = vmatpush.msra.mxu0 0.0
    %749 = vmatpush.msra.mxu0 0.0
    %750 = vmatpush.msra.mxu0 0.0
    %751 = vmatpush.msra.mxu0 0.0
    %752 = vmatpush.msra.mxu0 0.0
    %753 = vmatpush.msra.mxu0 0.0
    %754 = vmatpush.msra.mxu0 0.0
    %755 = vmatpush.msra.mxu0 0.0
    %756 = vmatpush.msra.mxu0 0.0
    %757 = vmatpush.msra.mxu0 0.0
    %758 = vmatpush.msra.mxu0 0.0
    %759 = vmatpush.msra.mxu0 %v659
    %760 = vmatpush.msra.mxu0 %v658
    %761 = vmatpush.msra.mxu0 %v657
    %762 = vmatpush.msra.mxu0 %v656
    %763 = vmatmul.f32.gmra.mxu0 %v736
    %v764 = vpop.f32.mrf.mxu0
    %v765 = vadd.f32 %v724, %v764
    %766 = vmatmul.f32.gmra.mxu0 %v739
    %v767 = vpop.f32.mrf.mxu0
    %v768 = vadd.f32 %v727, %v767
    %769 = vmatmul.f32.gmra.mxu0 %v742
    %v770 = vpop.f32.mrf.mxu0
    %v771 = vadd.f32 %v730, %v770
    %772 = vmatmul.f32.gmra.mxu0 %v745
    %v773 = vpop.f32.mrf.mxu0
    %v774 = vadd.f32 %v733, %v773
    %775 = vdwg.mxu0
    %v777 = vsel %vm176, %v690, 0
    %v780 = vsel %vm176, %v691, 0
    %v783 = vsel %vm176, %v692, 0
    %v786 = vsel %vm176, %v693, 0
    %788 = vmatpush.msra.mxu0 0.0
    %789 = vmatpush.msra.mxu0 0.0
    %790 = vmatpush.msra.mxu0 0.0
    %791 = vmatpush.msra.mxu0 0.0
    %792 = vmatpush.msra.mxu0 0.0
    %793 = vmatpush.msra.mxu0 0.0
    %794 = vmatpush.msra.mxu0 0.0
    %795 = vmatpush.msra.mxu0 0.0
    %796 = vmatpush.msra.mxu0 0.0
    %797 = vmatpush.msra.mxu0 0.0
    %798 = vmatpush.msra.mxu0 0.0
    %799 = vmatpush.msra.mxu0 0.0
    %800 = vmatpush.msra.mxu0 %v667
    %801 = vmatpush.msra.mxu0 %v666
    %802 = vmatpush.msra.mxu0 %v665
    %803 = vmatpush.msra.mxu0 %v664
    %804 = vmatmul.f32.gmra.mxu0 %v777
    %v805 = vpop.f32.mrf.mxu0
    %v806 = vadd.f32 0.0, %v805
    %807 = vmatmul.f32.gmra.mxu0 %v780
    %v808 = vpop.f32.mrf.mxu0
    %v809 = vadd.f32 0.0, %v808
    %810 = vmatmul.f32.gmra.mxu0 %v783
    %v811 = vpop.f32.mrf.mxu0
    %v812 = vadd.f32 0.0, %v811
    %813 = vmatmul.f32.gmra.mxu0 %v786
    %v814 = vpop.f32.mrf.mxu0
    %v815 = vadd.f32 0.0, %v814
    %816 = vdwg.mxu0
    %v817 = vadd.f32 %v765, %v806
    %v818 = vadd.f32 %v768, %v809
    %v819 = vadd.f32 %v771, %v812
    %v820 = vadd.f32 %v774, %v815
    %v822 = vperm.slane %v669, 0
    %v824 = vadd.f32 %v817, %v822
    %v825 = vadd.f32 %v818, %v822
    %v826 = vadd.f32 %v819, %v822
    %v827 = vadd.f32 %v820, %v822
    %v828 = vadd.f32 %v824, %v163
    %v829 = vadd.f32 %v825, %v166
    %v830 = vadd.f32 %v826, %v169
    %v831 = vadd.f32 %v827, %v172
    %s832 = scalar_lea.vmem %s6, 2
    %v833 = vld [vmem:[%s832] sm:$0x1]
    %s834 = scalar_lea.vmem %s7, 2
    %v835 = vld [vmem:[%s834] sm:$0x1]
    %v836 = vsel %vm176, %v828, 0.0
    %v837 = vsel %vm176, %v829, 0.0
    %v838 = vadd.f32 %v836, %v837
    %v839 = vrot.slane %v838, 4
    %v840 = vadd.f32 %v838, %v839
    %v841 = vrot.slane %v840, 2
    %v842 = vadd.f32 %v840, %v841
    %v843 = vrot.slane %v842, 1
    %v844 = vadd.f32 %v842, %v843
    %v845 = vsel %vm176, %v830, 0.0
    %v846 = vsel %vm176, %v831, 0.0
    %v847 = vadd.f32 %v845, %v846
    %v848 = vrot.slane %v847, 4
    %v849 = vadd.f32 %v847, %v848
    %v850 = vrot.slane %v849, 2
    %v851 = vadd.f32 %v849, %v850
    %v852 = vrot.slane %v851, 1
    %v853 = vadd.f32 %v851, %v852
    %v854 = vmul.f32 %v828, %v828
    %v855 = vmul.f32 %v829, %v829
    %v856 = vmul.f32 %v830, %v830
    %v857 = vmul.f32 %v831, %v831
    %v858 = vsel %vm176, %v854, 0.0
    %v859 = vsel %vm176, %v855, 0.0
    %v860 = vadd.f32 %v858, %v859
    %v861 = vrot.slane %v860, 4
    %v862 = vadd.f32 %v860, %v861
    %v863 = vrot.slane %v862, 2
    %v864 = vadd.f32 %v862, %v863
    %v865 = vrot.slane %v864, 1
    %v866 = vadd.f32 %v864, %v865
    %v867 = vsel %vm176, %v856, 0.0
    %v868 = vsel %vm176, %v857, 0.0
    %v869 = vadd.f32 %v867, %v868
    %v870 = vrot.slane %v869, 4
    %v871 = vadd.f32 %v869, %v870
    %v872 = vrot.slane %v871, 2
    %v873 = vadd.f32 %v871, %v872
    %v874 = vrot.slane %v873, 1
    %v875 = vadd.f32 %v873, %v874
    %v878 = vsel %vm219, %v853, %v844
    %v879 = vsel %vm176, %v878, 0
    %881 = vmatpush.msra.mxu0 0.0
    %882 = vmatpush.msra.mxu0 0.0
    %883 = vmatpush.msra.mxu0 0.0
    %884 = vmatpush.msra.mxu0 0.0
    %885 = vmatpush.msra.mxu0 0.0
    %886 = vmatpush.msra.mxu0 0.0
    %887 = vmatpush.msra.mxu0 0.0
    %888 = vmatpush.msra.mxu0 0.0
    %889 = vmatpush.msra.mxu0 0.0
    %890 = vmatpush.msra.mxu0 0.0
    %891 = vmatpush.msra.mxu0 0.0
    %892 = vmatpush.msra.mxu0 0.0
    %893 = vmatpush.msra.mxu0 %v119
    %894 = vmatpush.msra.mxu0 %v118
    %895 = vmatpush.msra.mxu0 %v117
    %896 = vmatpush.msra.mxu0 %v116
    %897 = vmatmul.f32.gmra.mxu0 %v879
    %v898 = vpop.f32.mrf.mxu0
    %v899 = vadd.f32 0.0, %v898
    %900 = vdwg.mxu0
    %v903 = vsel %vm219, %v875, %v866
    %v904 = vsel %vm176, %v903, 0
    %906 = vmatpush.msra.mxu0 0.0
    %907 = vmatpush.msra.mxu0 0.0
    %908 = vmatpush.msra.mxu0 0.0
    %909 = vmatpush.msra.mxu0 0.0
    %910 = vmatpush.msra.mxu0 0.0
    %911 = vmatpush.msra.mxu0 0.0
    %912 = vmatpush.msra.mxu0 0.0
    %913 = vmatpush.msra.mxu0 0.0
    %914 = vmatpush.msra.mxu0 0.0
    %915 = vmatpush.msra.mxu0 0.0
    %916 = vmatpush.msra.mxu0 0.0
    %917 = vmatpush.msra.mxu0 0.0
    %918 = vmatpush.msra.mxu0 %v119
    %919 = vmatpush.msra.mxu0 %v118
    %920 = vmatpush.msra.mxu0 %v117
    %921 = vmatpush.msra.mxu0 %v116
    %922 = vmatmul.f32.gmra.mxu0 %v904
    %v923 = vpop.f32.mrf.mxu0
    %v924 = vadd.f32 0.0, %v923
    %925 = vdwg.mxu0
    %v926 = vmul.f32 %v899, %v899
    %v927 = vsub.f32 %v924, %v926
    %v928 = vmax.f32 %v927, 0.0
    %v929 = vadd.f32 %v928, 1e-05
    %v930 = vrsqrt.pop %v929
    %v931 = vmul.f32 %v930, %v929
    %v932 = vmul.f32 %v931, %v930
    %v933 = vmul.f32 0.5, %v932
    %v934 = vsub.f32 1.5, %v933
    %v935 = vmul.f32 %v930, %v934
    %vm936 = vweird.f32 %v929
    %vm937 = vweird.f32 %v930
    %vm938 = vmor %vm936, %vm937
    %v939 = vsel %vm938, %v930, %v935
    %v941 = vperm.slane %v833, 0
    %v943 = vmul.f32 %v939, %v941
    %v944 = vmul.f32 %v899, %v943
    %v946 = vperm.slane %v835, 0
    %v948 = vsub.f32 %v946, %v944
    %v950 = vrot.slane %v943, 1
    %v951 = vperm.slane %v943, 0
    %v952 = vperm.slane %v950, 0
    %v955 = vmul.f32 %v828, %v951
    %v956 = vmul.f32 %v829, %v951
    %v957 = vmul.f32 %v830, %v952
    %v958 = vmul.f32 %v831, %v952
    %v960 = vrot.slane %v948, 1
    %v961 = vperm.slane %v948, 0
    %v962 = vperm.slane %v960, 0
    %v965 = vadd.f32 %v955, %v961
    %v966 = vadd.f32 %v956, %v961
    %v967 = vadd.f32 %v957, %v962
    %v968 = vadd.f32 %v958, %v962
    %v969 = vmax.f32 %v965, 0.0
    %v970 = vmax.f32 %v966, 0.0
    %v971 = vmax.f32 %v967, 0.0
    %v972 = vmax.f32 %v968, 0.0
    %s973 = scalar_lea.vmem [#allocation2], 192
    %v974 = vld [vmem:[%s973] sm:$0xff]
    %v975 = vld [vmem:[%s973 + $0x8] sm:$0xff]
    %v976 = vld [vmem:[%s973 + $0x10] sm:$0xff]
    %v977 = vld [vmem:[%s973 + $0x18] sm:$0xff]
    %v978 = vld [vmem:[%s973 + $0x20] sm:$0xff]
    %v979 = vld [vmem:[%s973 + $0x28] sm:$0xff]
    %v980 = vld [vmem:[%s973 + $0x30] sm:$0xff]
    %v981 = vld [vmem:[%s973 + $0x38] sm:$0xff]
    %v982 = vld [vmem:[%s973 + $0x40] sm:$0xff]
    %v983 = vld [vmem:[%s973 + $0x48] sm:$0xff]
    %v984 = vld [vmem:[%s973 + $0x50] sm:$0xff]
    %v985 = vld [vmem:[%s973 + $0x58] sm:$0xff]
    %s986 = scalar_lea.vmem %s5, 2
    %v987 = vld [vmem:[%s986] sm:$0x1]
    %v988 = vrot.slane %v969, 7
    %v989 = vrot.slane %v970, 7
    %v990 = vrot.slane %v971, 7
    %v991 = vrot.slane %v972, 7
    %v992 = vsel %vm332, %v990, %v991
    %v993 = vsel %vm332, %v989, %v990
    %v994 = vsel %vm332, %v988, %v989
    %v995 = vsel %vm332, %v991, %v988
    %v996 = vsel %vm341, %v995, 0.0
    %v997 = vsel %vm342, %v994, 0.0
    %v998 = vsel %vm343, %v993, 0.0
    %v999 = vsel %vm344, %v992, 0.0
    %v1000 = vrot.slane %v969, 1
    %v1001 = vrot.slane %v970, 1
    %v1002 = vrot.slane %v971, 1
    %v1003 = vrot.slane %v972, 1
    %v1004 = vsel %vm353, %v1002, %v1003
    %v1005 = vsel %vm353, %v1001, %v1002
    %v1006 = vsel %vm353, %v1000, %v1001
    %v1007 = vsel %vm353, %v1003, %v1000
    %v1008 = vsel %vm362, %v1006, 0.0
    %v1009 = vsel %vm363, %v1005, 0.0
    %v1010 = vsel %vm364, %v1004, 0.0
    %v1011 = vsel %vm365, %v1007, 0.0
    %v1013 = vsel %vm176, %v969, 0
    %v1016 = vsel %vm176, %v970, 0
    %v1019 = vsel %vm176, %v971, 0
    %v1022 = vsel %vm176, %v972, 0
    %1024 = vmatpush.msra.mxu0 0.0
    %1025 = vmatpush.msra.mxu0 0.0
    %1026 = vmatpush.msra.mxu0 0.0
    %1027 = vmatpush.msra.mxu0 0.0
    %1028 = vmatpush.msra.mxu0 0.0
    %1029 = vmatpush.msra.mxu0 0.0
    %1030 = vmatpush.msra.mxu0 0.0
    %1031 = vmatpush.msra.mxu0 0.0
    %1032 = vmatpush.msra.mxu0 0.0
    %1033 = vmatpush.msra.mxu0 0.0
    %1034 = vmatpush.msra.mxu0 0.0
    %1035 = vmatpush.msra.mxu0 0.0
    %1036 = vmatpush.msra.mxu0 %v981
    %1037 = vmatpush.msra.mxu0 %v980
    %1038 = vmatpush.msra.mxu0 %v979
    %1039 = vmatpush.msra.mxu0 %v978
    %1040 = vmatmul.f32.gmra.mxu0 %v1013
    %v1041 = vpop.f32.mrf.mxu0
    %v1042 = vadd.f32 0.0, %v1041
    %1043 = vmatmul.f32.gmra.mxu0 %v1016
    %v1044 = vpop.f32.mrf.mxu0
    %v1045 = vadd.f32 0.0, %v1044
    %1046 = vmatmul.f32.gmra.mxu0 %v1019
    %v1047 = vpop.f32.mrf.mxu0
    %v1048 = vadd.f32 0.0, %v1047
    %1049 = vmatmul.f32.gmra.mxu0 %v1022
    %v1050 = vpop.f32.mrf.mxu0
    %v1051 = vadd.f32 0.0, %v1050
    %1052 = vdwg.mxu0
    %v1054 = vsel %vm176, %v996, 0
    %v1057 = vsel %vm176, %v997, 0
    %v1060 = vsel %vm176, %v998, 0
    %v1063 = vsel %vm176, %v999, 0
    %1065 = vmatpush.msra.mxu0 0.0
    %1066 = vmatpush.msra.mxu0 0.0
    %1067 = vmatpush.msra.mxu0 0.0
    %1068 = vmatpush.msra.mxu0 0.0
    %1069 = vmatpush.msra.mxu0 0.0
    %1070 = vmatpush.msra.mxu0 0.0
    %1071 = vmatpush.msra.mxu0 0.0
    %1072 = vmatpush.msra.mxu0 0.0
    %1073 = vmatpush.msra.mxu0 0.0
    %1074 = vmatpush.msra.mxu0 0.0
    %1075 = vmatpush.msra.mxu0 0.0
    %1076 = vmatpush.msra.mxu0 0.0
    %1077 = vmatpush.msra.mxu0 %v977
    %1078 = vmatpush.msra.mxu0 %v976
    %1079 = vmatpush.msra.mxu0 %v975
    %1080 = vmatpush.msra.mxu0 %v974
    %1081 = vmatmul.f32.gmra.mxu0 %v1054
    %v1082 = vpop.f32.mrf.mxu0
    %v1083 = vadd.f32 %v1042, %v1082
    %1084 = vmatmul.f32.gmra.mxu0 %v1057
    %v1085 = vpop.f32.mrf.mxu0
    %v1086 = vadd.f32 %v1045, %v1085
    %1087 = vmatmul.f32.gmra.mxu0 %v1060
    %v1088 = vpop.f32.mrf.mxu0
    %v1089 = vadd.f32 %v1048, %v1088
    %1090 = vmatmul.f32.gmra.mxu0 %v1063
    %v1091 = vpop.f32.mrf.mxu0
    %v1092 = vadd.f32 %v1051, %v1091
    %1093 = vdwg.mxu0
    %v1095 = vsel %vm176, %v1008, 0
    %v1098 = vsel %vm176, %v1009, 0
    %v1101 = vsel %vm176, %v1010, 0
    %v1104 = vsel %vm176, %v1011, 0
    %1106 = vmatpush.msra.mxu0 0.0
    %1107 = vmatpush.msra.mxu0 0.0
    %1108 = vmatpush.msra.mxu0 0.0
    %1109 = vmatpush.msra.mxu0 0.0
    %1110 = vmatpush.msra.mxu0 0.0
    %1111 = vmatpush.msra.mxu0 0.0
    %1112 = vmatpush.msra.mxu0 0.0
    %1113 = vmatpush.msra.mxu0 0.0
    %1114 = vmatpush.msra.mxu0 0.0
    %1115 = vmatpush.msra.mxu0 0.0
    %1116 = vmatpush.msra.mxu0 0.0
    %1117 = vmatpush.msra.mxu0 0.0
    %1118 = vmatpush.msra.mxu0 %v985
    %1119 = vmatpush.msra.mxu0 %v984
    %1120 = vmatpush.msra.mxu0 %v983
    %1121 = vmatpush.msra.mxu0 %v982
    %1122 = vmatmul.f32.gmra.mxu0 %v1095
    %v1123 = vpop.f32.mrf.mxu0
    %v1124 = vadd.f32 0.0, %v1123
    %1125 = vmatmul.f32.gmra.mxu0 %v1098
    %v1126 = vpop.f32.mrf.mxu0
    %v1127 = vadd.f32 0.0, %v1126
    %1128 = vmatmul.f32.gmra.mxu0 %v1101
    %v1129 = vpop.f32.mrf.mxu0
    %v1130 = vadd.f32 0.0, %v1129
    %1131 = vmatmul.f32.gmra.mxu0 %v1104
    %v1132 = vpop.f32.mrf.mxu0
    %v1133 = vadd.f32 0.0, %v1132
    %1134 = vdwg.mxu0
    %v1135 = vadd.f32 %v1083, %v1124
    %v1136 = vadd.f32 %v1086, %v1127
    %v1137 = vadd.f32 %v1089, %v1130
    %v1138 = vadd.f32 %v1092, %v1133
    %v1140 = vperm.slane %v987, 0
    %v1142 = vadd.f32 %v1135, %v1140
    %v1143 = vadd.f32 %v1136, %v1140
    %v1144 = vadd.f32 %v1137, %v1140
    %v1145 = vadd.f32 %v1138, %v1140
    %v1146 = vadd.f32 %v1142, %v506
    %v1147 = vadd.f32 %v1143, %v506
    %v1148 = vadd.f32 %v1144, %v507
    %v1149 = vadd.f32 %v1145, %v507
    %s1150 = scalar_lea.vmem %s6, 3
    %v1151 = vld [vmem:[%s1150] sm:$0x1]
    %s1152 = scalar_lea.vmem %s7, 3
    %v1153 = vld [vmem:[%s1152] sm:$0x1]
    %v1154 = vsel %vm176, %v1146, 0.0
    %v1155 = vsel %vm176, %v1147, 0.0
    %v1156 = vadd.f32 %v1154, %v1155
    %v1157 = vrot.slane %v1156, 4
    %v1158 = vadd.f32 %v1156, %v1157
    %v1159 = vrot.slane %v1158, 2
    %v1160 = vadd.f32 %v1158, %v1159
    %v1161 = vrot.slane %v1160, 1
    %v1162 = vadd.f32 %v1160, %v1161
    %v1163 = vsel %vm176, %v1148, 0.0
    %v1164 = vsel %vm176, %v1149, 0.0
    %v1165 = vadd.f32 %v1163, %v1164
    %v1166 = vrot.slane %v1165, 4
    %v1167 = vadd.f32 %v1165, %v1166
    %v1168 = vrot.slane %v1167, 2
    %v1169 = vadd.f32 %v1167, %v1168
    %v1170 = vrot.slane %v1169, 1
    %v1171 = vadd.f32 %v1169, %v1170
    %v1172 = vmul.f32 %v1146, %v1146
    %v1173 = vmul.f32 %v1147, %v1147
    %v1174 = vmul.f32 %v1148, %v1148
    %v1175 = vmul.f32 %v1149, %v1149
    %v1176 = vsel %vm176, %v1172, 0.0
    %v1177 = vsel %vm176, %v1173, 0.0
    %v1178 = vadd.f32 %v1176, %v1177
    %v1179 = vrot.slane %v1178, 4
    %v1180 = vadd.f32 %v1178, %v1179
    %v1181 = vrot.slane %v1180, 2
    %v1182 = vadd.f32 %v1180, %v1181
    %v1183 = vrot.slane %v1182, 1
    %v1184 = vadd.f32 %v1182, %v1183
    %v1185 = vsel %vm176, %v1174, 0.0
    %v1186 = vsel %vm176, %v1175, 0.0
    %v1187 = vadd.f32 %v1185, %v1186
    %v1188 = vrot.slane %v1187, 4
    %v1189 = vadd.f32 %v1187, %v1188
    %v1190 = vrot.slane %v1189, 2
    %v1191 = vadd.f32 %v1189, %v1190
    %v1192 = vrot.slane %v1191, 1
    %v1193 = vadd.f32 %v1191, %v1192
    %v1196 = vsel %vm219, %v1171, %v1162
    %v1197 = vsel %vm176, %v1196, 0
    %1199 = vmatpush.msra.mxu0 0.0
    %1200 = vmatpush.msra.mxu0 0.0
    %1201 = vmatpush.msra.mxu0 0.0
    %1202 = vmatpush.msra.mxu0 0.0
    %1203 = vmatpush.msra.mxu0 0.0
    %1204 = vmatpush.msra.mxu0 0.0
    %1205 = vmatpush.msra.mxu0 0.0
    %1206 = vmatpush.msra.mxu0 0.0
    %1207 = vmatpush.msra.mxu0 0.0
    %1208 = vmatpush.msra.mxu0 0.0
    %1209 = vmatpush.msra.mxu0 0.0
    %1210 = vmatpush.msra.mxu0 0.0
    %1211 = vmatpush.msra.mxu0 %v119
    %1212 = vmatpush.msra.mxu0 %v118
    %1213 = vmatpush.msra.mxu0 %v117
    %1214 = vmatpush.msra.mxu0 %v116
    %1215 = vmatmul.f32.gmra.mxu0 %v1197
    %v1216 = vpop.f32.mrf.mxu0
    %v1217 = vadd.f32 0.0, %v1216
    %1218 = vdwg.mxu0
    %v1221 = vsel %vm219, %v1193, %v1184
    %v1222 = vsel %vm176, %v1221, 0
    %1224 = vmatpush.msra.mxu0 0.0
    %1225 = vmatpush.msra.mxu0 0.0
    %1226 = vmatpush.msra.mxu0 0.0
    %1227 = vmatpush.msra.mxu0 0.0
    %1228 = vmatpush.msra.mxu0 0.0
    %1229 = vmatpush.msra.mxu0 0.0
    %1230 = vmatpush.msra.mxu0 0.0
    %1231 = vmatpush.msra.mxu0 0.0
    %1232 = vmatpush.msra.mxu0 0.0
    %1233 = vmatpush.msra.mxu0 0.0
    %1234 = vmatpush.msra.mxu0 0.0
    %1235 = vmatpush.msra.mxu0 0.0
    %1236 = vmatpush.msra.mxu0 %v119
    %1237 = vmatpush.msra.mxu0 %v118
    %1238 = vmatpush.msra.mxu0 %v117
    %1239 = vmatpush.msra.mxu0 %v116
    %1240 = vmatmul.f32.gmra.mxu0 %v1222
    %v1241 = vpop.f32.mrf.mxu0
    %v1242 = vadd.f32 0.0, %v1241
    %1243 = vdwg.mxu0
    %v1244 = vmul.f32 %v1217, %v1217
    %v1245 = vsub.f32 %v1242, %v1244
    %v1246 = vmax.f32 %v1245, 0.0
    %v1247 = vadd.f32 %v1246, 1e-05
    %v1248 = vrsqrt.pop %v1247
    %v1249 = vmul.f32 %v1248, %v1247
    %v1250 = vmul.f32 %v1249, %v1248
    %v1251 = vmul.f32 0.5, %v1250
    %v1252 = vsub.f32 1.5, %v1251
    %v1253 = vmul.f32 %v1248, %v1252
    %vm1254 = vweird.f32 %v1247
    %vm1255 = vweird.f32 %v1248
    %vm1256 = vmor %vm1254, %vm1255
    %v1257 = vsel %vm1256, %v1248, %v1253
    %v1259 = vperm.slane %v1151, 0
    %v1261 = vmul.f32 %v1257, %v1259
    %v1262 = vmul.f32 %v1217, %v1261
    %v1264 = vperm.slane %v1153, 0
    %v1266 = vsub.f32 %v1264, %v1262
    %v1268 = vrot.slane %v1261, 1
    %v1269 = vperm.slane %v1261, 0
    %v1270 = vperm.slane %v1268, 0
    %v1273 = vmul.f32 %v1146, %v1269
    %v1274 = vmul.f32 %v1147, %v1269
    %v1275 = vmul.f32 %v1148, %v1270
    %v1276 = vmul.f32 %v1149, %v1270
    %v1278 = vrot.slane %v1266, 1
    %v1279 = vperm.slane %v1266, 0
    %v1280 = vperm.slane %v1278, 0
    %v1283 = vadd.f32 %v1273, %v1279
    %v1284 = vadd.f32 %v1274, %v1279
    %v1285 = vadd.f32 %v1275, %v1280
    %v1286 = vadd.f32 %v1276, %v1280
    %v1287 = vmax.f32 %v1283, 0.0
    %v1288 = vmax.f32 %v1284, 0.0
    %v1289 = vmax.f32 %v1285, 0.0
    %v1290 = vmax.f32 %v1286, 0.0
    %s1291 = scalar_lea.vmem [#allocation2], 288
    %v1292 = vld [vmem:[%s1291] sm:$0xff]
    %v1293 = vld [vmem:[%s1291 + $0x8] sm:$0xff]
    %v1294 = vld [vmem:[%s1291 + $0x10] sm:$0xff]
    %v1295 = vld [vmem:[%s1291 + $0x18] sm:$0xff]
    %v1296 = vld [vmem:[%s1291 + $0x20] sm:$0xff]
    %v1297 = vld [vmem:[%s1291 + $0x28] sm:$0xff]
    %v1298 = vld [vmem:[%s1291 + $0x30] sm:$0xff]
    %v1299 = vld [vmem:[%s1291 + $0x38] sm:$0xff]
    %v1300 = vld [vmem:[%s1291 + $0x40] sm:$0xff]
    %v1301 = vld [vmem:[%s1291 + $0x48] sm:$0xff]
    %v1302 = vld [vmem:[%s1291 + $0x50] sm:$0xff]
    %v1303 = vld [vmem:[%s1291 + $0x58] sm:$0xff]
    %s1304 = scalar_lea.vmem %s5, 3
    %v1305 = vld [vmem:[%s1304] sm:$0x1]
    %v1306 = vrot.slane %v1287, 7
    %v1307 = vrot.slane %v1288, 7
    %v1308 = vrot.slane %v1289, 7
    %v1309 = vrot.slane %v1290, 7
    %v1310 = vsel %vm332, %v1308, %v1309
    %v1311 = vsel %vm332, %v1307, %v1308
    %v1312 = vsel %vm332, %v1306, %v1307
    %v1313 = vsel %vm332, %v1309, %v1306
    %v1314 = vsel %vm341, %v1313, 0.0
    %v1315 = vsel %vm342, %v1312, 0.0
    %v1316 = vsel %vm343, %v1311, 0.0
    %v1317 = vsel %vm344, %v1310, 0.0
    %v1318 = vrot.slane %v1287, 1
    %v1319 = vrot.slane %v1288, 1
    %v1320 = vrot.slane %v1289, 1
    %v1321 = vrot.slane %v1290, 1
    %v1322 = vsel %vm353, %v1320, %v1321
    %v1323 = vsel %vm353, %v1319, %v1320
    %v1324 = vsel %vm353, %v1318, %v1319
    %v1325 = vsel %vm353, %v1321, %v1318
    %v1326 = vsel %vm362, %v1324, 0.0
    %v1327 = vsel %vm363, %v1323, 0.0
    %v1328 = vsel %vm364, %v1322, 0.0
    %v1329 = vsel %vm365, %v1325, 0.0
    %v1331 = vsel %vm176, %v1287, 0
    %v1334 = vsel %vm176, %v1288, 0
    %v1337 = vsel %vm176, %v1289, 0
    %v1340 = vsel %vm176, %v1290, 0
    %1342 = vmatpush.msra.mxu0 0.0
    %1343 = vmatpush.msra.mxu0 0.0
    %1344 = vmatpush.msra.mxu0 0.0
    %1345 = vmatpush.msra.mxu0 0.0
    %1346 = vmatpush.msra.mxu0 0.0
    %1347 = vmatpush.msra.mxu0 0.0
    %1348 = vmatpush.msra.mxu0 0.0
    %1349 = vmatpush.msra.mxu0 0.0
    %1350 = vmatpush.msra.mxu0 0.0
    %1351 = vmatpush.msra.mxu0 0.0
    %1352 = vmatpush.msra.mxu0 0.0
    %1353 = vmatpush.msra.mxu0 0.0
    %1354 = vmatpush.msra.mxu0 %v1299
    %1355 = vmatpush.msra.mxu0 %v1298
    %1356 = vmatpush.msra.mxu0 %v1297
    %1357 = vmatpush.msra.mxu0 %v1296
    %1358 = vmatmul.f32.gmra.mxu0 %v1331
    %v1359 = vpop.f32.mrf.mxu0
    %v1360 = vadd.f32 0.0, %v1359
    %1361 = vmatmul.f32.gmra.mxu0 %v1334
    %v1362 = vpop.f32.mrf.mxu0
    %v1363 = vadd.f32 0.0, %v1362
    %1364 = vmatmul.f32.gmra.mxu0 %v1337
    %v1365 = vpop.f32.mrf.mxu0
    %v1366 = vadd.f32 0.0, %v1365
    %1367 = vmatmul.f32.gmra.mxu0 %v1340
    %v1368 = vpop.f32.mrf.mxu0
    %v1369 = vadd.f32 0.0, %v1368
    %1370 = vdwg.mxu0
    %v1372 = vsel %vm176, %v1314, 0
    %v1375 = vsel %vm176, %v1315, 0
    %v1378 = vsel %vm176, %v1316, 0
    %v1381 = vsel %vm176, %v1317, 0
    %1383 = vmatpush.msra.mxu0 0.0
    %1384 = vmatpush.msra.mxu0 0.0
    %1385 = vmatpush.msra.mxu0 0.0
    %1386 = vmatpush.msra.mxu0 0.0
    %1387 = vmatpush.msra.mxu0 0.0
    %1388 = vmatpush.msra.mxu0 0.0
    %1389 = vmatpush.msra.mxu0 0.0
    %1390 = vmatpush.msra.mxu0 0.0
    %1391 = vmatpush.msra.mxu0 0.0
    %1392 = vmatpush.msra.mxu0 0.0
    %1393 = vmatpush.msra.mxu0 0.0
    %1394 = vmatpush.msra.mxu0 0.0
    %1395 = vmatpush.msra.mxu0 %v1295
    %1396 = vmatpush.msra.mxu0 %v1294
    %1397 = vmatpush.msra.mxu0 %v1293
    %1398 = vmatpush.msra.mxu0 %v1292
    %1399 = vmatmul.f32.gmra.mxu0 %v1372
    %v1400 = vpop.f32.mrf.mxu0
    %v1401 = vadd.f32 %v1360, %v1400
    %1402 = vmatmul.f32.gmra.mxu0 %v1375
    %v1403 = vpop.f32.mrf.mxu0
    %v1404 = vadd.f32 %v1363, %v1403
    %1405 = vmatmul.f32.gmra.mxu0 %v1378
    %v1406 = vpop.f32.mrf.mxu0
    %v1407 = vadd.f32 %v1366, %v1406
    %1408 = vmatmul.f32.gmra.mxu0 %v1381
    %v1409 = vpop.f32.mrf.mxu0
    %v1410 = vadd.f32 %v1369, %v1409
    %1411 = vdwg.mxu0
    %v1413 = vsel %vm176, %v1326, 0
    %v1416 = vsel %vm176, %v1327, 0
    %v1419 = vsel %vm176, %v1328, 0
    %v1422 = vsel %vm176, %v1329, 0
    %1424 = vmatpush.msra.mxu0 0.0
    %1425 = vmatpush.msra.mxu0 0.0
    %1426 = vmatpush.msra.mxu0 0.0
    %1427 = vmatpush.msra.mxu0 0.0
    %1428 = vmatpush.msra.mxu0 0.0
    %1429 = vmatpush.msra.mxu0 0.0
    %1430 = vmatpush.msra.mxu0 0.0
    %1431 = vmatpush.msra.mxu0 0.0
    %1432 = vmatpush.msra.mxu0 0.0
    %1433 = vmatpush.msra.mxu0 0.0
    %1434 = vmatpush.msra.mxu0 0.0
    %1435 = vmatpush.msra.mxu0 0.0
    %1436 = vmatpush.msra.mxu0 %v1303
    %1437 = vmatpush.msra.mxu0 %v1302
    %1438 = vmatpush.msra.mxu0 %v1301
    %1439 = vmatpush.msra.mxu0 %v1300
    %1440 = vmatmul.f32.gmra.mxu0 %v1413
    %v1441 = vpop.f32.mrf.mxu0
    %v1442 = vadd.f32 0.0, %v1441
    %1443 = vmatmul.f32.gmra.mxu0 %v1416
    %v1444 = vpop.f32.mrf.mxu0
    %v1445 = vadd.f32 0.0, %v1444
    %1446 = vmatmul.f32.gmra.mxu0 %v1419
    %v1447 = vpop.f32.mrf.mxu0
    %v1448 = vadd.f32 0.0, %v1447
    %1449 = vmatmul.f32.gmra.mxu0 %v1422
    %v1450 = vpop.f32.mrf.mxu0
    %v1451 = vadd.f32 0.0, %v1450
    %1452 = vdwg.mxu0
    %v1453 = vadd.f32 %v1401, %v1442
    %v1454 = vadd.f32 %v1404, %v1445
    %v1455 = vadd.f32 %v1407, %v1448
    %v1456 = vadd.f32 %v1410, %v1451
    %v1458 = vperm.slane %v1305, 0
    %v1460 = vadd.f32 %v1453, %v1458
    %v1461 = vadd.f32 %v1454, %v1458
    %v1462 = vadd.f32 %v1455, %v1458
    %v1463 = vadd.f32 %v1456, %v1458
    %v1464 = vadd.f32 %v1460, %v828
    %v1465 = vadd.f32 %v1461, %v829
    %v1466 = vadd.f32 %v1462, %v830
    %v1467 = vadd.f32 %v1463, %v831
    %v1468 = vld [vmem:[%s8] sm:$0xff]
    %v1469 = vld [vmem:[%s8 + $0x8] sm:$0xff]
    %v1470 = vld [vmem:[%s8 + $0x10] sm:$0xff]
    %v1471 = vld [vmem:[%s8 + $0x18] sm:$0xff]
    %v1472 = vld [vmem:[%s9] sm:$0x1]
    %v1474 = vperm.slane %v1472, 0
    %v1477 = vsel %vm176, %v1464, 0
    %v1480 = vsel %vm176, %v1465, 0
    %v1483 = vsel %vm176, %v1466, 0
    %v1486 = vsel %vm176, %v1467, 0
    %1488 = vmatpush.msra.mxu0 0.0
    %1489 = vmatpush.msra.mxu0 0.0
    %1490 = vmatpush.msra.mxu0 0.0
    %1491 = vmatpush.msra.mxu0 0.0
    %1492 = vmatpush.msra.mxu0 0.0
    %1493 = vmatpush.msra.mxu0 0.0
    %1494 = vmatpush.msra.mxu0 0.0
    %1495 = vmatpush.msra.mxu0 0.0
    %1496 = vmatpush.msra.mxu0 0.0
    %1497 = vmatpush.msra.mxu0 0.0
    %1498 = vmatpush.msra.mxu0 0.0
    %1499 = vmatpush.msra.mxu0 0.0
    %1500 = vmatpush.msra.mxu0 %v1471
    %1501 = vmatpush.msra.mxu0 %v1470
    %1502 = vmatpush.msra.mxu0 %v1469
    %1503 = vmatpush.msra.mxu0 %v1468
    %1504 = vmatmul.f32.gmra.mxu0 %v1477
    %v1505 = vpop.f32.mrf.mxu0
    %v1506 = vadd.f32 %v1474, %v1505
    %1507 = vmatmul.f32.gmra.mxu0 %v1480
    %v1508 = vpop.f32.mrf.mxu0
    %v1509 = vadd.f32 %v1474, %v1508
    %1510 = vmatmul.f32.gmra.mxu0 %v1483
    %v1511 = vpop.f32.mrf.mxu0
    %v1512 = vadd.f32 %v1474, %v1511
    %1513 = vmatmul.f32.gmra.mxu0 %v1486
    %v1514 = vpop.f32.mrf.mxu0
    %v1515 = vadd.f32 %v1474, %v1514
    %1516 = vdwg.mxu0
    %1517 = vst [vmem:[#allocation5] sm:$0xff] %v1506
    %1518 = vst [vmem:[#allocation5 + $0x8] sm:$0xff] %v1509
    %1519 = vst [vmem:[#allocation5 + $0x10] sm:$0xff] %v1512
    %1520 = vst [vmem:[#allocation5 + $0x18] sm:$0xff] %v1515
    // Predicated region
    $region50: #{tpu_custom_call.1} parent=1 // pred_check
      _
    $region51: #{tpu_custom_call.1} parent=1 // pred_check_branch
      %1522 = sbr.rel (0) target = $region53
    $region52: #{tpu_custom_call.1} parent=1 // pred_region
      %1524 = vsyncadd [#allocation4], 0
      %s1525 = sshll.u32 [#allocation5], 4
      %s1526 = int_to_ptr.vmem [resolvable:$true] %s1525
      %s1527 = sshll.u32 %s11, 4
      %s1528 = int_to_ptr.hbm [resolvable:$true] %s1527
      %1533 = dma.vmem_to_hbm [thread:$0]  %s1526, 512, %s1528, [#allocation4], 128, 128, 8
    $region53: #{tpu_custom_call.1} parent=1 // pred_fallthru
      _
    // Predicated region
    $region54: #{tpu_custom_call.1} parent=1 // pred_check
      _
    $region55: #{tpu_custom_call.1} parent=1 // pred_check_branch
      %1535 = sbr.rel (0) target = $region57
    $region56: #{tpu_custom_call.1} parent=1 // pred_region
      %1537 = dma.done [#allocation4], 512
    $region57: #{tpu_custom_call.1} parent=1 // pred_fallthru
      _
    %1538 = vsyncpa [#allocation3], 1
    %1539 = vsyncpa [#allocation4], 1

</llo_original>
